<compile_context>
chip_gen: v6e
topology: v6e:2x2x1
jax: 0.10.0
libtpu: 0.0.40
codegen_flags: <defaults>
</compile_context>

<pallas_src>
import functools

import jax
import jax.numpy as jnp
from jax.experimental import pallas as pl
from jax.experimental.pallas import tpu as pltpu

LN_EPS = 1e-5
MASK_BIAS = -1e30   # finite "minus infinity" -> no NaN even for fully-masked rows


def decoder_block_kernel(
    x_ref, pad_ref,
    wqkv_ref, bqkv_ref, wo_ref, bo_ref, lng_ref, lnb_ref,
    w1_ref, b1_ref, w2_ref, b2_ref, w3_ref, b3_ref,
    out_ref, *, num_heads, seq_len):
    M, D = x_ref.shape          # M = TB * L (batch block folded into matmul rows)
    L = seq_len
    TB = M // L
    H = num_heads
    hd = D // H
    cdt = wqkv_ref.dtype        # bf16 matmul inputs, f32 accumulation

    x = x_ref[...]              # (M, D) f32, kept for the residual path

    # ---- fused QKV projection (1/sqrt(hd) already folded into Q columns) ----
    qkv = jnp.dot(x.astype(cdt), wqkv_ref[...],
                  preferred_element_type=jnp.float32) + bqkv_ref[...]
    qkv = qkv.astype(cdt)       # cast once; everything downstream feeds the MXU

    # (M, D) -> (TB*H, L, hd): one batched relayout chain (major reshapes,
    # sublane-aligned splits, minor-two-dim swaps), replacing TB copies of the
    # old per-sequence helper and the final concatenate.
    def to_heads(t):
        t = t.reshape(TB, L, D)            # free (major split)
        t = jnp.swapaxes(t, -1, -2)        # (TB, D, L)   batched 2D transpose
        t = t.reshape(TB * H, hd, L)       # sublane-aligned split (hd % 8 == 0)
        return jnp.swapaxes(t, -1, -2)     # (TB*H, L, hd)

    def from_heads(t):                     # (TB*H, L, hd) -> (M, D)
        t = jnp.swapaxes(t, -1, -2)        # (TB*H, hd, L)
        t = t.reshape(TB, D, L)
        t = jnp.swapaxes(t, -1, -2)        # (TB, L, D)
        return t.reshape(M, D)

    qh = to_heads(qkv[:, :D])
    kh = to_heads(qkv[:, D:2 * D])
    vh = to_heads(qkv[:, 2 * D:])

    # ---- attention: all (sequence, head) pairs in one batched einsum pair ----
    s = jnp.einsum('bqd,bkd->bqk', qh, kh,
                   preferred_element_type=jnp.float32)       # (TB*H, L, L)

    # causal + key-padding additive bias, built once per grid step
    rows = jax.lax.broadcasted_iota(jnp.int32, (L, L), 0)
    cols = jax.lax.broadcasted_iota(jnp.int32, (L, L), 1)
    causal = jnp.where(cols > rows, jnp.float32(MASK_BIAS), jnp.float32(0.0))
    bias = causal[None, :, :] + pad_ref[...]                 # (TB*H, L, L)
    s = s + bias

    m = jnp.max(s, axis=-1, keepdims=True)
    e = jnp.exp(s - m)
    p = e * pl.reciprocal(jnp.sum(e, axis=-1, keepdims=True), approx=True)

    o = jnp.einsum('bqk,bkd->bqd', p.astype(cdt), vh,
                   preferred_element_type=jnp.float32)       # (TB*H, L, hd)
    ctx = from_heads(o.astype(cdt))                          # (M, D) bf16

    attn = jnp.dot(ctx, wo_ref[...],
                   preferred_element_type=jnp.float32) + bo_ref[...]

    # ---- residual + LayerNorm (f32) ----
    residual_one = x + attn
    mu = jnp.mean(residual_one, axis=-1, keepdims=True)
    var = jnp.mean((residual_one - mu) ** 2, axis=-1, keepdims=True)
    normed = (residual_one - mu) * jax.lax.rsqrt(var + LN_EPS)
    normed = normed * lng_ref[...] + lnb_ref[...]

    # ---- FFN: Linear+ReLU -> Linear+ReLU -> Linear ----
    h1 = jnp.maximum(
        jnp.dot(normed.astype(cdt), w1_ref[...],
                preferred_element_type=jnp.float32) + b1_ref[...], 0.0)
    h2 = jnp.maximum(
        jnp.dot(h1.astype(cdt), w2_ref[...],
                preferred_element_type=jnp.float32) + b2_ref[...], 0.0)
    ffn = jnp.dot(h2.astype(cdt), w3_ref[...],
                  preferred_element_type=jnp.float32) + b3_ref[...]

    out_ref[...] = (residual_one + ffn).astype(out_ref.dtype)


def _const_spec(p):
    # Whole parameter resident in VMEM; constant index map -> DMA'd once and
    # revisited by every grid step.
    return pl.BlockSpec(p.shape, lambda b, nd=p.ndim: (0,) * nd)


def decoder_block(x, key_padding_mask, kernel_params, num_heads, *,
                  batch_block=1, vmem_limit_mb=48):
    """x: (B, L, D) f32; key_padding_mask: (B, L), nonzero => padded key.

    kernel_params must come from prepare_kernel_params (QKV scale pre-folded).
    batch_block sequences are folded into the matmul M dimension per grid
    step; keep grid = B // batch_block >= 2 on v7x so both TensorCores get a
    "parallel" step, and grow it (M >= 128/256, vmem_limit_mb 64-96) on
    v5e/v6e's single core.
    """
    B, L, D = x.shape
    H = num_heads
    TB = batch_block
    assert B % TB == 0 and D % H == 0
    assert (TB * L) % 8 == 0 or TB == B, \
        "activation block sublane dim must be a multiple of 8"
    assert (D // H) % 8 == 0, \
        "head_dim must be a multiple of 8 for the batched head relayout"

    # Additive key-padding bias (0 / -1e30), replicated across heads so the
    # kernel adds one (TB*H, 1, L) slab to the batched (TB*H, L, L) scores.
    pad_bias = jnp.where(key_padding_mask > 0.5,
                         jnp.float32(MASK_BIAS), jnp.float32(0.0))
    pad_bias = jnp.broadcast_to(pad_bias[:, None, None, :],
                                (B, H, 1, L)).reshape(B * H, 1, L)

    # Fold the batch block into the matmul M dimension: (TB*L, D) slabs.
    x2d = x.reshape(B * L, D)

    kernel = functools.partial(decoder_block_kernel, num_heads=H, seq_len=L)
    in_specs = [
        pl.BlockSpec((TB * L, D), lambda b: (b, 0)),          # activations
        pl.BlockSpec((TB * H, 1, L), lambda b: (b, 0, 0)),    # additive pad bias
    ] + [_const_spec(p) for p in kernel_params]

    out2d = pl.pallas_call(
        kernel,
        out_shape=jax.ShapeDtypeStruct((B * L, D), x.dtype),
        grid=(B // TB,),
        in_specs=in_specs,
        out_specs=pl.BlockSpec((TB * L, D), lambda b: (b, 0)),
        compiler_params=pltpu.CompilerParams(
            dimension_semantics=("parallel",),     # shards over v7x's 2 TCs
            vmem_limit_bytes=vmem_limit_mb * 1024 * 1024),
    )(x2d, pad_bias, *kernel_params)
    return out2d.reshape(B, L, D)


def init_params(key, d_model, d_hidden, *, matmul_dtype=jnp.bfloat16):
    """DecoderBlock parameters, pre-transposed so y = x @ W + b (PyTorch
    semantics: no attention scale folded in).  Weights stored in bf16 (MXU
    input dtype); biases / LayerNorm params in f32.
    Order: w_qkv, b_qkv, w_o, b_o, ln_g, ln_b, w1, b1, w2, b2, w3, b3."""
    ks = jax.random.split(key, 10)
    wscale, bscale = 0.05, 0.02

    def w(k, shape):
        return (wscale * jax.random.normal(k, shape, jnp.float32)).astype(matmul_dtype)

    def b(k, n):
        return bscale * jax.random.normal(k, (1, n), jnp.float32)

    d, h = d_model, d_hidden
    return [
        w(ks[0], (d, 3 * d)), b(ks[1], 3 * d),                          # fused QKV
        w(ks[2], (d, d)),     b(ks[3], d),                              # out-proj
        jnp.ones((1, d), jnp.float32), jnp.zeros((1, d), jnp.float32),  # LayerNorm
        w(ks[4], (d, h)),     b(ks[5], h),                              # FFN in
        w(ks[6], (h, h)),     b(ks[7], h),                              # FFN hidden
        w(ks[8], (h, d)),     b(ks[9], d),                              # FFN out
    ]


def prepare_kernel_params(params, num_heads):
    """Host-side, one-time: fold 1/sqrt(head_dim) into the Q columns of the
    fused QKV projection so the kernel never multiplies q by the scale."""
    w_qkv, b_qkv, *rest = params
    D = w_qkv.shape[0]
    scale = 1.0 / float(D // num_heads) ** 0.5
    w_qkv = (w_qkv.astype(jnp.float32)
             .at[:, :D].multiply(scale)).astype(w_qkv.dtype)
    b_qkv = b_qkv.at[:, :D].multiply(scale)
    return [w_qkv, b_qkv, *rest]


def decoder_block_reference(x, key_padding_mask, params, num_heads):
    """Pure-jnp f32 reference mirroring the PyTorch DecoderBlock forward
    (expects the original, unscaled params from init_params)."""
    (w_qkv, b_qkv, w_o, b_o, ln_g, ln_b, w1, b1, w2, b2, w3, b3) = [
        p.astype(jnp.float32) for p in params]
    B, L, D = x.shape
    H = num_heads
    hd = D // H
    qkv = x @ w_qkv + b_qkv
    q, k, v = qkv[..., :D], qkv[..., D:2 * D], qkv[..., 2 * D:]

    def split(t):  # (B, L, D) -> (B, H, L, hd)
        return t.reshape(B, L, H, hd).transpose(0, 2, 1, 3)

    q, k, v = split(q), split(k), split(v)
    s = jnp.einsum('bhqd,bhkd->bhqk', q, k) / jnp.sqrt(jnp.float32(hd))
    causal = jnp.triu(jnp.ones((L, L), bool), 1)
    masked = causal[None, None] | (key_padding_mask > 0.5)[:, None, None, :]
    s = jnp.where(masked, jnp.float32(MASK_BIAS), s)
    p = jax.nn.softmax(s, axis=-1)
    o = jnp.einsum('bhqk,bhkd->bhqd', p, v)
    attn = o.transpose(0, 2, 1, 3).reshape(B, L, D) @ w_o + b_o
    residual_one = x + attn
    mu = residual_one.mean(-1, keepdims=True)
    var = ((residual_one - mu) ** 2).mean(-1, keepdims=True)
    normed = (residual_one - mu) * jax.lax.rsqrt(var + LN_EPS) * ln_g + ln_b
    h1 = jax.nn.relu(normed @ w1 + b1)
    h2 = jax.nn.relu(h1 @ w2 + b2)
    return residual_one + (h2 @ w3 + b3)


if __name__ == "__main__":
    # Small-but-TPU-friendly config: d_model = 128 (lane-dense I/O), 4 heads
    # (head_dim = 32), d_hidden = 256, num_hidden_layers = 2; batch = 8,
    # seq = 16.  batch_block = 4 -> grid of 2 "parallel" steps (both v7x
    # TensorCores busy) with 4 sequences folded into each matmul M dim (M = 64).
    B, L, D, H, D_HID = 8, 16, 128, 4, 256
    TB = 4

    key = jax.random.PRNGKey(0)
    k_x, k_p = jax.random.split(key)
    x = jax.random.normal(k_x, (B, L, D), jnp.float32)

    # key_padding_mask, PyTorch convention: nonzero/True => padded key position.
    pad = jnp.zeros((B, L), jnp.float32)
    pad = pad.at[1, L - 3:].set(1.0)
    pad = pad.at[5, L - 5:].set(1.0)

    params = init_params(k_p, D, D_HID)            # PyTorch-equivalent params
    kparams = prepare_kernel_params(params, H)     # QKV scale folded (host, once)

    out = decoder_block(x, pad, kparams, H, batch_block=TB)
    out = jax.block_until_ready(out)

    assert out.shape == (B, L, D)
    assert bool(jnp.all(jnp.isfinite(out)))
    ref = decoder_block_reference(x, pad, params, H)
    max_err = float(jnp.max(jnp.abs(out - ref)))
    assert max_err < 0.15, f"kernel vs reference mismatch: {max_err}"
    print("KERNEL_OK")
</pallas_src>

<mosaic_0001>
module attributes {stable_mosaic.version = 11 : i64} {
  func.func @decoder_block_kernel(%arg0: i32, %arg1: memref<64x128xf32, #tpu.memory_space<vmem>>, %arg2: memref<16x1x16xf32, #tpu.memory_space<vmem>>, %arg3: memref<128x384xbf16, #tpu.memory_space<vmem>>, %arg4: memref<1x384xf32, #tpu.memory_space<vmem>>, %arg5: memref<128x128xbf16, #tpu.memory_space<vmem>>, %arg6: memref<1x128xf32, #tpu.memory_space<vmem>>, %arg7: memref<1x128xf32, #tpu.memory_space<vmem>>, %arg8: memref<1x128xf32, #tpu.memory_space<vmem>>, %arg9: memref<128x256xbf16, #tpu.memory_space<vmem>>, %arg10: memref<1x256xf32, #tpu.memory_space<vmem>>, %arg11: memref<256x256xbf16, #tpu.memory_space<vmem>>, %arg12: memref<1x256xf32, #tpu.memory_space<vmem>>, %arg13: memref<256x128xbf16, #tpu.memory_space<vmem>>, %arg14: memref<1x128xf32, #tpu.memory_space<vmem>>, %arg15: memref<64x128xf32, #tpu.memory_space<vmem>>) attributes {dimension_semantics = [#tpu.dimension_semantics<parallel>], iteration_bounds = array<i64: 2>, scalar_prefetch = 0 : i64, scratch_operands = 0 : i64, tpu.core_type = #tpu.core_type<tc>, window_params = [{transform_indices = @transform_0, window_bounds = array<i64: 64, 128>}, {transform_indices = @transform_1, window_bounds = array<i64: 16, 1, 16>}, {pipeline_mode = #tpu.pipeline_mode<synchronous>, transform_indices = @transform_2, window_bounds = array<i64: 128, 384>}, {pipeline_mode = #tpu.pipeline_mode<synchronous>, transform_indices = @transform_3, window_bounds = array<i64: 1, 384>}, {pipeline_mode = #tpu.pipeline_mode<synchronous>, transform_indices = @transform_4, window_bounds = array<i64: 128, 128>}, {pipeline_mode = #tpu.pipeline_mode<synchronous>, transform_indices = @transform_5, window_bounds = array<i64: 1, 128>}, {pipeline_mode = #tpu.pipeline_mode<synchronous>, transform_indices = @transform_6, window_bounds = array<i64: 1, 128>}, {pipeline_mode = #tpu.pipeline_mode<synchronous>, transform_indices = @transform_7, window_bounds = array<i64: 1, 128>}, {pipeline_mode = #tpu.pipeline_mode<synchronous>, transform_indices = @transform_8, window_bounds = array<i64: 128, 256>}, {pipeline_mode = #tpu.pipeline_mode<synchronous>, transform_indices = @transform_9, window_bounds = array<i64: 1, 256>}, {pipeline_mode = #tpu.pipeline_mode<synchronous>, transform_indices = @transform_10, window_bounds = array<i64: 256, 256>}, {pipeline_mode = #tpu.pipeline_mode<synchronous>, transform_indices = @transform_11, window_bounds = array<i64: 1, 256>}, {pipeline_mode = #tpu.pipeline_mode<synchronous>, transform_indices = @transform_12, window_bounds = array<i64: 256, 128>}, {pipeline_mode = #tpu.pipeline_mode<synchronous>, transform_indices = @transform_13, window_bounds = array<i64: 1, 128>}, {transform_indices = @transform_14, window_bounds = array<i64: 64, 128>}]} {
    %c0 = arith.constant 0 : index
    %c0_0 = arith.constant 0 : index
    %0 = vector.load %arg1[%c0, %c0_0] : memref<64x128xf32, #tpu.memory_space<vmem>>, vector<64x128xf32>
    %1 = arith.truncf %0 : vector<64x128xf32> to vector<64x128xbf16>
    %c0_1 = arith.constant 0 : index
    %c0_2 = arith.constant 0 : index
    %2 = vector.load %arg3[%c0_1, %c0_2] : memref<128x384xbf16, #tpu.memory_space<vmem>>, vector<128x384xbf16>
    %cst = arith.constant dense<0.000000e+00> : vector<64x384xf32>
    %3 = tpu.matmul %1, %2, %cst {dimension_numbers = #tpu.dot_dimension_numbers<[1], [0], [0], [1], [0, 0, 1, 1], [], []>} : vector<64x128xbf16>, vector<128x384xbf16>, vector<64x384xf32> -> vector<64x384xf32>
    %c0_3 = arith.constant 0 : index
    %c0_4 = arith.constant 0 : index
    %4 = vector.load %arg4[%c0_3, %c0_4] : memref<1x384xf32, #tpu.memory_space<vmem>>, vector<1x384xf32>
    %5 = vector.broadcast %4 : vector<1x384xf32> to vector<64x384xf32>
    %6 = arith.addf %3, %5 : vector<64x384xf32>
    %7 = arith.truncf %6 : vector<64x384xf32> to vector<64x384xbf16>
    %8 = vector.extract_strided_slice %7 {offsets = [0, 0], sizes = [64, 128], strides = [1, 1]} : vector<64x384xbf16> to vector<64x128xbf16>
    %9 = vector.shape_cast %8 : vector<64x128xbf16> to vector<4x16x128xbf16>
    %10 = tpu.transpose %9, [0, 2, 1] : vector<4x16x128xbf16> -> vector<4x128x16xbf16>
    %11 = vector.shape_cast %10 : vector<4x128x16xbf16> to vector<16x32x16xbf16>
    %12 = tpu.transpose %11, [0, 2, 1] : vector<16x32x16xbf16> -> vector<16x16x32xbf16>
    %13 = vector.extract_strided_slice %7 {offsets = [0, 128], sizes = [64, 128], strides = [1, 1]} : vector<64x384xbf16> to vector<64x128xbf16>
    %14 = vector.shape_cast %13 : vector<64x128xbf16> to vector<4x16x128xbf16>
    %15 = tpu.transpose %14, [0, 2, 1] : vector<4x16x128xbf16> -> vector<4x128x16xbf16>
    %16 = vector.shape_cast %15 : vector<4x128x16xbf16> to vector<16x32x16xbf16>
    %17 = tpu.transpose %16, [0, 2, 1] : vector<16x32x16xbf16> -> vector<16x16x32xbf16>
    %18 = vector.extract_strided_slice %7 {offsets = [0, 256], sizes = [64, 128], strides = [1, 1]} : vector<64x384xbf16> to vector<64x128xbf16>
    %19 = vector.shape_cast %18 : vector<64x128xbf16> to vector<4x16x128xbf16>
    %20 = tpu.transpose %19, [0, 2, 1] : vector<4x16x128xbf16> -> vector<4x128x16xbf16>
    %21 = vector.shape_cast %20 : vector<4x128x16xbf16> to vector<16x32x16xbf16>
    %22 = tpu.transpose %21, [0, 2, 1] : vector<16x32x16xbf16> -> vector<16x16x32xbf16>
    "tpu.trace_start"() <{level = 10 : i32, message = "bqd,bkd->bqk"}> : () -> ()
    %cst_5 = arith.constant dense<0.000000e+00> : vector<16x16x16xf32>
    %23 = tpu.matmul %12, %17, %cst_5 {dimension_numbers = #tpu.dot_dimension_numbers<[2], [2], [1], [1], [0, 0, 0, 1, 1, 1], [0], [0]>} : vector<16x16x32xbf16>, vector<16x16x32xbf16>, vector<16x16x16xf32> -> vector<16x16x16xf32>
    "tpu.trace_stop"() : () -> ()
    %24 = tpu.iota {dimensions = array<i32: 0>} : vector<16x16xi32>
    %25 = tpu.iota {dimensions = array<i32: 1>} : vector<16x16xi32>
    %26 = arith.cmpi sgt, %25, %24 : vector<16x16xi32>
    %cst_6 = arith.constant -1.000000e+30 : f32
    %cst_7 = arith.constant 0.000000e+00 : f32
    %27 = vector.broadcast %cst_6 : f32 to vector<16x16xf32>
    %28 = vector.broadcast %cst_7 : f32 to vector<16x16xf32>
    %29 = arith.select %26, %27, %28 : vector<16x16xi1>, vector<16x16xf32>
    %30 = vector.shape_cast %29 : vector<16x16xf32> to vector<1x16x16xf32>
    %c0_8 = arith.constant 0 : index
    %c0_9 = arith.constant 0 : index
    %c0_10 = arith.constant 0 : index
    %31 = vector.load %arg2[%c0_8, %c0_9, %c0_10] : memref<16x1x16xf32, #tpu.memory_space<vmem>>, vector<16x1x16xf32>
    %32 = vector.broadcast %30 : vector<1x16x16xf32> to vector<16x16x16xf32>
    %33 = vector.broadcast %31 : vector<16x1x16xf32> to vector<16x16x16xf32>
    %34 = arith.addf %32, %33 : vector<16x16x16xf32>
    %35 = arith.addf %23, %34 : vector<16x16x16xf32>
    %cst_11 = arith.constant dense<0xFF800000> : vector<16x16xf32>
    %36 = vector.multi_reduction <maximumf>, %35, %cst_11 [2] : vector<16x16x16xf32> to vector<16x16xf32>
    %37 = vector.shape_cast %36 : vector<16x16xf32> to vector<16x16x1xf32>
    %38 = vector.broadcast %37 : vector<16x16x1xf32> to vector<16x16x16xf32>
    %39 = arith.subf %35, %38 : vector<16x16x16xf32>
    %40 = math.exp %39 : vector<16x16x16xf32>
    %cst_12 = arith.constant dense<0.000000e+00> : vector<16x16xf32>
    %41 = vector.multi_reduction <add>, %40, %cst_12 [2] : vector<16x16x16xf32> to vector<16x16xf32>
    %42 = vector.shape_cast %41 : vector<16x16xf32> to vector<16x16x1xf32>
    %43 = tpu.reciprocal %42 {approx = true} : vector<16x16x1xf32> -> vector<16x16x1xf32>
    %44 = vector.broadcast %43 : vector<16x16x1xf32> to vector<16x16x16xf32>
    %45 = arith.mulf %40, %44 : vector<16x16x16xf32>
    %46 = arith.truncf %45 : vector<16x16x16xf32> to vector<16x16x16xbf16>
    "tpu.trace_start"() <{level = 10 : i32, message = "bqk,bkd->bqd"}> : () -> ()
    %cst_13 = arith.constant dense<0.000000e+00> : vector<16x16x32xf32>
    %47 = tpu.matmul %46, %22, %cst_13 {dimension_numbers = #tpu.dot_dimension_numbers<[2], [1], [1], [2], [0, 0, 0, 1, 1, 2], [0], [0]>} : vector<16x16x16xbf16>, vector<16x16x32xbf16>, vector<16x16x32xf32> -> vector<16x16x32xf32>
    "tpu.trace_stop"() : () -> ()
    %48 = arith.truncf %47 : vector<16x16x32xf32> to vector<16x16x32xbf16>
    %49 = tpu.transpose %48, [0, 2, 1] : vector<16x16x32xbf16> -> vector<16x32x16xbf16>
    %50 = vector.shape_cast %49 : vector<16x32x16xbf16> to vector<4x128x16xbf16>
    %51 = tpu.transpose %50, [0, 2, 1] : vector<4x128x16xbf16> -> vector<4x16x128xbf16>
    %52 = vector.shape_cast %51 : vector<4x16x128xbf16> to vector<64x128xbf16>
    %c0_14 = arith.constant 0 : index
    %c0_15 = arith.constant 0 : index
    %53 = vector.load %arg5[%c0_14, %c0_15] : memref<128x128xbf16, #tpu.memory_space<vmem>>, vector<128x128xbf16>
    %cst_16 = arith.constant dense<0.000000e+00> : vector<64x128xf32>
    %54 = tpu.matmul %52, %53, %cst_16 {dimension_numbers = #tpu.dot_dimension_numbers<[1], [0], [0], [1], [0, 0, 1, 1], [], []>} : vector<64x128xbf16>, vector<128x128xbf16>, vector<64x128xf32> -> vector<64x128xf32>
    %c0_17 = arith.constant 0 : index
    %c0_18 = arith.constant 0 : index
    %55 = vector.load %arg6[%c0_17, %c0_18] : memref<1x128xf32, #tpu.memory_space<vmem>>, vector<1x128xf32>
    %56 = vector.broadcast %55 : vector<1x128xf32> to vector<64x128xf32>
    %57 = arith.addf %54, %56 : vector<64x128xf32>
    %58 = arith.addf %0, %57 : vector<64x128xf32>
    %cst_19 = arith.constant dense<0.000000e+00> : vector<64xf32>
    %59 = vector.multi_reduction <add>, %58, %cst_19 [1] : vector<64x128xf32> to vector<64xf32>
    %60 = vector.shape_cast %59 : vector<64xf32> to vector<64x1xf32>
    %cst_20 = arith.constant 1.280000e+02 : f32
    %61 = vector.broadcast %cst_20 : f32 to vector<64x1xf32>
    %62 = arith.divf %60, %61 : vector<64x1xf32>
    %63 = vector.broadcast %62 : vector<64x1xf32> to vector<64x128xf32>
    %64 = arith.subf %58, %63 : vector<64x128xf32>
    %65 = arith.mulf %64, %64 : vector<64x128xf32>
    %cst_21 = arith.constant dense<0.000000e+00> : vector<64xf32>
    %66 = vector.multi_reduction <add>, %65, %cst_21 [1] : vector<64x128xf32> to vector<64xf32>
    %67 = vector.shape_cast %66 : vector<64xf32> to vector<64x1xf32>
    %cst_22 = arith.constant 1.280000e+02 : f32
    %68 = vector.broadcast %cst_22 : f32 to vector<64x1xf32>
    %69 = arith.divf %67, %68 : vector<64x1xf32>
    %70 = vector.broadcast %62 : vector<64x1xf32> to vector<64x128xf32>
    %71 = arith.subf %58, %70 : vector<64x128xf32>
    %cst_23 = arith.constant 9.99999974E-6 : f32
    %72 = vector.broadcast %cst_23 : f32 to vector<64x1xf32>
    %73 = arith.addf %69, %72 : vector<64x1xf32>
    %74 = math.rsqrt %73 : vector<64x1xf32>
    %75 = vector.broadcast %74 : vector<64x1xf32> to vector<64x128xf32>
    %76 = arith.mulf %71, %75 : vector<64x128xf32>
    %c0_24 = arith.constant 0 : index
    %c0_25 = arith.constant 0 : index
    %77 = vector.load %arg7[%c0_24, %c0_25] : memref<1x128xf32, #tpu.memory_space<vmem>>, vector<1x128xf32>
    %78 = vector.broadcast %77 : vector<1x128xf32> to vector<64x128xf32>
    %79 = arith.mulf %76, %78 : vector<64x128xf32>
    %c0_26 = arith.constant 0 : index
    %c0_27 = arith.constant 0 : index
    %80 = vector.load %arg8[%c0_26, %c0_27] : memref<1x128xf32, #tpu.memory_space<vmem>>, vector<1x128xf32>
    %81 = vector.broadcast %80 : vector<1x128xf32> to vector<64x128xf32>
    %82 = arith.addf %79, %81 : vector<64x128xf32>
    %83 = arith.truncf %82 : vector<64x128xf32> to vector<64x128xbf16>
    %c0_28 = arith.constant 0 : index
    %c0_29 = arith.constant 0 : index
    %84 = vector.load %arg9[%c0_28, %c0_29] : memref<128x256xbf16, #tpu.memory_space<vmem>>, vector<128x256xbf16>
    %cst_30 = arith.constant dense<0.000000e+00> : vector<64x256xf32>
    %85 = tpu.matmul %83, %84, %cst_30 {dimension_numbers = #tpu.dot_dimension_numbers<[1], [0], [0], [1], [0, 0, 1, 1], [], []>} : vector<64x128xbf16>, vector<128x256xbf16>, vector<64x256xf32> -> vector<64x256xf32>
    %c0_31 = arith.constant 0 : index
    %c0_32 = arith.constant 0 : index
    %86 = vector.load %arg10[%c0_31, %c0_32] : memref<1x256xf32, #tpu.memory_space<vmem>>, vector<1x256xf32>
    %87 = vector.broadcast %86 : vector<1x256xf32> to vector<64x256xf32>
    %88 = arith.addf %85, %87 : vector<64x256xf32>
    %cst_33 = arith.constant 0.000000e+00 : f32
    %89 = vector.broadcast %cst_33 : f32 to vector<64x256xf32>
    %90 = arith.maximumf %88, %89 : vector<64x256xf32>
    %91 = arith.truncf %90 : vector<64x256xf32> to vector<64x256xbf16>
    %c0_34 = arith.constant 0 : index
    %c0_35 = arith.constant 0 : index
    %92 = vector.load %arg11[%c0_34, %c0_35] : memref<256x256xbf16, #tpu.memory_space<vmem>>, vector<256x256xbf16>
    %cst_36 = arith.constant dense<0.000000e+00> : vector<64x256xf32>
    %93 = tpu.matmul %91, %92, %cst_36 {dimension_numbers = #tpu.dot_dimension_numbers<[1], [0], [0], [1], [0, 0, 1, 1], [], []>} : vector<64x256xbf16>, vector<256x256xbf16>, vector<64x256xf32> -> vector<64x256xf32>
    %c0_37 = arith.constant 0 : index
    %c0_38 = arith.constant 0 : index
    %94 = vector.load %arg12[%c0_37, %c0_38] : memref<1x256xf32, #tpu.memory_space<vmem>>, vector<1x256xf32>
    %95 = vector.broadcast %94 : vector<1x256xf32> to vector<64x256xf32>
    %96 = arith.addf %93, %95 : vector<64x256xf32>
    %cst_39 = arith.constant 0.000000e+00 : f32
    %97 = vector.broadcast %cst_39 : f32 to vector<64x256xf32>
    %98 = arith.maximumf %96, %97 : vector<64x256xf32>
    %99 = arith.truncf %98 : vector<64x256xf32> to vector<64x256xbf16>
    %c0_40 = arith.constant 0 : index
    %c0_41 = arith.constant 0 : index
    %100 = vector.load %arg13[%c0_40, %c0_41] : memref<256x128xbf16, #tpu.memory_space<vmem>>, vector<256x128xbf16>
    %cst_42 = arith.constant dense<0.000000e+00> : vector<64x128xf32>
    %101 = tpu.matmul %99, %100, %cst_42 {dimension_numbers = #tpu.dot_dimension_numbers<[1], [0], [0], [1], [0, 0, 1, 1], [], []>} : vector<64x256xbf16>, vector<256x128xbf16>, vector<64x128xf32> -> vector<64x128xf32>
    %c0_43 = arith.constant 0 : index
    %c0_44 = arith.constant 0 : index
    %102 = vector.load %arg14[%c0_43, %c0_44] : memref<1x128xf32, #tpu.memory_space<vmem>>, vector<1x128xf32>
    %103 = vector.broadcast %102 : vector<1x128xf32> to vector<64x128xf32>
    %104 = arith.addf %101, %103 : vector<64x128xf32>
    %105 = arith.addf %58, %104 : vector<64x128xf32>
    %c0_45 = arith.constant 0 : index
    %c0_46 = arith.constant 0 : index
    %106 = vector.load %arg15[%c0_45, %c0_46] : memref<64x128xf32, #tpu.memory_space<vmem>>, vector<64x128xf32>
    tpu.vector_store %arg15[%c0_45, %c0_46], %105 {strides = array<i32>} : memref<64x128xf32, #tpu.memory_space<vmem>>, vector<64x128xf32>,
    return
  }
  func.func @transform_0(%arg0: i32) -> (i32, i32) {
    %c0_i32 = arith.constant 0 : i32
    %c0_i32_0 = arith.constant 0 : i32
    return %arg0, %c0_i32 : i32, i32
  }
  func.func @transform_1(%arg0: i32) -> (i32, i32, i32) {
    %c0_i32 = arith.constant 0 : i32
    %c0_i32_0 = arith.constant 0 : i32
    %c0_i32_1 = arith.constant 0 : i32
    return %arg0, %c0_i32, %c0_i32_0 : i32, i32, i32
  }
  func.func @transform_2(%arg0: i32) -> (i32, i32) {
    %c0_i32 = arith.constant 0 : i32
    %c0_i32_0 = arith.constant 0 : i32
    %c0_i32_1 = arith.constant 0 : i32
    return %c0_i32, %c0_i32_0 : i32, i32
  }
  func.func @transform_3(%arg0: i32) -> (i32, i32) {
    %c0_i32 = arith.constant 0 : i32
    %c0_i32_0 = arith.constant 0 : i32
    %c0_i32_1 = arith.constant 0 : i32
    return %c0_i32, %c0_i32_0 : i32, i32
  }
  func.func @transform_4(%arg0: i32) -> (i32, i32) {
    %c0_i32 = arith.constant 0 : i32
    %c0_i32_0 = arith.constant 0 : i32
    %c0_i32_1 = arith.constant 0 : i32
    return %c0_i32, %c0_i32_0 : i32, i32
  }
  func.func @transform_5(%arg0: i32) -> (i32, i32) {
    %c0_i32 = arith.constant 0 : i32
    %c0_i32_0 = arith.constant 0 : i32
    %c0_i32_1 = arith.constant 0 : i32
    return %c0_i32, %c0_i32_0 : i32, i32
  }
  func.func @transform_6(%arg0: i32) -> (i32, i32) {
    %c0_i32 = arith.constant 0 : i32
    %c0_i32_0 = arith.constant 0 : i32
    %c0_i32_1 = arith.constant 0 : i32
    return %c0_i32, %c0_i32_0 : i32, i32
  }
  func.func @transform_7(%arg0: i32) -> (i32, i32) {
    %c0_i32 = arith.constant 0 : i32
    %c0_i32_0 = arith.constant 0 : i32
    %c0_i32_1 = arith.constant 0 : i32
    return %c0_i32, %c0_i32_0 : i32, i32
  }
  func.func @transform_8(%arg0: i32) -> (i32, i32) {
    %c0_i32 = arith.constant 0 : i32
    %c0_i32_0 = arith.constant 0 : i32
    %c0_i32_1 = arith.constant 0 : i32
    return %c0_i32, %c0_i32_0 : i32, i32
  }
  func.func @transform_9(%arg0: i32) -> (i32, i32) {
    %c0_i32 = arith.constant 0 : i32
    %c0_i32_0 = arith.constant 0 : i32
    %c0_i32_1 = arith.constant 0 : i32
    return %c0_i32, %c0_i32_0 : i32, i32
  }
  func.func @transform_10(%arg0: i32) -> (i32, i32) {
    %c0_i32 = arith.constant 0 : i32
    %c0_i32_0 = arith.constant 0 : i32
    %c0_i32_1 = arith.constant 0 : i32
    return %c0_i32, %c0_i32_0 : i32, i32
  }
  func.func @transform_11(%arg0: i32) -> (i32, i32) {
    %c0_i32 = arith.constant 0 : i32
    %c0_i32_0 = arith.constant 0 : i32
    %c0_i32_1 = arith.constant 0 : i32
    return %c0_i32, %c0_i32_0 : i32, i32
  }
  func.func @transform_12(%arg0: i32) -> (i32, i32) {
    %c0_i32 = arith.constant 0 : i32
    %c0_i32_0 = arith.constant 0 : i32
    %c0_i32_1 = arith.constant 0 : i32
    return %c0_i32, %c0_i32_0 : i32, i32
  }
  func.func @transform_13(%arg0: i32) -> (i32, i32) {
    %c0_i32 = arith.constant 0 : i32
    %c0_i32_0 = arith.constant 0 : i32
    %c0_i32_1 = arith.constant 0 : i32
    return %c0_i32, %c0_i32_0 : i32, i32
  }
  func.func @transform_14(%arg0: i32) -> (i32, i32) {
    %c0_i32 = arith.constant 0 : i32
    %c0_i32_0 = arith.constant 0 : i32
    return %arg0, %c0_i32 : i32, i32
  }
}

</mosaic_0001>

<llo_original>
// kernel: tpu_custom_call.1
$region0: #{tpu_custom_call.1}
  #allocation0 [shape = 'u32[]', space=smem, size = 0x4, offset = 0x4, fixed_abs, tag = 'smem constant byte address 0x4 - core index']
  #allocation1 [shape = 'u32[144,128]{1,0:T(1,128)}', space=vmem, size = 0x12000, scoped, tag = 'internal scratch']
  %s0 = inlined_call_operand.hbm [shape: f32[128,128], index: 0, kind: input, shape index: {}]
  %s1 = inlined_call_operand.vmem [shape: f32[32,1,16], index: 1, kind: input, shape index: {}]
  %s2 = inlined_call_operand.hbm [shape: bf16[128,384], index: 2, kind: input, shape index: {}]
  %s3 = inlined_call_operand.vmem [shape: f32[1,384], index: 3, kind: input, shape index: {}]
  %s4 = inlined_call_operand.hbm [shape: bf16[128,128], index: 4, kind: input, shape index: {}]
  %s5 = inlined_call_operand.vmem [shape: f32[1,128], index: 5, kind: input, shape index: {}]
  %s6 = inlined_call_operand.vmem [shape: f32[1,128], index: 6, kind: input, shape index: {}]
  %s7 = inlined_call_operand.vmem [shape: f32[1,128], index: 7, kind: input, shape index: {}]
  %s8 = inlined_call_operand.hbm [shape: bf16[128,256], index: 8, kind: input, shape index: {}]
  %s9 = inlined_call_operand.vmem [shape: f32[1,256], index: 9, kind: input, shape index: {}]
  %s10 = inlined_call_operand.hbm [shape: bf16[256,256], index: 10, kind: input, shape index: {}]
  %s11 = inlined_call_operand.vmem [shape: f32[1,256], index: 11, kind: input, shape index: {}]
  %s12 = inlined_call_operand.hbm [shape: bf16[256,128], index: 12, kind: input, shape index: {}]
  %s13 = inlined_call_operand.vmem [shape: f32[1,128], index: 13, kind: input, shape index: {}]
  %s14 = inlined_call_operand.hbm [shape: f32[128,128], index: 14, kind: output, shape index: {}]
  %s15 = sld [smem:[#allocation0]]
  $region113: #{tpu_custom_call.1} parent=0
    _
  %s17 = ssub.s32 1, %s15
  %s18 = scalar_select 0, %s17, %s15
  $region1: #{tpu_custom_call.1} parent=0
    #allocation2 [shape = 'u8[65536]{0}', space=vmem, size = 0x10000, scoped, tag = 'input window, operand 0']
    #allocation3 [shape = 's32[2]{0}', space=sflag, size = 0x8, scoped, tag = 'scoped memory for tpu_custom_call.1']
    #allocation4 [shape = 's32[2]{0}', space=sflag, size = 0x8, scoped, tag = 'scoped memory for tpu_custom_call.1']
    #allocation5 [shape = 'u8[98304]{0}', space=vmem, size = 0x18000, scoped, tag = 'input window, operand 2, single buffered']
    #allocation6 [shape = 's32[1]{0}', space=sflag, size = 0x4, scoped, tag = 'scoped memory for tpu_custom_call.1']
    #allocation7 [shape = 'u8[32768]{0}', space=vmem, size = 0x8000, scoped, tag = 'input window, operand 4, single buffered']
    #allocation8 [shape = 'u8[65536]{0}', space=vmem, size = 0x10000, scoped, tag = 'input window, operand 8, single buffered']
    #allocation9 [shape = 's32[1]{0}', space=sflag, size = 0x4, scoped, tag = 'scoped memory for tpu_custom_call.1']
    #allocation10 [shape = 'u8[131072]{0}', space=vmem, size = 0x20000, scoped, tag = 'input window, operand 10, single buffered']
    #allocation11 [shape = 'u8[65536]{0}', space=vmem, size = 0x10000, scoped, tag = 'input window, operand 12, single buffered']
    #allocation12 [shape = 's32[1]{0}', space=sflag, size = 0x4, scoped, tag = 'scoped memory for tpu_custom_call.1']
    #allocation13 [shape = 'u8[65536]{0}', space=vmem, size = 0x10000, scoped, tag = 'output window, operand 0']
    %19 = vsyncpa [#allocation3], 0
    %s20 = scalar_lea.sflag [#allocation3], 1
    %21 = vsyncpa %s20, 0
    %22 = vsyncpa [#allocation6], 0
    %23 = vsyncpa [#allocation9], 0
    %24 = vsyncpa [#allocation12], 0
    %25 = vsyncpa [#allocation4], 0
    %s26 = scalar_lea.sflag [#allocation4], 1
    %27 = vsyncpa %s26, 0
    loop: start=0, step=1, limit=4
    $region2: #{tpu_custom_call.1} parent=1 // loop_pre_header
      _
    $region3: #{tpu_custom_call.1} parent=1 // loop_header
      %s29 = sphi 0, %s33
      %p30 = scmp.ge.s32.totalorder %s29, 4
      %s39 = sphi 0, %s41
      %s42 = sphi 0, %s39
      %s43 = sphi 0, %s42
      %s59 = sphi 0, %s43
      %s65 = sphi 0, %s67
      %s68 = sphi 0, %s65
      %s69 = sphi 0, %s68
      %s85 = sphi 0, %s69
      %s89 = sphi 0, %s89
      %s91 = sphi 0, %s89
      %s92 = sphi 0, %s91
      %s106 = sphi 0, %s92
      %s110 = sphi 0, %s110
      %s112 = sphi 0, %s110
      %s113 = sphi 0, %s112
      %s127 = sphi 0, %s113
      %s131 = sphi 0, %s131
      %s133 = sphi 0, %s131
      %s134 = sphi 0, %s133
      %s148 = sphi 0, %s134
      %s152 = sphi 0, %s152
      %s154 = sphi 0, %s152
      %s155 = sphi 0, %s154
      %s169 = sphi 0, %s155
      %s173 = sphi 0, %s173
      %s175 = sphi 0, %s173
      %s176 = sphi 0, %s175
      %s190 = sphi 0, %s176
      %s194 = sphi 0, %s194
      %s196 = sphi 0, %s194
      %s197 = sphi 0, %s196
      %s211 = sphi 0, %s197
      %s215 = sphi 0, %s215
      %s217 = sphi 0, %s215
      %s218 = sphi 0, %s217
      %s232 = sphi 0, %s218
      %s236 = sphi 0, %s236
      %s238 = sphi 0, %s236
      %s239 = sphi 0, %s238
      %s253 = sphi 0, %s239
      %s257 = sphi 0, %s257
      %s259 = sphi 0, %s257
      %s260 = sphi 0, %s259
      %s274 = sphi 0, %s260
      %s278 = sphi 0, %s278
      %s280 = sphi 0, %s278
      %s281 = sphi 0, %s280
      %s295 = sphi 0, %s281
      %s299 = sphi 0, %s299
      %s301 = sphi 0, %s299
      %s302 = sphi 0, %s301
      %s316 = sphi 0, %s302
      %s320 = sphi 0, %s320
      %s322 = sphi 0, %s320
      %s323 = sphi 0, %s322
      %s337 = sphi 0, %s323
      %s343 = sphi 0, %s345
      %s346 = sphi 0, %s343
      %s347 = sphi 0, %s346
      %s363 = sphi 0, %s347
    $region4: #{tpu_custom_call.1} parent=1 // loop_header_branch
      %32 = sbr.rel (%p30) target = $region8
    $region5: #{tpu_custom_call.1} parent=1 // loop_body
      %s34 = ssub.s32 %s29, 1
      %s35 = ssub.s32 %s29, 2
      %s36 = sadd.s32 %s29, 1
      %s37 = ssub.s32 %s29, %s36
      %p38 = scmp.eq.s32.totalorder %s37, 0
      %s40 = sadd.s32 %s39, 1
      %s41 = scalar_select %p38, %s39, %s40
      %p44 = pneg %p38
      %p45 = scmp.eq.s32.totalorder %s29, 1
      %p46 = por %p44, %p45
      %p47 = scmp.ne.s32.totalorder %s39, %s42
      %p48 = scmp.eq.s32.totalorder %s29, 0
      %p49 = por %p47, %p48
      %p50 = scmp.ne.s32.totalorder %s39, %s42
      %p51 = scmp.eq.s32.totalorder %s34, 1
      %p52 = por %p50, %p51
      %p53 = scmp.ne.s32.totalorder %s42, %s43
      %p54 = scmp.eq.s32.totalorder %s34, 0
      %p55 = por %p53, %p54
      %p56 = scmp.ne.s32.totalorder %s42, %s43
      %p57 = scmp.eq.s32.totalorder %s35, 1
      %p58 = por %p56, %p57
      %p60 = scmp.ne.s32.totalorder %s43, %s59
      %p61 = scmp.eq.s32.totalorder %s35, 0
      %p62 = por %p60, %p61
      %s63 = ssub.s32 %s29, %s36
      %p64 = scmp.eq.s32.totalorder %s63, 0
      %s66 = sadd.s32 %s65, 1
      %s67 = scalar_select %p64, %s65, %s66
      %p70 = pneg %p64
      %p71 = scmp.eq.s32.totalorder %s29, 1
      %p72 = por %p70, %p71
      %p73 = scmp.ne.s32.totalorder %s65, %s68
      %p74 = scmp.eq.s32.totalorder %s29, 0
      %p75 = por %p73, %p74
      %p76 = scmp.ne.s32.totalorder %s65, %s68
      %p77 = scmp.eq.s32.totalorder %s34, 1
      %p78 = por %p76, %p77
      %p79 = scmp.ne.s32.totalorder %s68, %s69
      %p80 = scmp.eq.s32.totalorder %s34, 0
      %p81 = por %p79, %p80
      %p82 = scmp.ne.s32.totalorder %s68, %s69
      %p83 = scmp.eq.s32.totalorder %s35, 1
      %p84 = por %p82, %p83
      %p86 = scmp.ne.s32.totalorder %s69, %s85
      %p87 = scmp.eq.s32.totalorder %s35, 0
      %p88 = por %p86, %p87
      %s90 = sadd.s32 %s89, 1
      %p93 = scmp.eq.s32.totalorder %s29, 1
      %p94 = scmp.ne.s32.totalorder %s89, %s91
      %p95 = scmp.eq.s32.totalorder %s29, 0
      %p96 = por %p94, %p95
      %p97 = scmp.ne.s32.totalorder %s89, %s91
      %p98 = scmp.eq.s32.totalorder %s34, 1
      %p99 = por %p97, %p98
      %p100 = scmp.ne.s32.totalorder %s91, %s92
      %p101 = scmp.eq.s32.totalorder %s34, 0
      %p102 = por %p100, %p101
      %p103 = scmp.ne.s32.totalorder %s91, %s92
      %p104 = scmp.eq.s32.totalorder %s35, 1
      %p105 = por %p103, %p104
      %p107 = scmp.ne.s32.totalorder %s92, %s106
      %p108 = scmp.eq.s32.totalorder %s35, 0
      %p109 = por %p107, %p108
      %s111 = sadd.s32 %s110, 1
      %p114 = scmp.eq.s32.totalorder %s29, 1
      %p115 = scmp.ne.s32.totalorder %s110, %s112
      %p116 = scmp.eq.s32.totalorder %s29, 0
      %p117 = por %p115, %p116
      %p118 = scmp.ne.s32.totalorder %s110, %s112
      %p119 = scmp.eq.s32.totalorder %s34, 1
      %p120 = por %p118, %p119
      %p121 = scmp.ne.s32.totalorder %s112, %s113
      %p122 = scmp.eq.s32.totalorder %s34, 0
      %p123 = por %p121, %p122
      %p124 = scmp.ne.s32.totalorder %s112, %s113
      %p125 = scmp.eq.s32.totalorder %s35, 1
      %p126 = por %p124, %p125
      %p128 = scmp.ne.s32.totalorder %s113, %s127
      %p129 = scmp.eq.s32.totalorder %s35, 0
      %p130 = por %p128, %p129
      %s132 = sadd.s32 %s131, 1
      %p135 = scmp.eq.s32.totalorder %s29, 1
      %p136 = scmp.ne.s32.totalorder %s131, %s133
      %p137 = scmp.eq.s32.totalorder %s29, 0
      %p138 = por %p136, %p137
      %p139 = scmp.ne.s32.totalorder %s131, %s133
      %p140 = scmp.eq.s32.totalorder %s34, 1
      %p141 = por %p139, %p140
      %p142 = scmp.ne.s32.totalorder %s133, %s134
      %p143 = scmp.eq.s32.totalorder %s34, 0
      %p144 = por %p142, %p143
      %p145 = scmp.ne.s32.totalorder %s133, %s134
      %p146 = scmp.eq.s32.totalorder %s35, 1
      %p147 = por %p145, %p146
      %p149 = scmp.ne.s32.totalorder %s134, %s148
      %p150 = scmp.eq.s32.totalorder %s35, 0
      %p151 = por %p149, %p150
      %s153 = sadd.s32 %s152, 1
      %p156 = scmp.eq.s32.totalorder %s29, 1
      %p157 = scmp.ne.s32.totalorder %s152, %s154
      %p158 = scmp.eq.s32.totalorder %s29, 0
      %p159 = por %p157, %p158
      %p160 = scmp.ne.s32.totalorder %s152, %s154
      %p161 = scmp.eq.s32.totalorder %s34, 1
      %p162 = por %p160, %p161
      %p163 = scmp.ne.s32.totalorder %s154, %s155
      %p164 = scmp.eq.s32.totalorder %s34, 0
      %p165 = por %p163, %p164
      %p166 = scmp.ne.s32.totalorder %s154, %s155
      %p167 = scmp.eq.s32.totalorder %s35, 1
      %p168 = por %p166, %p167
      %p170 = scmp.ne.s32.totalorder %s155, %s169
      %p171 = scmp.eq.s32.totalorder %s35, 0
      %p172 = por %p170, %p171
      %s174 = sadd.s32 %s173, 1
      %p177 = scmp.eq.s32.totalorder %s29, 1
      %p178 = scmp.ne.s32.totalorder %s173, %s175
      %p179 = scmp.eq.s32.totalorder %s29, 0
      %p180 = por %p178, %p179
      %p181 = scmp.ne.s32.totalorder %s173, %s175
      %p182 = scmp.eq.s32.totalorder %s34, 1
      %p183 = por %p181, %p182
      %p184 = scmp.ne.s32.totalorder %s175, %s176
      %p185 = scmp.eq.s32.totalorder %s34, 0
      %p186 = por %p184, %p185
      %p187 = scmp.ne.s32.totalorder %s175, %s176
      %p188 = scmp.eq.s32.totalorder %s35, 1
      %p189 = por %p187, %p188
      %p191 = scmp.ne.s32.totalorder %s176, %s190
      %p192 = scmp.eq.s32.totalorder %s35, 0
      %p193 = por %p191, %p192
      %s195 = sadd.s32 %s194, 1
      %p198 = scmp.eq.s32.totalorder %s29, 1
      %p199 = scmp.ne.s32.totalorder %s194, %s196
      %p200 = scmp.eq.s32.totalorder %s29, 0
      %p201 = por %p199, %p200
      %p202 = scmp.ne.s32.totalorder %s194, %s196
      %p203 = scmp.eq.s32.totalorder %s34, 1
      %p204 = por %p202, %p203
      %p205 = scmp.ne.s32.totalorder %s196, %s197
      %p206 = scmp.eq.s32.totalorder %s34, 0
      %p207 = por %p205, %p206
      %p208 = scmp.ne.s32.totalorder %s196, %s197
      %p209 = scmp.eq.s32.totalorder %s35, 1
      %p210 = por %p208, %p209
      %p212 = scmp.ne.s32.totalorder %s197, %s211
      %p213 = scmp.eq.s32.totalorder %s35, 0
      %p214 = por %p212, %p213
      %s216 = sadd.s32 %s215, 1
      %p219 = scmp.eq.s32.totalorder %s29, 1
      %p220 = scmp.ne.s32.totalorder %s215, %s217
      %p221 = scmp.eq.s32.totalorder %s29, 0
      %p222 = por %p220, %p221
      %p223 = scmp.ne.s32.totalorder %s215, %s217
      %p224 = scmp.eq.s32.totalorder %s34, 1
      %p225 = por %p223, %p224
      %p226 = scmp.ne.s32.totalorder %s217, %s218
      %p227 = scmp.eq.s32.totalorder %s34, 0
      %p228 = por %p226, %p227
      %p229 = scmp.ne.s32.totalorder %s217, %s218
      %p230 = scmp.eq.s32.totalorder %s35, 1
      %p231 = por %p229, %p230
      %p233 = scmp.ne.s32.totalorder %s218, %s232
      %p234 = scmp.eq.s32.totalorder %s35, 0
      %p235 = por %p233, %p234
      %s237 = sadd.s32 %s236, 1
      %p240 = scmp.eq.s32.totalorder %s29, 1
      %p241 = scmp.ne.s32.totalorder %s236, %s238
      %p242 = scmp.eq.s32.totalorder %s29, 0
      %p243 = por %p241, %p242
      %p244 = scmp.ne.s32.totalorder %s236, %s238
      %p245 = scmp.eq.s32.totalorder %s34, 1
      %p246 = por %p244, %p245
      %p247 = scmp.ne.s32.totalorder %s238, %s239
      %p248 = scmp.eq.s32.totalorder %s34, 0
      %p249 = por %p247, %p248
      %p250 = scmp.ne.s32.totalorder %s238, %s239
      %p251 = scmp.eq.s32.totalorder %s35, 1
      %p252 = por %p250, %p251
      %p254 = scmp.ne.s32.totalorder %s239, %s253
      %p255 = scmp.eq.s32.totalorder %s35, 0
      %p256 = por %p254, %p255
      %s258 = sadd.s32 %s257, 1
      %p261 = scmp.eq.s32.totalorder %s29, 1
      %p262 = scmp.ne.s32.totalorder %s257, %s259
      %p263 = scmp.eq.s32.totalorder %s29, 0
      %p264 = por %p262, %p263
      %p265 = scmp.ne.s32.totalorder %s257, %s259
      %p266 = scmp.eq.s32.totalorder %s34, 1
      %p267 = por %p265, %p266
      %p268 = scmp.ne.s32.totalorder %s259, %s260
      %p269 = scmp.eq.s32.totalorder %s34, 0
      %p270 = por %p268, %p269
      %p271 = scmp.ne.s32.totalorder %s259, %s260
      %p272 = scmp.eq.s32.totalorder %s35, 1
      %p273 = por %p271, %p272
      %p275 = scmp.ne.s32.totalorder %s260, %s274
      %p276 = scmp.eq.s32.totalorder %s35, 0
      %p277 = por %p275, %p276
      %s279 = sadd.s32 %s278, 1
      %p282 = scmp.eq.s32.totalorder %s29, 1
      %p283 = scmp.ne.s32.totalorder %s278, %s280
      %p284 = scmp.eq.s32.totalorder %s29, 0
      %p285 = por %p283, %p284
      %p286 = scmp.ne.s32.totalorder %s278, %s280
      %p287 = scmp.eq.s32.totalorder %s34, 1
      %p288 = por %p286, %p287
      %p289 = scmp.ne.s32.totalorder %s280, %s281
      %p290 = scmp.eq.s32.totalorder %s34, 0
      %p291 = por %p289, %p290
      %p292 = scmp.ne.s32.totalorder %s280, %s281
      %p293 = scmp.eq.s32.totalorder %s35, 1
      %p294 = por %p292, %p293
      %p296 = scmp.ne.s32.totalorder %s281, %s295
      %p297 = scmp.eq.s32.totalorder %s35, 0
      %p298 = por %p296, %p297
      %s300 = sadd.s32 %s299, 1
      %p303 = scmp.eq.s32.totalorder %s29, 1
      %p304 = scmp.ne.s32.totalorder %s299, %s301
      %p305 = scmp.eq.s32.totalorder %s29, 0
      %p306 = por %p304, %p305
      %p307 = scmp.ne.s32.totalorder %s299, %s301
      %p308 = scmp.eq.s32.totalorder %s34, 1
      %p309 = por %p307, %p308
      %p310 = scmp.ne.s32.totalorder %s301, %s302
      %p311 = scmp.eq.s32.totalorder %s34, 0
      %p312 = por %p310, %p311
      %p313 = scmp.ne.s32.totalorder %s301, %s302
      %p314 = scmp.eq.s32.totalorder %s35, 1
      %p315 = por %p313, %p314
      %p317 = scmp.ne.s32.totalorder %s302, %s316
      %p318 = scmp.eq.s32.totalorder %s35, 0
      %p319 = por %p317, %p318
      %s321 = sadd.s32 %s320, 1
      %p324 = scmp.eq.s32.totalorder %s29, 1
      %p325 = scmp.ne.s32.totalorder %s320, %s322
      %p326 = scmp.eq.s32.totalorder %s29, 0
      %p327 = por %p325, %p326
      %p328 = scmp.ne.s32.totalorder %s320, %s322
      %p329 = scmp.eq.s32.totalorder %s34, 1
      %p330 = por %p328, %p329
      %p331 = scmp.ne.s32.totalorder %s322, %s323
      %p332 = scmp.eq.s32.totalorder %s34, 0
      %p333 = por %p331, %p332
      %p334 = scmp.ne.s32.totalorder %s322, %s323
      %p335 = scmp.eq.s32.totalorder %s35, 1
      %p336 = por %p334, %p335
      %p338 = scmp.ne.s32.totalorder %s323, %s337
      %p339 = scmp.eq.s32.totalorder %s35, 0
      %p340 = por %p338, %p339
      %s341 = ssub.s32 %s29, %s36
      %p342 = scmp.eq.s32.totalorder %s341, 0
      %s344 = sadd.s32 %s343, 1
      %s345 = scalar_select %p342, %s343, %s344
      %p348 = pneg %p342
      %p349 = scmp.eq.s32.totalorder %s29, 1
      %p350 = por %p348, %p349
      %p351 = scmp.ne.s32.totalorder %s343, %s346
      %p352 = scmp.eq.s32.totalorder %s29, 0
      %p353 = por %p351, %p352
      %p354 = scmp.ne.s32.totalorder %s343, %s346
      %p355 = scmp.eq.s32.totalorder %s34, 1
      %p356 = por %p354, %p355
      %p357 = scmp.ne.s32.totalorder %s346, %s347
      %p358 = scmp.eq.s32.totalorder %s34, 0
      %p359 = por %p357, %p358
      %p360 = scmp.ne.s32.totalorder %s346, %s347
      %p361 = scmp.eq.s32.totalorder %s35, 1
      %p362 = por %p360, %p361
      %p364 = scmp.ne.s32.totalorder %s347, %s363
      %p365 = scmp.eq.s32.totalorder %s35, 0
      %p366 = por %p364, %p365
      %p367 = scmp.le.s32.totalorder 1, %s29
      %p368 = scmp.lt.s32.totalorder %s29, 3
      %p369 = pnand %p367, %p368
      %p370 = pneg %p369
      // Predicated region
      $region9: #{tpu_custom_call.1} parent=5 // pred_check
        _
      $region10: #{tpu_custom_call.1} parent=5 // pred_check_branch
        %372 = sbr.rel (%p369) target = $region12
      $region11: #{tpu_custom_call.1} parent=5 // pred_region
        %s373 = ssub.s32 %s29, 1
        // Predicated region
        $region13: #{tpu_custom_call.1} parent=11 // pred_check
          %p374 = pneg %p102
        $region14: #{tpu_custom_call.1} parent=11 // pred_check_branch
          %376 = sbr.rel (%p374) target = $region16
        $region15: #{tpu_custom_call.1} parent=11 // pred_region
          %s378 = ssub.s32 3072, 3072
          %379 = vsyncadd [#allocation6], %s378
          %s380 = sshll.u32 [#allocation5], 4
          %s381 = int_to_ptr.vmem [resolvable:$true] %s380
          %386 = dma.hbm_to_vmem [thread:$0]  %s2, 3072, %s381, [#allocation6], 192, 192, 12
        $region16: #{tpu_custom_call.1} parent=11 // pred_fallthru
          _
        // Predicated region
        $region17: #{tpu_custom_call.1} parent=11 // pred_check
          %p387 = pneg %p123
        $region18: #{tpu_custom_call.1} parent=11 // pred_check_branch
          %389 = sbr.rel (%p387) target = $region20
        $region19: #{tpu_custom_call.1} parent=11 // pred_region
          _
        $region20: #{tpu_custom_call.1} parent=11 // pred_fallthru
          _
        // Predicated region
        $region21: #{tpu_custom_call.1} parent=11 // pred_check
          %p390 = pneg %p144
        $region22: #{tpu_custom_call.1} parent=11 // pred_check_branch
          %392 = sbr.rel (%p390) target = $region24
        $region23: #{tpu_custom_call.1} parent=11 // pred_region
          %s394 = ssub.s32 1024, 1024
          %395 = vsyncadd [#allocation6], %s394
          %s396 = sshll.u32 [#allocation7], 4
          %s397 = int_to_ptr.vmem [resolvable:$true] %s396
          %402 = dma.hbm_to_vmem [thread:$0]  %s4, 1024, %s397, [#allocation6], 64, 64, 4
        $region24: #{tpu_custom_call.1} parent=11 // pred_fallthru
          _
        // Predicated region
        $region25: #{tpu_custom_call.1} parent=11 // pred_check
          %p403 = pneg %p165
        $region26: #{tpu_custom_call.1} parent=11 // pred_check_branch
          %405 = sbr.rel (%p403) target = $region28
        $region27: #{tpu_custom_call.1} parent=11 // pred_region
          _
        $region28: #{tpu_custom_call.1} parent=11 // pred_fallthru
          _
        // Predicated region
        $region29: #{tpu_custom_call.1} parent=11 // pred_check
          %p406 = pneg %p186
        $region30: #{tpu_custom_call.1} parent=11 // pred_check_branch
          %408 = sbr.rel (%p406) target = $region32
        $region31: #{tpu_custom_call.1} parent=11 // pred_region
          _
        $region32: #{tpu_custom_call.1} parent=11 // pred_fallthru
          _
        // Predicated region
        $region33: #{tpu_custom_call.1} parent=11 // pred_check
          %p409 = pneg %p207
        $region34: #{tpu_custom_call.1} parent=11 // pred_check_branch
          %411 = sbr.rel (%p409) target = $region36
        $region35: #{tpu_custom_call.1} parent=11 // pred_region
          _
        $region36: #{tpu_custom_call.1} parent=11 // pred_fallthru
          _
        // Predicated region
        $region37: #{tpu_custom_call.1} parent=11 // pred_check
          %p412 = pneg %p228
        $region38: #{tpu_custom_call.1} parent=11 // pred_check_branch
          %414 = sbr.rel (%p412) target = $region40
        $region39: #{tpu_custom_call.1} parent=11 // pred_region
          %s416 = ssub.s32 2048, 2048
          %417 = vsyncadd [#allocation9], %s416
          %s418 = sshll.u32 [#allocation8], 4
          %s419 = int_to_ptr.vmem [resolvable:$true] %s418
          %424 = dma.hbm_to_vmem [thread:$0]  %s8, 2048, %s419, [#allocation9], 128, 128, 8
        $region40: #{tpu_custom_call.1} parent=11 // pred_fallthru
          _
        // Predicated region
        $region41: #{tpu_custom_call.1} parent=11 // pred_check
          %p425 = pneg %p249
        $region42: #{tpu_custom_call.1} parent=11 // pred_check_branch
          %427 = sbr.rel (%p425) target = $region44
        $region43: #{tpu_custom_call.1} parent=11 // pred_region
          _
        $region44: #{tpu_custom_call.1} parent=11 // pred_fallthru
          _
        // Predicated region
        $region45: #{tpu_custom_call.1} parent=11 // pred_check
          %p428 = pneg %p270
        $region46: #{tpu_custom_call.1} parent=11 // pred_check_branch
          %430 = sbr.rel (%p428) target = $region48
        $region47: #{tpu_custom_call.1} parent=11 // pred_region
          %s432 = ssub.s32 4096, 4096
          %433 = vsyncadd [#allocation9], %s432
          %s434 = sshll.u32 [#allocation10], 4
          %s435 = int_to_ptr.vmem [resolvable:$true] %s434
          %440 = dma.hbm_to_vmem [thread:$0]  %s10, 4096, %s435, [#allocation9], 128, 128, 8
        $region48: #{tpu_custom_call.1} parent=11 // pred_fallthru
          _
        // Predicated region
        $region49: #{tpu_custom_call.1} parent=11 // pred_check
          %p441 = pneg %p291
        $region50: #{tpu_custom_call.1} parent=11 // pred_check_branch
          %443 = sbr.rel (%p441) target = $region52
        $region51: #{tpu_custom_call.1} parent=11 // pred_region
          _
        $region52: #{tpu_custom_call.1} parent=11 // pred_fallthru
          _
        // Predicated region
        $region53: #{tpu_custom_call.1} parent=11 // pred_check
          %p444 = pneg %p312
        $region54: #{tpu_custom_call.1} parent=11 // pred_check_branch
          %446 = sbr.rel (%p444) target = $region56
        $region55: #{tpu_custom_call.1} parent=11 // pred_region
          %s448 = ssub.s32 2048, 2048
          %449 = vsyncadd [#allocation12], %s448
          %s450 = sshll.u32 [#allocation11], 4
          %s451 = int_to_ptr.vmem [resolvable:$true] %s450
          %456 = dma.hbm_to_vmem [thread:$0]  %s12, 2048, %s451, [#allocation12], 64, 64, 4
        $region56: #{tpu_custom_call.1} parent=11 // pred_fallthru
          _
        // Predicated region
        $region57: #{tpu_custom_call.1} parent=11 // pred_check
          %p457 = pneg %p333
        $region58: #{tpu_custom_call.1} parent=11 // pred_check_branch
          %459 = sbr.rel (%p457) target = $region60
        $region59: #{tpu_custom_call.1} parent=11 // pred_region
          _
        $region60: #{tpu_custom_call.1} parent=11 // pred_fallthru
          _
      $region12: #{tpu_custom_call.1} parent=5 // pred_fallthru
        _
      %p460 = scmp.lt.s32.totalorder %s29, 2
      // Predicated region
      $region61: #{tpu_custom_call.1} parent=5 // pred_check
        %p461 = pneg %p460
      $region62: #{tpu_custom_call.1} parent=5 // pred_check_branch
        %463 = sbr.rel (%p461) target = $region64
      $region63: #{tpu_custom_call.1} parent=5 // pred_region
        // Predicated region
        $region65: #{tpu_custom_call.1} parent=63 // pred_check
          %p464 = pneg %p49
        $region66: #{tpu_custom_call.1} parent=63 // pred_check_branch
          %466 = sbr.rel (%p464) target = $region68
        $region67: #{tpu_custom_call.1} parent=63 // pred_region
          %s467 = sand.u32 %s39, 1
          %s468 = scalar_lea.sflag [#allocation3], %s467
          %s469 = sand.u32 %s39, 1
          %s470 = smul.addr %s469, 64
          %s471 = scalar_lea.vmem [#allocation2], %s470
          %s472 = smul.u32 8, %s29
          %s474 = ssub.s32 1024, 1024
          %475 = vsyncadd %s468, %s474
          %s476 = smul.addr %s472, 128
          %s477 = scalar_lea.hbm %s0, %s476
          %s478 = sshll.u32 %s471, 4
          %s479 = int_to_ptr.vmem [resolvable:$true] %s478
          %484 = dma.hbm_to_vmem [thread:$0]  %s477, 1024, %s479, %s468, 128, 128, 8
        $region68: #{tpu_custom_call.1} parent=63 // pred_fallthru
          _
        // Predicated region
        $region69: #{tpu_custom_call.1} parent=63 // pred_check
          %p485 = pneg %p75
        $region70: #{tpu_custom_call.1} parent=63 // pred_check_branch
          %487 = sbr.rel (%p485) target = $region72
        $region71: #{tpu_custom_call.1} parent=63 // pred_region
          %s488 = smul.u32 16, %s29
          %p489 = scmp.lt.s32.totalorder %s488, 31
          %s490 = scalar_select %p489, %s488, 31
          %s491 = scalar_lea.vmem %s1, %s490
          %s492 = smul.u32 16, %s29
        $region72: #{tpu_custom_call.1} parent=63 // pred_fallthru
          _
      $region64: #{tpu_custom_call.1} parent=5 // pred_fallthru
        _
      %p493 = scmp.le.s32.totalorder 1, %s29
      %p494 = scmp.lt.s32.totalorder %s29, 3
      %p495 = pnand %p493, %p494
      %p496 = pneg %p495
      // Predicated region
      $region73: #{tpu_custom_call.1} parent=5 // pred_check
        _
      $region74: #{tpu_custom_call.1} parent=5 // pred_check_branch
        %498 = sbr.rel (%p495) target = $region76
      $region75: #{tpu_custom_call.1} parent=5 // pred_region
        %s499 = ssub.s32 %s29, 1
        %s500 = sand.u32 %s42, 1
        %s501 = scalar_lea.sflag [#allocation3], %s500
        %s502 = sand.u32 %s42, 1
        %s503 = smul.addr %s502, 64
        %s504 = scalar_lea.vmem [#allocation2], %s503
        // Predicated region
        $region77: #{tpu_custom_call.1} parent=75 // pred_check
          %p505 = pneg %p55
        $region78: #{tpu_custom_call.1} parent=75 // pred_check_branch
          %507 = sbr.rel (%p505) target = $region80
        $region79: #{tpu_custom_call.1} parent=75 // pred_region
          %508 = dma.done %s501, 1024
        $region80: #{tpu_custom_call.1} parent=75 // pred_fallthru
          _
        // Predicated region
        $region81: #{tpu_custom_call.1} parent=75 // pred_check
          %p509 = pneg %p102
        $region82: #{tpu_custom_call.1} parent=75 // pred_check_branch
          %511 = sbr.rel (%p509) target = $region84
        $region83: #{tpu_custom_call.1} parent=75 // pred_region
          %512 = dma.done [#allocation6], 3072
        $region84: #{tpu_custom_call.1} parent=75 // pred_fallthru
          _
        // Predicated region
        $region85: #{tpu_custom_call.1} parent=75 // pred_check
          %p513 = pneg %p144
        $region86: #{tpu_custom_call.1} parent=75 // pred_check_branch
          %515 = sbr.rel (%p513) target = $region88
        $region87: #{tpu_custom_call.1} parent=75 // pred_region
          %516 = dma.done [#allocation6], 1024
        $region88: #{tpu_custom_call.1} parent=75 // pred_fallthru
          _
        // Predicated region
        $region89: #{tpu_custom_call.1} parent=75 // pred_check
          %p517 = pneg %p228
        $region90: #{tpu_custom_call.1} parent=75 // pred_check_branch
          %519 = sbr.rel (%p517) target = $region92
        $region91: #{tpu_custom_call.1} parent=75 // pred_region
          %520 = dma.done [#allocation9], 2048
        $region92: #{tpu_custom_call.1} parent=75 // pred_fallthru
          _
        // Predicated region
        $region93: #{tpu_custom_call.1} parent=75 // pred_check
          %p521 = pneg %p270
        $region94: #{tpu_custom_call.1} parent=75 // pred_check_branch
          %523 = sbr.rel (%p521) target = $region96
        $region95: #{tpu_custom_call.1} parent=75 // pred_region
          %524 = dma.done [#allocation9], 4096
        $region96: #{tpu_custom_call.1} parent=75 // pred_fallthru
          _
        // Predicated region
        $region97: #{tpu_custom_call.1} parent=75 // pred_check
          %p525 = pneg %p312
        $region98: #{tpu_custom_call.1} parent=75 // pred_check_branch
          %527 = sbr.rel (%p525) target = $region100
        $region99: #{tpu_custom_call.1} parent=75 // pred_region
          %528 = dma.done [#allocation12], 2048
        $region100: #{tpu_custom_call.1} parent=75 // pred_fallthru
          _
        %s529 = sand.u32 %s42, 1
        %s530 = scalar_lea.sflag [#allocation3], %s529
        %s531 = sand.u32 %s42, 1
        %s532 = smul.addr %s531, 64
        %s533 = scalar_lea.vmem [#allocation2], %s532
        %p534 = pneg %p55
        %p535 = pneg %p52
        %s536 = smul.u32 16, %s34
        %p537 = scmp.lt.s32.totalorder %s536, 31
        %s538 = scalar_select %p537, %s536, 31
        %s539 = scalar_lea.vmem %s1, %s538
        %p540 = pneg %p81
        %p541 = pneg %p78
        %p542 = pneg %p102
        %p543 = pneg %p99
        %p544 = pneg %p123
        %p545 = pneg %p120
        %p546 = pneg %p144
        %p547 = pneg %p141
        %p548 = pneg %p165
        %p549 = pneg %p162
        %p550 = pneg %p186
        %p551 = pneg %p183
        %p552 = pneg %p207
        %p553 = pneg %p204
        %p554 = pneg %p228
        %p555 = pneg %p225
        %p556 = pneg %p249
        %p557 = pneg %p246
        %p558 = pneg %p270
        %p559 = pneg %p267
        %p560 = pneg %p291
        %p561 = pneg %p288
        %p562 = pneg %p312
        %p563 = pneg %p309
        %p564 = pneg %p333
        %p565 = pneg %p330
        %p566 = pneg %p359
        %p567 = pneg %p356
        %s568 = sand.u32 %s346, 1
        %s569 = scalar_lea.sflag [#allocation4], %s568
        %s570 = sand.u32 %s346, 1
        %s571 = smul.addr %s570, 64
        %s572 = scalar_lea.vmem [#allocation13], %s571
        %s573 = smul.u32 8, %s34
        %s574 = smul.u32 16, %s34
        %p575 = scmp.lt.s32.totalorder %s574, 31
        %s576 = scalar_select %p575, %s574, 31
        %s577 = scalar_lea.vmem %s1, %s576
        %s578 = smul.u32 16, %s34
        %s579 = smul.u32 8, %s34
        %v581 = vld [vmem:[%s504] sm:$0xff]
        %v582 = vld [vmem:[%s504 + $0x8] sm:$0xff]
        %v583 = vld [vmem:[%s504 + $0x10] sm:$0xff]
        %v584 = vld [vmem:[%s504 + $0x18] sm:$0xff]
        %v585 = vld [vmem:[%s504 + $0x20] sm:$0xff]
        %v586 = vld [vmem:[%s504 + $0x28] sm:$0xff]
        %v587 = vld [vmem:[%s504 + $0x30] sm:$0xff]
        %v588 = vld [vmem:[%s504 + $0x38] sm:$0xff]
        %v589 = vpack.c.bf16 %v582, %v581
        %v590 = vpack.c.bf16 %v584, %v583
        %v591 = vpack.c.bf16 %v586, %v585
        %v592 = vpack.c.bf16 %v588, %v587
        %v593 = vld [vmem:[#allocation5] sm:$0xff]
        %v594 = vld [vmem:[#allocation5 + $0x8] sm:$0xf]
        %v595 = vld [vmem:[#allocation5 + $0xc] sm:$0xff]
        %v596 = vld [vmem:[#allocation5 + $0x14] sm:$0xf]
        %v597 = vld [vmem:[#allocation5 + $0x18] sm:$0xff]
        %v598 = vld [vmem:[#allocation5 + $0x20] sm:$0xf]
        %v599 = vld [vmem:[#allocation5 + $0x24] sm:$0xff]
        %v600 = vld [vmem:[#allocation5 + $0x2c] sm:$0xf]
        %v601 = vld [vmem:[#allocation5 + $0x30] sm:$0xff]
        %v602 = vld [vmem:[#allocation5 + $0x38] sm:$0xf]
        %v603 = vld [vmem:[#allocation5 + $0x3c] sm:$0xff]
        %v604 = vld [vmem:[#allocation5 + $0x44] sm:$0xf]
        %v605 = vld [vmem:[#allocation5 + $0x48] sm:$0xff]
        %v606 = vld [vmem:[#allocation5 + $0x50] sm:$0xf]
        %v607 = vld [vmem:[#allocation5 + $0x54] sm:$0xff]
        %v608 = vld [vmem:[#allocation5 + $0x5c] sm:$0xf]
        %v609 = vld [vmem:[#allocation5 + $0x60] sm:$0xff]
        %v610 = vld [vmem:[#allocation5 + $0x68] sm:$0xf]
        %v611 = vld [vmem:[#allocation5 + $0x6c] sm:$0xff]
        %v612 = vld [vmem:[#allocation5 + $0x74] sm:$0xf]
        %v613 = vld [vmem:[#allocation5 + $0x78] sm:$0xff]
        %v614 = vld [vmem:[#allocation5 + $0x80] sm:$0xf]
        %v615 = vld [vmem:[#allocation5 + $0x84] sm:$0xff]
        %v616 = vld [vmem:[#allocation5 + $0x8c] sm:$0xf]
        %v617 = vld [vmem:[#allocation5 + $0x90] sm:$0xff]
        %v618 = vld [vmem:[#allocation5 + $0x98] sm:$0xf]
        %v619 = vld [vmem:[#allocation5 + $0x9c] sm:$0xff]
        %v620 = vld [vmem:[#allocation5 + $0xa4] sm:$0xf]
        %v621 = vld [vmem:[#allocation5 + $0xa8] sm:$0xff]
        %v622 = vld [vmem:[#allocation5 + $0xb0] sm:$0xf]
        %v623 = vld [vmem:[#allocation5 + $0xb4] sm:$0xff]
        %v624 = vld [vmem:[#allocation5 + $0xbc] sm:$0xf]
        %v625 = vld [vmem:[%s3] sm:$0x7]
        %v627 = vlaneseq
        %v628 = vshrl.u32 %v627, 7
        %v629 = vsub.s32 0, %v628
        %v630 = vrot.slane %v625, %v629
        %v631 = vlaneseq
        %v632 = vshrl.u32 %v631, 7
        %v633 = vsub.s32 1, %v632
        %v634 = vrot.slane %v625, %v633
        %v635 = vlaneseq
        %v636 = vshrl.u32 %v635, 7
        %v637 = vsub.s32 2, %v636
        %v638 = vrot.slane %v625, %v637
        %v674 = vunpack.c.l.b16 %v593
        %v675 = vunpack.c.h.b16 %v593
        %v676 = vunpack.c.l.b16 %v594
        %v677 = vunpack.c.l.b16 %v595
        %v678 = vunpack.c.h.b16 %v595
        %v679 = vunpack.c.l.b16 %v596
        %v680 = vunpack.c.l.b16 %v597
        %v681 = vunpack.c.h.b16 %v597
        %v682 = vunpack.c.l.b16 %v598
        %v683 = vunpack.c.l.b16 %v599
        %v684 = vunpack.c.h.b16 %v599
        %v685 = vunpack.c.l.b16 %v600
        %v686 = vunpack.c.l.b16 %v601
        %v687 = vunpack.c.h.b16 %v601
        %v688 = vunpack.c.l.b16 %v602
        %v689 = vunpack.c.l.b16 %v603
        %v690 = vunpack.c.h.b16 %v603
        %v691 = vunpack.c.l.b16 %v604
        %v692 = vunpack.c.l.b16 %v605
        %v693 = vunpack.c.h.b16 %v605
        %v694 = vunpack.c.l.b16 %v606
        %v695 = vunpack.c.l.b16 %v607
        %v696 = vunpack.c.h.b16 %v607
        %v697 = vunpack.c.l.b16 %v608
        %v698 = vunpack.c.l.b16 %v609
        %v699 = vunpack.c.h.b16 %v609
        %v700 = vunpack.c.l.b16 %v610
        %v701 = vunpack.c.l.b16 %v611
        %v702 = vunpack.c.h.b16 %v611
        %v703 = vunpack.c.l.b16 %v612
        %v704 = vunpack.c.l.b16 %v613
        %v705 = vunpack.c.h.b16 %v613
        %v706 = vunpack.c.l.b16 %v614
        %v707 = vunpack.c.l.b16 %v615
        %v708 = vunpack.c.h.b16 %v615
        %v709 = vunpack.c.l.b16 %v616
        %v710 = vunpack.c.l.b16 %v617
        %v711 = vunpack.c.h.b16 %v617
        %v712 = vunpack.c.l.b16 %v618
        %v713 = vunpack.c.l.b16 %v619
        %v714 = vunpack.c.h.b16 %v619
        %v715 = vunpack.c.l.b16 %v620
        %v716 = vunpack.c.l.b16 %v621
        %v717 = vunpack.c.h.b16 %v621
        %v718 = vunpack.c.l.b16 %v622
        %v719 = vunpack.c.l.b16 %v623
        %v720 = vunpack.c.h.b16 %v623
        %v721 = vunpack.c.l.b16 %v624
        %v722 = vpack.c.b16 %v677, %v674
        %v723 = vpack.c.b16 %v678, %v675
        %v724 = vpack.c.b16 %v679, %v676
        %v725 = vpack.c.b16 %v683, %v680
        %v726 = vpack.c.b16 %v684, %v681
        %v727 = vpack.c.b16 %v685, %v682
        %v728 = vpack.c.b16 %v689, %v686
        %v729 = vpack.c.b16 %v690, %v687
        %v730 = vpack.c.b16 %v691, %v688
        %v731 = vpack.c.b16 %v695, %v692
        %v732 = vpack.c.b16 %v696, %v693
        %v733 = vpack.c.b16 %v697, %v694
        %v734 = vpack.c.b16 %v701, %v698
        %v735 = vpack.c.b16 %v702, %v699
        %v736 = vpack.c.b16 %v703, %v700
        %v737 = vpack.c.b16 %v707, %v704
        %v738 = vpack.c.b16 %v708, %v705
        %v739 = vpack.c.b16 %v709, %v706
        %v740 = vpack.c.b16 %v713, %v710
        %v741 = vpack.c.b16 %v714, %v711
        %v742 = vpack.c.b16 %v715, %v712
        %v743 = vpack.c.b16 %v719, %v716
        %v744 = vpack.c.b16 %v720, %v717
        %v745 = vpack.c.b16 %v721, %v718
        %770 = vmatprep.subr.bf16.mxu0 %v744
        %771 = vmatpush1.bf16.msra.mxu0 %v743
        %772 = vmatprep.subr.bf16.mxu0 %v741
        %773 = vmatpush1.bf16.msra.mxu0 %v740
        %774 = vmatprep.subr.bf16.mxu0 %v738
        %775 = vmatpush1.bf16.msra.mxu0 %v737
        %776 = vmatprep.subr.bf16.mxu0 %v735
        %777 = vmatpush1.bf16.msra.mxu0 %v734
        %778 = vmatprep.subr.bf16.mxu0 %v732
        %779 = vmatpush1.bf16.msra.mxu0 %v731
        %780 = vmatprep.subr.bf16.mxu0 %v729
        %781 = vmatpush1.bf16.msra.mxu0 %v728
        %782 = vmatprep.subr.bf16.mxu0 %v726
        %783 = vmatpush1.bf16.msra.mxu0 %v725
        %784 = vmatprep.subr.bf16.mxu0 %v723
        %785 = vmatpush1.bf16.msra.mxu0 %v722
        %786 = vmatprep.subr.bf16.mxu0 0
        %787 = vmatpush2.bf16.msra.mxu0 0
        %788 = vmatprep.subr.bf16.mxu0 0
        %789 = vmatpush2.bf16.msra.mxu0 0
        %790 = vmatprep.subr.bf16.mxu0 0
        %791 = vmatpush2.bf16.msra.mxu0 0
        %792 = vmatprep.subr.bf16.mxu0 0
        %793 = vmatpush2.bf16.msra.mxu0 0
        %794 = vmatprep.subr.bf16.mxu0 0
        %795 = vmatpush2.bf16.msra.mxu0 0
        %796 = vmatprep.subr.bf16.mxu0 0
        %797 = vmatpush2.bf16.msra.mxu0 0
        %798 = vmatprep.subr.bf16.mxu0 0
        %799 = vmatpush2.bf16.msra.mxu0 0
        %800 = vmatprep.subr.bf16.mxu0 0
        %801 = vmatpush2.bf16.msra.mxu0 0
        %802 = vmatprep.mubr.bf16.mxu0 0
        %803 = vmatmul.mubr.bf16.gmra.mxu0 %v589
        %v804 = vpop.f32.mrf.mxu0
        %v805 = vadd.f32 %v630, %v804
        %v806 = vpop.f32.mrf.mxu0
        %v807 = vadd.f32 %v634, %v806
        %v808 = vpop.f32.mrf.mxu0
        %v809 = vadd.f32 %v630, %v808
        %v810 = vpop.f32.mrf.mxu0
        %v811 = vadd.f32 %v634, %v810
        %812 = vmatprep.mubr.bf16.mxu0 0
        %813 = vmatmul.mubr.bf16.gmra.mxu0 %v590
        %v814 = vpop.f32.mrf.mxu0
        %v815 = vadd.f32 %v630, %v814
        %v816 = vpop.f32.mrf.mxu0
        %v817 = vadd.f32 %v634, %v816
        %v818 = vpop.f32.mrf.mxu0
        %v819 = vadd.f32 %v630, %v818
        %v820 = vpop.f32.mrf.mxu0
        %v821 = vadd.f32 %v634, %v820
        %822 = vmatprep.mubr.bf16.mxu0 0
        %823 = vmatmul.mubr.bf16.gmra.mxu0 %v591
        %v824 = vpop.f32.mrf.mxu0
        %v825 = vadd.f32 %v630, %v824
        %v826 = vpop.f32.mrf.mxu0
        %v827 = vadd.f32 %v634, %v826
        %v828 = vpop.f32.mrf.mxu0
        %v829 = vadd.f32 %v630, %v828
        %v830 = vpop.f32.mrf.mxu0
        %v831 = vadd.f32 %v634, %v830
        %832 = vmatprep.mubr.bf16.mxu0 0
        %833 = vmatmul.mubr.bf16.gmra.mxu0 %v592
        %v834 = vpop.f32.mrf.mxu0
        %v835 = vadd.f32 %v630, %v834
        %v836 = vpop.f32.mrf.mxu0
        %v837 = vadd.f32 %v634, %v836
        %v838 = vpop.f32.mrf.mxu0
        %v839 = vadd.f32 %v630, %v838
        %v840 = vpop.f32.mrf.mxu0
        %v841 = vadd.f32 %v634, %v840
        %842 = vdwg.mxu0
        %843 = vmatprep.subr.bf16.mxu0 0
        %844 = vmatpush1.bf16.msra.mxu0 %v745
        %845 = vmatprep.subr.bf16.mxu0 0
        %846 = vmatpush1.bf16.msra.mxu0 %v742
        %847 = vmatprep.subr.bf16.mxu0 0
        %848 = vmatpush1.bf16.msra.mxu0 %v739
        %849 = vmatprep.subr.bf16.mxu0 0
        %850 = vmatpush1.bf16.msra.mxu0 %v736
        %851 = vmatprep.subr.bf16.mxu0 0
        %852 = vmatpush1.bf16.msra.mxu0 %v733
        %853 = vmatprep.subr.bf16.mxu0 0
        %854 = vmatpush1.bf16.msra.mxu0 %v730
        %855 = vmatprep.subr.bf16.mxu0 0
        %856 = vmatpush1.bf16.msra.mxu0 %v727
        %857 = vmatprep.subr.bf16.mxu0 0
        %858 = vmatpush1.bf16.msra.mxu0 %v724
        %859 = vmatprep.subr.bf16.mxu0 0
        %860 = vmatpush2.bf16.msra.mxu0 0
        %861 = vmatprep.subr.bf16.mxu0 0
        %862 = vmatpush2.bf16.msra.mxu0 0
        %863 = vmatprep.subr.bf16.mxu0 0
        %864 = vmatpush2.bf16.msra.mxu0 0
        %865 = vmatprep.subr.bf16.mxu0 0
        %866 = vmatpush2.bf16.msra.mxu0 0
        %867 = vmatprep.subr.bf16.mxu0 0
        %868 = vmatpush2.bf16.msra.mxu0 0
        %869 = vmatprep.subr.bf16.mxu0 0
        %870 = vmatpush2.bf16.msra.mxu0 0
        %871 = vmatprep.subr.bf16.mxu0 0
        %872 = vmatpush2.bf16.msra.mxu0 0
        %873 = vmatprep.subr.bf16.mxu0 0
        %874 = vmatpush2.bf16.msra.mxu0 0
        %875 = vmatprep.mubr.bf16.mxu0 0
        %876 = vmatmul.mubr.bf16.gmra.mxu0 %v589
        %v877 = vpop.f32.mrf.mxu0
        %v878 = vadd.f32 %v638, %v877
        %v879 = vpop.f32.mrf.mxu0
        %v880 = vpop.f32.mrf.mxu0
        %v881 = vadd.f32 %v638, %v880
        %v882 = vpop.f32.mrf.mxu0
        %883 = vmatprep.mubr.bf16.mxu0 0
        %884 = vmatmul.mubr.bf16.gmra.mxu0 %v590
        %v885 = vpop.f32.mrf.mxu0
        %v886 = vadd.f32 %v638, %v885
        %v887 = vpop.f32.mrf.mxu0
        %v888 = vpop.f32.mrf.mxu0
        %v889 = vadd.f32 %v638, %v888
        %v890 = vpop.f32.mrf.mxu0
        %891 = vmatprep.mubr.bf16.mxu0 0
        %892 = vmatmul.mubr.bf16.gmra.mxu0 %v591
        %v893 = vpop.f32.mrf.mxu0
        %v894 = vadd.f32 %v638, %v893
        %v895 = vpop.f32.mrf.mxu0
        %v896 = vpop.f32.mrf.mxu0
        %v897 = vadd.f32 %v638, %v896
        %v898 = vpop.f32.mrf.mxu0
        %899 = vmatprep.mubr.bf16.mxu0 0
        %900 = vmatmul.mubr.bf16.gmra.mxu0 %v592
        %v901 = vpop.f32.mrf.mxu0
        %v902 = vadd.f32 %v638, %v901
        %v903 = vpop.f32.mrf.mxu0
        %v904 = vpop.f32.mrf.mxu0
        %v905 = vadd.f32 %v638, %v904
        %v906 = vpop.f32.mrf.mxu0
        %907 = vdwg.mxu0
        %v908 = vpack.c.bf16 %v809, %v805
        %v909 = vpack.c.bf16 %v811, %v807
        %v910 = vpack.c.bf16 %v881, %v878
        %v911 = vpack.c.bf16 %v819, %v815
        %v912 = vpack.c.bf16 %v821, %v817
        %v913 = vpack.c.bf16 %v889, %v886
        %v914 = vpack.c.bf16 %v829, %v825
        %v915 = vpack.c.bf16 %v831, %v827
        %v916 = vpack.c.bf16 %v897, %v894
        %v917 = vpack.c.bf16 %v839, %v835
        %v918 = vpack.c.bf16 %v841, %v837
        %v919 = vpack.c.bf16 %v905, %v902
        %920 = vxpose.xlu0.c.b16.start [1/8] %v908, 128
        %921 = vxpose.xlu0.c.b16.cont [2/8] 0, 128
        %922 = vxpose.xlu0.c.b16.cont [3/8] 0, 128
        %923 = vxpose.xlu0.c.b16.cont [4/8] 0, 128
        %924 = vxpose.xlu0.c.b16.cont [5/8] 0, 128
        %925 = vxpose.xlu0.c.b16.cont [6/8] 0, 128
        %926 = vxpose.xlu0.c.b16.cont [7/8] 0, 128
        %927 = vxpose.xlu0.c.b16.end [8/8] 0, 128
        %v928 = vpop.trf.xlu0
        %v929 = vpop.trf.xlu0
        %v930 = vpop.trf.xlu0
        %v931 = vpop.trf.xlu0
        %v932 = vpop.trf.xlu0
        %v933 = vpop.trf.xlu0
        %v934 = vpop.trf.xlu0
        %v935 = vpop.trf.xlu0
        %936 = vxpose.xlu0.c.b16.start [1/8] %v911, 128
        %937 = vxpose.xlu0.c.b16.cont [2/8] 0, 128
        %938 = vxpose.xlu0.c.b16.cont [3/8] 0, 128
        %939 = vxpose.xlu0.c.b16.cont [4/8] 0, 128
        %940 = vxpose.xlu0.c.b16.cont [5/8] 0, 128
        %941 = vxpose.xlu0.c.b16.cont [6/8] 0, 128
        %942 = vxpose.xlu0.c.b16.cont [7/8] 0, 128
        %943 = vxpose.xlu0.c.b16.end [8/8] 0, 128
        %v944 = vpop.trf.xlu0
        %v945 = vpop.trf.xlu0
        %v946 = vpop.trf.xlu0
        %v947 = vpop.trf.xlu0
        %v948 = vpop.trf.xlu0
        %v949 = vpop.trf.xlu0
        %v950 = vpop.trf.xlu0
        %v951 = vpop.trf.xlu0
        %952 = vxpose.xlu0.c.b16.start [1/8] %v914, 128
        %953 = vxpose.xlu0.c.b16.cont [2/8] 0, 128
        %954 = vxpose.xlu0.c.b16.cont [3/8] 0, 128
        %955 = vxpose.xlu0.c.b16.cont [4/8] 0, 128
        %956 = vxpose.xlu0.c.b16.cont [5/8] 0, 128
        %957 = vxpose.xlu0.c.b16.cont [6/8] 0, 128
        %958 = vxpose.xlu0.c.b16.cont [7/8] 0, 128
        %959 = vxpose.xlu0.c.b16.end [8/8] 0, 128
        %v960 = vpop.trf.xlu0
        %v961 = vpop.trf.xlu0
        %v962 = vpop.trf.xlu0
        %v963 = vpop.trf.xlu0
        %v964 = vpop.trf.xlu0
        %v965 = vpop.trf.xlu0
        %v966 = vpop.trf.xlu0
        %v967 = vpop.trf.xlu0
        %968 = vxpose.xlu0.c.b16.start [1/8] %v917, 128
        %969 = vxpose.xlu0.c.b16.cont [2/8] 0, 128
        %970 = vxpose.xlu0.c.b16.cont [3/8] 0, 128
        %971 = vxpose.xlu0.c.b16.cont [4/8] 0, 128
        %972 = vxpose.xlu0.c.b16.cont [5/8] 0, 128
        %973 = vxpose.xlu0.c.b16.cont [6/8] 0, 128
        %974 = vxpose.xlu0.c.b16.cont [7/8] 0, 128
        %975 = vxpose.xlu0.c.b16.end [8/8] 0, 128
        %v976 = vpop.trf.xlu0
        %v977 = vpop.trf.xlu0
        %v978 = vpop.trf.xlu0
        %v979 = vpop.trf.xlu0
        %v980 = vpop.trf.xlu0
        %v981 = vpop.trf.xlu0
        %v982 = vpop.trf.xlu0
        %v983 = vpop.trf.xlu0
        %984 = vxpose.xlu0.c.b16.start [1/8] %v928, 128
        %985 = vxpose.xlu0.c.b16.cont [2/8] %v929, 128
        %986 = vxpose.xlu0.c.b16.cont [3/8] 0, 128
        %987 = vxpose.xlu0.c.b16.cont [4/8] 0, 128
        %988 = vxpose.xlu0.c.b16.cont [5/8] 0, 128
        %989 = vxpose.xlu0.c.b16.cont [6/8] 0, 128
        %990 = vxpose.xlu0.c.b16.cont [7/8] 0, 128
        %991 = vxpose.xlu0.c.b16.end [8/8] 0, 128
        %v992 = vpop.trf.xlu0
        %v993 = vpop.trf.xlu0
        %v994 = vpop.trf.xlu0
        %v995 = vpop.trf.xlu0
        %v996 = vpop.trf.xlu0
        %v997 = vpop.trf.xlu0
        %v998 = vpop.trf.xlu0
        %v999 = vpop.trf.xlu0
        %1000 = vxpose.xlu0.c.b16.start [1/8] %v930, 128
        %1001 = vxpose.xlu0.c.b16.cont [2/8] %v931, 128
        %1002 = vxpose.xlu0.c.b16.cont [3/8] 0, 128
        %1003 = vxpose.xlu0.c.b16.cont [4/8] 0, 128
        %1004 = vxpose.xlu0.c.b16.cont [5/8] 0, 128
        %1005 = vxpose.xlu0.c.b16.cont [6/8] 0, 128
        %1006 = vxpose.xlu0.c.b16.cont [7/8] 0, 128
        %1007 = vxpose.xlu0.c.b16.end [8/8] 0, 128
        %v1008 = vpop.trf.xlu0
        %v1009 = vpop.trf.xlu0
        %v1010 = vpop.trf.xlu0
        %v1011 = vpop.trf.xlu0
        %v1012 = vpop.trf.xlu0
        %v1013 = vpop.trf.xlu0
        %v1014 = vpop.trf.xlu0
        %v1015 = vpop.trf.xlu0
        %1016 = vxpose.xlu0.c.b16.start [1/8] %v932, 128
        %1017 = vxpose.xlu0.c.b16.cont [2/8] %v933, 128
        %1018 = vxpose.xlu0.c.b16.cont [3/8] 0, 128
        %1019 = vxpose.xlu0.c.b16.cont [4/8] 0, 128
        %1020 = vxpose.xlu0.c.b16.cont [5/8] 0, 128
        %1021 = vxpose.xlu0.c.b16.cont [6/8] 0, 128
        %1022 = vxpose.xlu0.c.b16.cont [7/8] 0, 128
        %1023 = vxpose.xlu0.c.b16.end [8/8] 0, 128
        %v1024 = vpop.trf.xlu0
        %v1025 = vpop.trf.xlu0
        %v1026 = vpop.trf.xlu0
        %v1027 = vpop.trf.xlu0
        %v1028 = vpop.trf.xlu0
        %v1029 = vpop.trf.xlu0
        %v1030 = vpop.trf.xlu0
        %v1031 = vpop.trf.xlu0
        %1032 = vxpose.xlu0.c.b16.start [1/8] %v934, 128
        %1033 = vxpose.xlu0.c.b16.cont [2/8] %v935, 128
        %1034 = vxpose.xlu0.c.b16.cont [3/8] 0, 128
        %1035 = vxpose.xlu0.c.b16.cont [4/8] 0, 128
        %1036 = vxpose.xlu0.c.b16.cont [5/8] 0, 128
        %1037 = vxpose.xlu0.c.b16.cont [6/8] 0, 128
        %1038 = vxpose.xlu0.c.b16.cont [7/8] 0, 128
        %1039 = vxpose.xlu0.c.b16.end [8/8] 0, 128
        %v1040 = vpop.trf.xlu0
        %v1041 = vpop.trf.xlu0
        %v1042 = vpop.trf.xlu0
        %v1043 = vpop.trf.xlu0
        %v1044 = vpop.trf.xlu0
        %v1045 = vpop.trf.xlu0
        %v1046 = vpop.trf.xlu0
        %v1047 = vpop.trf.xlu0
        %1048 = vxpose.xlu0.c.b16.start [1/8] %v944, 128
        %1049 = vxpose.xlu0.c.b16.cont [2/8] %v945, 128
        %1050 = vxpose.xlu0.c.b16.cont [3/8] 0, 128
        %1051 = vxpose.xlu0.c.b16.cont [4/8] 0, 128
        %1052 = vxpose.xlu0.c.b16.cont [5/8] 0, 128
        %1053 = vxpose.xlu0.c.b16.cont [6/8] 0, 128
        %1054 = vxpose.xlu0.c.b16.cont [7/8] 0, 128
        %1055 = vxpose.xlu0.c.b16.end [8/8] 0, 128
        %v1056 = vpop.trf.xlu0
        %v1057 = vpop.trf.xlu0
        %v1058 = vpop.trf.xlu0
        %v1059 = vpop.trf.xlu0
        %v1060 = vpop.trf.xlu0
        %v1061 = vpop.trf.xlu0
        %v1062 = vpop.trf.xlu0
        %v1063 = vpop.trf.xlu0
        %1064 = vxpose.xlu0.c.b16.start [1/8] %v946, 128
        %1065 = vxpose.xlu0.c.b16.cont [2/8] %v947, 128
        %1066 = vxpose.xlu0.c.b16.cont [3/8] 0, 128
        %1067 = vxpose.xlu0.c.b16.cont [4/8] 0, 128
        %1068 = vxpose.xlu0.c.b16.cont [5/8] 0, 128
        %1069 = vxpose.xlu0.c.b16.cont [6/8] 0, 128
        %1070 = vxpose.xlu0.c.b16.cont [7/8] 0, 128
        %1071 = vxpose.xlu0.c.b16.end [8/8] 0, 128
        %v1072 = vpop.trf.xlu0
        %v1073 = vpop.trf.xlu0
        %v1074 = vpop.trf.xlu0
        %v1075 = vpop.trf.xlu0
        %v1076 = vpop.trf.xlu0
        %v1077 = vpop.trf.xlu0
        %v1078 = vpop.trf.xlu0
        %v1079 = vpop.trf.xlu0
        %1080 = vxpose.xlu0.c.b16.start [1/8] %v948, 128
        %1081 = vxpose.xlu0.c.b16.cont [2/8] %v949, 128
        %1082 = vxpose.xlu0.c.b16.cont [3/8] 0, 128
        %1083 = vxpose.xlu0.c.b16.cont [4/8] 0, 128
        %1084 = vxpose.xlu0.c.b16.cont [5/8] 0, 128
        %1085 = vxpose.xlu0.c.b16.cont [6/8] 0, 128
        %1086 = vxpose.xlu0.c.b16.cont [7/8] 0, 128
        %1087 = vxpose.xlu0.c.b16.end [8/8] 0, 128
        %v1088 = vpop.trf.xlu0
        %v1089 = vpop.trf.xlu0
        %v1090 = vpop.trf.xlu0
        %v1091 = vpop.trf.xlu0
        %v1092 = vpop.trf.xlu0
        %v1093 = vpop.trf.xlu0
        %v1094 = vpop.trf.xlu0
        %v1095 = vpop.trf.xlu0
        %1096 = vxpose.xlu0.c.b16.start [1/8] %v950, 128
        %1097 = vxpose.xlu0.c.b16.cont [2/8] %v951, 128
        %1098 = vxpose.xlu0.c.b16.cont [3/8] 0, 128
        %1099 = vxpose.xlu0.c.b16.cont [4/8] 0, 128
        %1100 = vxpose.xlu0.c.b16.cont [5/8] 0, 128
        %1101 = vxpose.xlu0.c.b16.cont [6/8] 0, 128
        %1102 = vxpose.xlu0.c.b16.cont [7/8] 0, 128
        %1103 = vxpose.xlu0.c.b16.end [8/8] 0, 128
        %v1104 = vpop.trf.xlu0
        %v1105 = vpop.trf.xlu0
        %v1106 = vpop.trf.xlu0
        %v1107 = vpop.trf.xlu0
        %v1108 = vpop.trf.xlu0
        %v1109 = vpop.trf.xlu0
        %v1110 = vpop.trf.xlu0
        %v1111 = vpop.trf.xlu0
        %1112 = vxpose.xlu0.c.b16.start [1/8] %v960, 128
        %1113 = vxpose.xlu0.c.b16.cont [2/8] %v961, 128
        %1114 = vxpose.xlu0.c.b16.cont [3/8] 0, 128
        %1115 = vxpose.xlu0.c.b16.cont [4/8] 0, 128
        %1116 = vxpose.xlu0.c.b16.cont [5/8] 0, 128
        %1117 = vxpose.xlu0.c.b16.cont [6/8] 0, 128
        %1118 = vxpose.xlu0.c.b16.cont [7/8] 0, 128
        %1119 = vxpose.xlu0.c.b16.end [8/8] 0, 128
        %v1120 = vpop.trf.xlu0
        %v1121 = vpop.trf.xlu0
        %v1122 = vpop.trf.xlu0
        %v1123 = vpop.trf.xlu0
        %v1124 = vpop.trf.xlu0
        %v1125 = vpop.trf.xlu0
        %v1126 = vpop.trf.xlu0
        %v1127 = vpop.trf.xlu0
        %1128 = vxpose.xlu0.c.b16.start [1/8] %v962, 128
        %1129 = vxpose.xlu0.c.b16.cont [2/8] %v963, 128
        %1130 = vxpose.xlu0.c.b16.cont [3/8] 0, 128
        %1131 = vxpose.xlu0.c.b16.cont [4/8] 0, 128
        %1132 = vxpose.xlu0.c.b16.cont [5/8] 0, 128
        %1133 = vxpose.xlu0.c.b16.cont [6/8] 0, 128
        %1134 = vxpose.xlu0.c.b16.cont [7/8] 0, 128
        %1135 = vxpose.xlu0.c.b16.end [8/8] 0, 128
        %v1136 = vpop.trf.xlu0
        %v1137 = vpop.trf.xlu0
        %v1138 = vpop.trf.xlu0
        %v1139 = vpop.trf.xlu0
        %v1140 = vpop.trf.xlu0
        %v1141 = vpop.trf.xlu0
        %v1142 = vpop.trf.xlu0
        %v1143 = vpop.trf.xlu0
        %1144 = vxpose.xlu0.c.b16.start [1/8] %v964, 128
        %1145 = vxpose.xlu0.c.b16.cont [2/8] %v965, 128
        %1146 = vxpose.xlu0.c.b16.cont [3/8] 0, 128
        %1147 = vxpose.xlu0.c.b16.cont [4/8] 0, 128
        %1148 = vxpose.xlu0.c.b16.cont [5/8] 0, 128
        %1149 = vxpose.xlu0.c.b16.cont [6/8] 0, 128
        %1150 = vxpose.xlu0.c.b16.cont [7/8] 0, 128
        %1151 = vxpose.xlu0.c.b16.end [8/8] 0, 128
        %v1152 = vpop.trf.xlu0
        %v1153 = vpop.trf.xlu0
        %v1154 = vpop.trf.xlu0
        %v1155 = vpop.trf.xlu0
        %v1156 = vpop.trf.xlu0
        %v1157 = vpop.trf.xlu0
        %v1158 = vpop.trf.xlu0
        %v1159 = vpop.trf.xlu0
        %1160 = vxpose.xlu0.c.b16.start [1/8] %v966, 128
        %1161 = vxpose.xlu0.c.b16.cont [2/8] %v967, 128
        %1162 = vxpose.xlu0.c.b16.cont [3/8] 0, 128
        %1163 = vxpose.xlu0.c.b16.cont [4/8] 0, 128
        %1164 = vxpose.xlu0.c.b16.cont [5/8] 0, 128
        %1165 = vxpose.xlu0.c.b16.cont [6/8] 0, 128
        %1166 = vxpose.xlu0.c.b16.cont [7/8] 0, 128
        %1167 = vxpose.xlu0.c.b16.end [8/8] 0, 128
        %v1168 = vpop.trf.xlu0
        %v1169 = vpop.trf.xlu0
        %v1170 = vpop.trf.xlu0
        %v1171 = vpop.trf.xlu0
        %v1172 = vpop.trf.xlu0
        %v1173 = vpop.trf.xlu0
        %v1174 = vpop.trf.xlu0
        %v1175 = vpop.trf.xlu0
        %1176 = vxpose.xlu0.c.b16.start [1/8] %v976, 128
        %1177 = vxpose.xlu0.c.b16.cont [2/8] %v977, 128
        %1178 = vxpose.xlu0.c.b16.cont [3/8] 0, 128
        %1179 = vxpose.xlu0.c.b16.cont [4/8] 0, 128
        %1180 = vxpose.xlu0.c.b16.cont [5/8] 0, 128
        %1181 = vxpose.xlu0.c.b16.cont [6/8] 0, 128
        %1182 = vxpose.xlu0.c.b16.cont [7/8] 0, 128
        %1183 = vxpose.xlu0.c.b16.end [8/8] 0, 128
        %v1184 = vpop.trf.xlu0
        %v1185 = vpop.trf.xlu0
        %v1186 = vpop.trf.xlu0
        %v1187 = vpop.trf.xlu0
        %v1188 = vpop.trf.xlu0
        %v1189 = vpop.trf.xlu0
        %v1190 = vpop.trf.xlu0
        %v1191 = vpop.trf.xlu0
        %1192 = vxpose.xlu0.c.b16.start [1/8] %v978, 128
        %1193 = vxpose.xlu0.c.b16.cont [2/8] %v979, 128
        %1194 = vxpose.xlu0.c.b16.cont [3/8] 0, 128
        %1195 = vxpose.xlu0.c.b16.cont [4/8] 0, 128
        %1196 = vxpose.xlu0.c.b16.cont [5/8] 0, 128
        %1197 = vxpose.xlu0.c.b16.cont [6/8] 0, 128
        %1198 = vxpose.xlu0.c.b16.cont [7/8] 0, 128
        %1199 = vxpose.xlu0.c.b16.end [8/8] 0, 128
        %v1200 = vpop.trf.xlu0
        %v1201 = vpop.trf.xlu0
        %v1202 = vpop.trf.xlu0
        %v1203 = vpop.trf.xlu0
        %v1204 = vpop.trf.xlu0
        %v1205 = vpop.trf.xlu0
        %v1206 = vpop.trf.xlu0
        %v1207 = vpop.trf.xlu0
        %1208 = vxpose.xlu0.c.b16.start [1/8] %v980, 128
        %1209 = vxpose.xlu0.c.b16.cont [2/8] %v981, 128
        %1210 = vxpose.xlu0.c.b16.cont [3/8] 0, 128
        %1211 = vxpose.xlu0.c.b16.cont [4/8] 0, 128
        %1212 = vxpose.xlu0.c.b16.cont [5/8] 0, 128
        %1213 = vxpose.xlu0.c.b16.cont [6/8] 0, 128
        %1214 = vxpose.xlu0.c.b16.cont [7/8] 0, 128
        %1215 = vxpose.xlu0.c.b16.end [8/8] 0, 128
        %v1216 = vpop.trf.xlu0
        %v1217 = vpop.trf.xlu0
        %v1218 = vpop.trf.xlu0
        %v1219 = vpop.trf.xlu0
        %v1220 = vpop.trf.xlu0
        %v1221 = vpop.trf.xlu0
        %v1222 = vpop.trf.xlu0
        %v1223 = vpop.trf.xlu0
        %1224 = vxpose.xlu0.c.b16.start [1/8] %v982, 128
        %1225 = vxpose.xlu0.c.b16.cont [2/8] %v983, 128
        %1226 = vxpose.xlu0.c.b16.cont [3/8] 0, 128
        %1227 = vxpose.xlu0.c.b16.cont [4/8] 0, 128
        %1228 = vxpose.xlu0.c.b16.cont [5/8] 0, 128
        %1229 = vxpose.xlu0.c.b16.cont [6/8] 0, 128
        %1230 = vxpose.xlu0.c.b16.cont [7/8] 0, 128
        %1231 = vxpose.xlu0.c.b16.end [8/8] 0, 128
        %v1232 = vpop.trf.xlu0
        %v1233 = vpop.trf.xlu0
        %v1234 = vpop.trf.xlu0
        %v1235 = vpop.trf.xlu0
        %v1236 = vpop.trf.xlu0
        %v1237 = vpop.trf.xlu0
        %v1238 = vpop.trf.xlu0
        %v1239 = vpop.trf.xlu0
        %1240 = vxpose.xlu0.c.b16.start [1/8] %v909, 128
        %1241 = vxpose.xlu0.c.b16.cont [2/8] 0, 128
        %1242 = vxpose.xlu0.c.b16.cont [3/8] 0, 128
        %1243 = vxpose.xlu0.c.b16.cont [4/8] 0, 128
        %1244 = vxpose.xlu0.c.b16.cont [5/8] 0, 128
        %1245 = vxpose.xlu0.c.b16.cont [6/8] 0, 128
        %1246 = vxpose.xlu0.c.b16.cont [7/8] 0, 128
        %1247 = vxpose.xlu0.c.b16.end [8/8] 0, 128
        %v1248 = vpop.trf.xlu0
        %v1249 = vpop.trf.xlu0
        %v1250 = vpop.trf.xlu0
        %v1251 = vpop.trf.xlu0
        %v1252 = vpop.trf.xlu0
        %v1253 = vpop.trf.xlu0
        %v1254 = vpop.trf.xlu0
        %v1255 = vpop.trf.xlu0
        %1256 = vxpose.xlu0.c.b16.start [1/8] %v912, 128
        %1257 = vxpose.xlu0.c.b16.cont [2/8] 0, 128
        %1258 = vxpose.xlu0.c.b16.cont [3/8] 0, 128
        %1259 = vxpose.xlu0.c.b16.cont [4/8] 0, 128
        %1260 = vxpose.xlu0.c.b16.cont [5/8] 0, 128
        %1261 = vxpose.xlu0.c.b16.cont [6/8] 0, 128
        %1262 = vxpose.xlu0.c.b16.cont [7/8] 0, 128
        %1263 = vxpose.xlu0.c.b16.end [8/8] 0, 128
        %v1264 = vpop.trf.xlu0
        %v1265 = vpop.trf.xlu0
        %v1266 = vpop.trf.xlu0
        %v1267 = vpop.trf.xlu0
        %v1268 = vpop.trf.xlu0
        %v1269 = vpop.trf.xlu0
        %v1270 = vpop.trf.xlu0
        %v1271 = vpop.trf.xlu0
        %1272 = vxpose.xlu0.c.b16.start [1/8] %v915, 128
        %1273 = vxpose.xlu0.c.b16.cont [2/8] 0, 128
        %1274 = vxpose.xlu0.c.b16.cont [3/8] 0, 128
        %1275 = vxpose.xlu0.c.b16.cont [4/8] 0, 128
        %1276 = vxpose.xlu0.c.b16.cont [5/8] 0, 128
        %1277 = vxpose.xlu0.c.b16.cont [6/8] 0, 128
        %1278 = vxpose.xlu0.c.b16.cont [7/8] 0, 128
        %1279 = vxpose.xlu0.c.b16.end [8/8] 0, 128
        %v1280 = vpop.trf.xlu0
        %v1281 = vpop.trf.xlu0
        %v1282 = vpop.trf.xlu0
        %v1283 = vpop.trf.xlu0
        %v1284 = vpop.trf.xlu0
        %v1285 = vpop.trf.xlu0
        %v1286 = vpop.trf.xlu0
        %v1287 = vpop.trf.xlu0
        %1288 = vxpose.xlu0.c.b16.start [1/8] %v918, 128
        %1289 = vxpose.xlu0.c.b16.cont [2/8] 0, 128
        %1290 = vxpose.xlu0.c.b16.cont [3/8] 0, 128
        %1291 = vxpose.xlu0.c.b16.cont [4/8] 0, 128
        %1292 = vxpose.xlu0.c.b16.cont [5/8] 0, 128
        %1293 = vxpose.xlu0.c.b16.cont [6/8] 0, 128
        %1294 = vxpose.xlu0.c.b16.cont [7/8] 0, 128
        %1295 = vxpose.xlu0.c.b16.end [8/8] 0, 128
        %v1296 = vpop.trf.xlu0
        %v1297 = vpop.trf.xlu0
        %v1298 = vpop.trf.xlu0
        %v1299 = vpop.trf.xlu0
        %v1300 = vpop.trf.xlu0
        %v1301 = vpop.trf.xlu0
        %v1302 = vpop.trf.xlu0
        %v1303 = vpop.trf.xlu0
        %1304 = vxpose.xlu0.c.b16.start [1/8] %v910, 128
        %1305 = vxpose.xlu0.c.b16.cont [2/8] 0, 128
        %1306 = vxpose.xlu0.c.b16.cont [3/8] 0, 128
        %1307 = vxpose.xlu0.c.b16.cont [4/8] 0, 128
        %1308 = vxpose.xlu0.c.b16.cont [5/8] 0, 128
        %1309 = vxpose.xlu0.c.b16.cont [6/8] 0, 128
        %1310 = vxpose.xlu0.c.b16.cont [7/8] 0, 128
        %1311 = vxpose.xlu0.c.b16.end [8/8] 0, 128
        %v1312 = vpop.trf.xlu0
        %v1313 = vpop.trf.xlu0
        %v1314 = vpop.trf.xlu0
        %v1315 = vpop.trf.xlu0
        %v1316 = vpop.trf.xlu0
        %v1317 = vpop.trf.xlu0
        %v1318 = vpop.trf.xlu0
        %v1319 = vpop.trf.xlu0
        %1320 = vxpose.xlu0.c.b16.start [1/8] %v913, 128
        %1321 = vxpose.xlu0.c.b16.cont [2/8] 0, 128
        %1322 = vxpose.xlu0.c.b16.cont [3/8] 0, 128
        %1323 = vxpose.xlu0.c.b16.cont [4/8] 0, 128
        %1324 = vxpose.xlu0.c.b16.cont [5/8] 0, 128
        %1325 = vxpose.xlu0.c.b16.cont [6/8] 0, 128
        %1326 = vxpose.xlu0.c.b16.cont [7/8] 0, 128
        %1327 = vxpose.xlu0.c.b16.end [8/8] 0, 128
        %v1328 = vpop.trf.xlu0
        %v1329 = vpop.trf.xlu0
        %v1330 = vpop.trf.xlu0
        %v1331 = vpop.trf.xlu0
        %v1332 = vpop.trf.xlu0
        %v1333 = vpop.trf.xlu0
        %v1334 = vpop.trf.xlu0
        %v1335 = vpop.trf.xlu0
        %1336 = vxpose.xlu0.c.b16.start [1/8] %v916, 128
        %1337 = vxpose.xlu0.c.b16.cont [2/8] 0, 128
        %1338 = vxpose.xlu0.c.b16.cont [3/8] 0, 128
        %1339 = vxpose.xlu0.c.b16.cont [4/8] 0, 128
        %1340 = vxpose.xlu0.c.b16.cont [5/8] 0, 128
        %1341 = vxpose.xlu0.c.b16.cont [6/8] 0, 128
        %1342 = vxpose.xlu0.c.b16.cont [7/8] 0, 128
        %1343 = vxpose.xlu0.c.b16.end [8/8] 0, 128
        %v1344 = vpop.trf.xlu0
        %v1345 = vpop.trf.xlu0
        %v1346 = vpop.trf.xlu0
        %v1347 = vpop.trf.xlu0
        %v1348 = vpop.trf.xlu0
        %v1349 = vpop.trf.xlu0
        %v1350 = vpop.trf.xlu0
        %v1351 = vpop.trf.xlu0
        %1352 = vxpose.xlu0.c.b16.start [1/8] %v919, 128
        %1353 = vxpose.xlu0.c.b16.cont [2/8] 0, 128
        %1354 = vxpose.xlu0.c.b16.cont [3/8] 0, 128
        %1355 = vxpose.xlu0.c.b16.cont [4/8] 0, 128
        %1356 = vxpose.xlu0.c.b16.cont [5/8] 0, 128
        %1357 = vxpose.xlu0.c.b16.cont [6/8] 0, 128
        %1358 = vxpose.xlu0.c.b16.cont [7/8] 0, 128
        %1359 = vxpose.xlu0.c.b16.end [8/8] 0, 128
        %v1360 = vpop.trf.xlu0
        %v1361 = vpop.trf.xlu0
        %v1362 = vpop.trf.xlu0
        %v1363 = vpop.trf.xlu0
        %v1364 = vpop.trf.xlu0
        %v1365 = vpop.trf.xlu0
        %v1366 = vpop.trf.xlu0
        %v1367 = vpop.trf.xlu0
        %v1368 = vlaneseq
        %v1369 = vshrl.u32 %v1368, 7
        %v1370 = vadd.s32 %v1369, 8
        %v1371 = vlaneseq
        %v1372 = vand.u32 %v1371, 127
        %vm1373 = vcmp.gt.s32.totalorder %v1372, %v1369
        %vm1374 = vcmp.gt.s32.totalorder %v1372, %v1370
        %v1375 = vsel %vm1373, -1e+30, 0.0
        %v1376 = vsel %vm1374, -1e+30, 0.0
        %v1377 = vld [vmem:[%s577] sm:$0x1]
        %v1378 = vld [vmem:[%s577 + $0x1] sm:$0x1]
        %v1379 = vld [vmem:[%s577 + $0x2] sm:$0x1]
        %v1380 = vld [vmem:[%s577 + $0x3] sm:$0x1]
        %v1381 = vld [vmem:[%s577 + $0x4] sm:$0x1]
        %v1382 = vld [vmem:[%s577 + $0x5] sm:$0x1]
        %v1383 = vld [vmem:[%s577 + $0x6] sm:$0x1]
        %v1384 = vld [vmem:[%s577 + $0x7] sm:$0x1]
        %v1385 = vld [vmem:[%s577 + $0x8] sm:$0x1]
        %v1386 = vld [vmem:[%s577 + $0x9] sm:$0x1]
        %v1387 = vld [vmem:[%s577 + $0xa] sm:$0x1]
        %v1388 = vld [vmem:[%s577 + $0xb] sm:$0x1]
        %v1389 = vld [vmem:[%s577 + $0xc] sm:$0x1]
        %v1390 = vld [vmem:[%s577 + $0xd] sm:$0x1]
        %v1391 = vld [vmem:[%s577 + $0xe] sm:$0x1]
        %v1392 = vld [vmem:[%s577 + $0xf] sm:$0x1]
        %v1409 = vlaneseq
        %v1410 = vshrl.u32 %v1409, 7
        %v1411 = vsub.s32 0, %v1410
        %v1412 = vrot.slane %v1377, %v1411
        %v1413 = vlaneseq
        %v1414 = vshrl.u32 %v1413, 7
        %v1415 = vsub.s32 0, %v1414
        %v1416 = vrot.slane %v1378, %v1415
        %v1417 = vlaneseq
        %v1418 = vshrl.u32 %v1417, 7
        %v1419 = vsub.s32 0, %v1418
        %v1420 = vrot.slane %v1379, %v1419
        %v1421 = vlaneseq
        %v1422 = vshrl.u32 %v1421, 7
        %v1423 = vsub.s32 0, %v1422
        %v1424 = vrot.slane %v1380, %v1423
        %v1425 = vlaneseq
        %v1426 = vshrl.u32 %v1425, 7
        %v1427 = vsub.s32 0, %v1426
        %v1428 = vrot.slane %v1381, %v1427
        %v1429 = vlaneseq
        %v1430 = vshrl.u32 %v1429, 7
        %v1431 = vsub.s32 0, %v1430
        %v1432 = vrot.slane %v1382, %v1431
        %v1433 = vlaneseq
        %v1434 = vshrl.u32 %v1433, 7
        %v1435 = vsub.s32 0, %v1434
        %v1436 = vrot.slane %v1383, %v1435
        %v1437 = vlaneseq
        %v1438 = vshrl.u32 %v1437, 7
        %v1439 = vsub.s32 0, %v1438
        %v1440 = vrot.slane %v1384, %v1439
        %v1441 = vlaneseq
        %v1442 = vshrl.u32 %v1441, 7
        %v1443 = vsub.s32 0, %v1442
        %v1444 = vrot.slane %v1385, %v1443
        %v1445 = vlaneseq
        %v1446 = vshrl.u32 %v1445, 7
        %v1447 = vsub.s32 0, %v1446
        %v1448 = vrot.slane %v1386, %v1447
        %v1449 = vlaneseq
        %v1450 = vshrl.u32 %v1449, 7
        %v1451 = vsub.s32 0, %v1450
        %v1452 = vrot.slane %v1387, %v1451
        %v1453 = vlaneseq
        %v1454 = vshrl.u32 %v1453, 7
        %v1455 = vsub.s32 0, %v1454
        %v1456 = vrot.slane %v1388, %v1455
        %v1457 = vlaneseq
        %v1458 = vshrl.u32 %v1457, 7
        %v1459 = vsub.s32 0, %v1458
        %v1460 = vrot.slane %v1389, %v1459
        %v1461 = vlaneseq
        %v1462 = vshrl.u32 %v1461, 7
        %v1463 = vsub.s32 0, %v1462
        %v1464 = vrot.slane %v1390, %v1463
        %v1465 = vlaneseq
        %v1466 = vshrl.u32 %v1465, 7
        %v1467 = vsub.s32 0, %v1466
        %v1468 = vrot.slane %v1391, %v1467
        %v1469 = vlaneseq
        %v1470 = vshrl.u32 %v1469, 7
        %v1471 = vsub.s32 0, %v1470
        %v1472 = vrot.slane %v1392, %v1471
        %v1489 = vadd.f32 %v1375, %v1412
        %v1490 = vadd.f32 %v1376, %v1412
        %v1491 = vadd.f32 %v1375, %v1416
        %v1492 = vadd.f32 %v1376, %v1416
        %v1493 = vadd.f32 %v1375, %v1420
        %v1494 = vadd.f32 %v1376, %v1420
        %v1495 = vadd.f32 %v1375, %v1424
        %v1496 = vadd.f32 %v1376, %v1424
        %v1497 = vadd.f32 %v1375, %v1428
        %v1498 = vadd.f32 %v1376, %v1428
        %v1499 = vadd.f32 %v1375, %v1432
        %v1500 = vadd.f32 %v1376, %v1432
        %v1501 = vadd.f32 %v1375, %v1436
        %v1502 = vadd.f32 %v1376, %v1436
        %v1503 = vadd.f32 %v1375, %v1440
        %v1504 = vadd.f32 %v1376, %v1440
        %v1505 = vadd.f32 %v1375, %v1444
        %v1506 = vadd.f32 %v1376, %v1444
        %v1507 = vadd.f32 %v1375, %v1448
        %v1508 = vadd.f32 %v1376, %v1448
        %v1509 = vadd.f32 %v1375, %v1452
        %v1510 = vadd.f32 %v1376, %v1452
        %v1511 = vadd.f32 %v1375, %v1456
        %v1512 = vadd.f32 %v1376, %v1456
        %v1513 = vadd.f32 %v1375, %v1460
        %v1514 = vadd.f32 %v1376, %v1460
        %v1515 = vadd.f32 %v1375, %v1464
        %v1516 = vadd.f32 %v1376, %v1464
        %v1517 = vadd.f32 %v1375, %v1468
        %v1518 = vadd.f32 %v1376, %v1468
        %v1519 = vadd.f32 %v1375, %v1472
        %v1520 = vadd.f32 %v1376, %v1472
        %vm1521 = vcmask 261120
        %v1523 = vsel %vm1521, %v992, 0
        %1525 = vmatprep.subr.bf16.mxu0 0
        %1526 = vmatpush1.bf16.msra.mxu0 0
        %1527 = vmatprep.subr.bf16.mxu0 0
        %1528 = vmatpush1.bf16.msra.mxu0 0
        %1529 = vmatprep.subr.bf16.mxu0 0
        %1530 = vmatpush1.bf16.msra.mxu0 0
        %1531 = vmatprep.subr.bf16.mxu0 0
        %1532 = vmatpush1.bf16.msra.mxu0 0
        %1533 = vmatprep.subr.bf16.mxu0 0
        %1534 = vmatpush1.bf16.msra.mxu0 0
        %1535 = vmatprep.subr.bf16.mxu0 0
        %1536 = vmatpush1.bf16.msra.mxu0 0
        %1537 = vmatprep.subr.bf16.mxu0 0
        %1538 = vmatpush1.bf16.msra.mxu0 %v1249
        %1539 = vmatprep.subr.bf16.mxu0 0
        %1540 = vmatpush1.bf16.msra.mxu0 %v1248
        %1541 = vmatprep.subr.bf16.mxu0 0
        %1542 = vmatpush2.bf16.msra.mxu0 0
        %1543 = vmatprep.subr.bf16.mxu0 0
        %1544 = vmatpush2.bf16.msra.mxu0 0
        %1545 = vmatprep.subr.bf16.mxu0 0
        %1546 = vmatpush2.bf16.msra.mxu0 0
        %1547 = vmatprep.subr.bf16.mxu0 0
        %1548 = vmatpush2.bf16.msra.mxu0 0
        %1549 = vmatprep.subr.bf16.mxu0 0
        %1550 = vmatpush2.bf16.msra.mxu0 0
        %1551 = vmatprep.subr.bf16.mxu0 0
        %1552 = vmatpush2.bf16.msra.mxu0 0
        %1553 = vmatprep.subr.bf16.mxu0 0
        %1554 = vmatpush2.bf16.msra.mxu0 0
        %1555 = vmatprep.subr.bf16.mxu0 0
        %1556 = vmatpush2.bf16.msra.mxu0 0
        %1557 = vmatprep.mubr.bf16.mxu0 0
        %1558 = vmatmul.mubr.bf16.gmra.mxu0 %v1523
        %v1559 = vpop.f32.mrf.mxu0
        %v1560 = vadd.f32 %v1489, %v1559
        %v1561 = vpop.f32.mrf.mxu0
        %v1562 = vpop.f32.mrf.mxu0
        %v1563 = vadd.f32 %v1490, %v1562
        %v1564 = vpop.f32.mrf.mxu0
        %1565 = vdwg.mxu0
        %v1567 = vsel %vm1521, %v1008, 0
        %1569 = vmatprep.subr.bf16.mxu0 0
        %1570 = vmatpush1.bf16.msra.mxu0 0
        %1571 = vmatprep.subr.bf16.mxu0 0
        %1572 = vmatpush1.bf16.msra.mxu0 0
        %1573 = vmatprep.subr.bf16.mxu0 0
        %1574 = vmatpush1.bf16.msra.mxu0 0
        %1575 = vmatprep.subr.bf16.mxu0 0
        %1576 = vmatpush1.bf16.msra.mxu0 0
        %1577 = vmatprep.subr.bf16.mxu0 0
        %1578 = vmatpush1.bf16.msra.mxu0 0
        %1579 = vmatprep.subr.bf16.mxu0 0
        %1580 = vmatpush1.bf16.msra.mxu0 0
        %1581 = vmatprep.subr.bf16.mxu0 0
        %1582 = vmatpush1.bf16.msra.mxu0 %v1251
        %1583 = vmatprep.subr.bf16.mxu0 0
        %1584 = vmatpush1.bf16.msra.mxu0 %v1250
        %1585 = vmatprep.subr.bf16.mxu0 0
        %1586 = vmatpush2.bf16.msra.mxu0 0
        %1587 = vmatprep.subr.bf16.mxu0 0
        %1588 = vmatpush2.bf16.msra.mxu0 0
        %1589 = vmatprep.subr.bf16.mxu0 0
        %1590 = vmatpush2.bf16.msra.mxu0 0
        %1591 = vmatprep.subr.bf16.mxu0 0
        %1592 = vmatpush2.bf16.msra.mxu0 0
        %1593 = vmatprep.subr.bf16.mxu0 0
        %1594 = vmatpush2.bf16.msra.mxu0 0
        %1595 = vmatprep.subr.bf16.mxu0 0
        %1596 = vmatpush2.bf16.msra.mxu0 0
        %1597 = vmatprep.subr.bf16.mxu0 0
        %1598 = vmatpush2.bf16.msra.mxu0 0
        %1599 = vmatprep.subr.bf16.mxu0 0
        %1600 = vmatpush2.bf16.msra.mxu0 0
        %1601 = vmatprep.mubr.bf16.mxu0 0
        %1602 = vmatmul.mubr.bf16.gmra.mxu0 %v1567
        %v1603 = vpop.f32.mrf.mxu0
        %v1604 = vadd.f32 %v1491, %v1603
        %v1605 = vpop.f32.mrf.mxu0
        %v1606 = vpop.f32.mrf.mxu0
        %v1607 = vadd.f32 %v1492, %v1606
        %v1608 = vpop.f32.mrf.mxu0
        %1609 = vdwg.mxu0
        %v1611 = vsel %vm1521, %v1024, 0
        %1613 = vmatprep.subr.bf16.mxu0 0
        %1614 = vmatpush1.bf16.msra.mxu0 0
        %1615 = vmatprep.subr.bf16.mxu0 0
        %1616 = vmatpush1.bf16.msra.mxu0 0
        %1617 = vmatprep.subr.bf16.mxu0 0
        %1618 = vmatpush1.bf16.msra.mxu0 0
        %1619 = vmatprep.subr.bf16.mxu0 0
        %1620 = vmatpush1.bf16.msra.mxu0 0
        %1621 = vmatprep.subr.bf16.mxu0 0
        %1622 = vmatpush1.bf16.msra.mxu0 0
        %1623 = vmatprep.subr.bf16.mxu0 0
        %1624 = vmatpush1.bf16.msra.mxu0 0
        %1625 = vmatprep.subr.bf16.mxu0 0
        %1626 = vmatpush1.bf16.msra.mxu0 %v1253
        %1627 = vmatprep.subr.bf16.mxu0 0
        %1628 = vmatpush1.bf16.msra.mxu0 %v1252
        %1629 = vmatprep.subr.bf16.mxu0 0
        %1630 = vmatpush2.bf16.msra.mxu0 0
        %1631 = vmatprep.subr.bf16.mxu0 0
        %1632 = vmatpush2.bf16.msra.mxu0 0
        %1633 = vmatprep.subr.bf16.mxu0 0
        %1634 = vmatpush2.bf16.msra.mxu0 0
        %1635 = vmatprep.subr.bf16.mxu0 0
        %1636 = vmatpush2.bf16.msra.mxu0 0
        %1637 = vmatprep.subr.bf16.mxu0 0
        %1638 = vmatpush2.bf16.msra.mxu0 0
        %1639 = vmatprep.subr.bf16.mxu0 0
        %1640 = vmatpush2.bf16.msra.mxu0 0
        %1641 = vmatprep.subr.bf16.mxu0 0
        %1642 = vmatpush2.bf16.msra.mxu0 0
        %1643 = vmatprep.subr.bf16.mxu0 0
        %1644 = vmatpush2.bf16.msra.mxu0 0
        %1645 = vmatprep.mubr.bf16.mxu0 0
        %1646 = vmatmul.mubr.bf16.gmra.mxu0 %v1611
        %v1647 = vpop.f32.mrf.mxu0
        %v1648 = vadd.f32 %v1493, %v1647
        %v1649 = vpop.f32.mrf.mxu0
        %v1650 = vpop.f32.mrf.mxu0
        %v1651 = vadd.f32 %v1494, %v1650
        %v1652 = vpop.f32.mrf.mxu0
        %1653 = vdwg.mxu0
        %v1655 = vsel %vm1521, %v1040, 0
        %1657 = vmatprep.subr.bf16.mxu0 0
        %1658 = vmatpush1.bf16.msra.mxu0 0
        %1659 = vmatprep.subr.bf16.mxu0 0
        %1660 = vmatpush1.bf16.msra.mxu0 0
        %1661 = vmatprep.subr.bf16.mxu0 0
        %1662 = vmatpush1.bf16.msra.mxu0 0
        %1663 = vmatprep.subr.bf16.mxu0 0
        %1664 = vmatpush1.bf16.msra.mxu0 0
        %1665 = vmatprep.subr.bf16.mxu0 0
        %1666 = vmatpush1.bf16.msra.mxu0 0
        %1667 = vmatprep.subr.bf16.mxu0 0
        %1668 = vmatpush1.bf16.msra.mxu0 0
        %1669 = vmatprep.subr.bf16.mxu0 0
        %1670 = vmatpush1.bf16.msra.mxu0 %v1255
        %1671 = vmatprep.subr.bf16.mxu0 0
        %1672 = vmatpush1.bf16.msra.mxu0 %v1254
        %1673 = vmatprep.subr.bf16.mxu0 0
        %1674 = vmatpush2.bf16.msra.mxu0 0
        %1675 = vmatprep.subr.bf16.mxu0 0
        %1676 = vmatpush2.bf16.msra.mxu0 0
        %1677 = vmatprep.subr.bf16.mxu0 0
        %1678 = vmatpush2.bf16.msra.mxu0 0
        %1679 = vmatprep.subr.bf16.mxu0 0
        %1680 = vmatpush2.bf16.msra.mxu0 0
        %1681 = vmatprep.subr.bf16.mxu0 0
        %1682 = vmatpush2.bf16.msra.mxu0 0
        %1683 = vmatprep.subr.bf16.mxu0 0
        %1684 = vmatpush2.bf16.msra.mxu0 0
        %1685 = vmatprep.subr.bf16.mxu0 0
        %1686 = vmatpush2.bf16.msra.mxu0 0
        %1687 = vmatprep.subr.bf16.mxu0 0
        %1688 = vmatpush2.bf16.msra.mxu0 0
        %1689 = vmatprep.mubr.bf16.mxu0 0
        %1690 = vmatmul.mubr.bf16.gmra.mxu0 %v1655
        %v1691 = vpop.f32.mrf.mxu0
        %v1692 = vadd.f32 %v1495, %v1691
        %v1693 = vpop.f32.mrf.mxu0
        %v1694 = vpop.f32.mrf.mxu0
        %v1695 = vadd.f32 %v1496, %v1694
        %v1696 = vpop.f32.mrf.mxu0
        %1697 = vdwg.mxu0
        %v1699 = vsel %vm1521, %v1056, 0
        %1701 = vmatprep.subr.bf16.mxu0 0
        %1702 = vmatpush1.bf16.msra.mxu0 0
        %1703 = vmatprep.subr.bf16.mxu0 0
        %1704 = vmatpush1.bf16.msra.mxu0 0
        %1705 = vmatprep.subr.bf16.mxu0 0
        %1706 = vmatpush1.bf16.msra.mxu0 0
        %1707 = vmatprep.subr.bf16.mxu0 0
        %1708 = vmatpush1.bf16.msra.mxu0 0
        %1709 = vmatprep.subr.bf16.mxu0 0
        %1710 = vmatpush1.bf16.msra.mxu0 0
        %1711 = vmatprep.subr.bf16.mxu0 0
        %1712 = vmatpush1.bf16.msra.mxu0 0
        %1713 = vmatprep.subr.bf16.mxu0 0
        %1714 = vmatpush1.bf16.msra.mxu0 %v1265
        %1715 = vmatprep.subr.bf16.mxu0 0
        %1716 = vmatpush1.bf16.msra.mxu0 %v1264
        %1717 = vmatprep.subr.bf16.mxu0 0
        %1718 = vmatpush2.bf16.msra.mxu0 0
        %1719 = vmatprep.subr.bf16.mxu0 0
        %1720 = vmatpush2.bf16.msra.mxu0 0
        %1721 = vmatprep.subr.bf16.mxu0 0
        %1722 = vmatpush2.bf16.msra.mxu0 0
        %1723 = vmatprep.subr.bf16.mxu0 0
        %1724 = vmatpush2.bf16.msra.mxu0 0
        %1725 = vmatprep.subr.bf16.mxu0 0
        %1726 = vmatpush2.bf16.msra.mxu0 0
        %1727 = vmatprep.subr.bf16.mxu0 0
        %1728 = vmatpush2.bf16.msra.mxu0 0
        %1729 = vmatprep.subr.bf16.mxu0 0
        %1730 = vmatpush2.bf16.msra.mxu0 0
        %1731 = vmatprep.subr.bf16.mxu0 0
        %1732 = vmatpush2.bf16.msra.mxu0 0
        %1733 = vmatprep.mubr.bf16.mxu0 0
        %1734 = vmatmul.mubr.bf16.gmra.mxu0 %v1699
        %v1735 = vpop.f32.mrf.mxu0
        %v1736 = vadd.f32 %v1497, %v1735
        %v1737 = vpop.f32.mrf.mxu0
        %v1738 = vpop.f32.mrf.mxu0
        %v1739 = vadd.f32 %v1498, %v1738
        %v1740 = vpop.f32.mrf.mxu0
        %1741 = vdwg.mxu0
        %v1743 = vsel %vm1521, %v1072, 0
        %1745 = vmatprep.subr.bf16.mxu0 0
        %1746 = vmatpush1.bf16.msra.mxu0 0
        %1747 = vmatprep.subr.bf16.mxu0 0
        %1748 = vmatpush1.bf16.msra.mxu0 0
        %1749 = vmatprep.subr.bf16.mxu0 0
        %1750 = vmatpush1.bf16.msra.mxu0 0
        %1751 = vmatprep.subr.bf16.mxu0 0
        %1752 = vmatpush1.bf16.msra.mxu0 0
        %1753 = vmatprep.subr.bf16.mxu0 0
        %1754 = vmatpush1.bf16.msra.mxu0 0
        %1755 = vmatprep.subr.bf16.mxu0 0
        %1756 = vmatpush1.bf16.msra.mxu0 0
        %1757 = vmatprep.subr.bf16.mxu0 0
        %1758 = vmatpush1.bf16.msra.mxu0 %v1267
        %1759 = vmatprep.subr.bf16.mxu0 0
        %1760 = vmatpush1.bf16.msra.mxu0 %v1266
        %1761 = vmatprep.subr.bf16.mxu0 0
        %1762 = vmatpush2.bf16.msra.mxu0 0
        %1763 = vmatprep.subr.bf16.mxu0 0
        %1764 = vmatpush2.bf16.msra.mxu0 0
        %1765 = vmatprep.subr.bf16.mxu0 0
        %1766 = vmatpush2.bf16.msra.mxu0 0
        %1767 = vmatprep.subr.bf16.mxu0 0
        %1768 = vmatpush2.bf16.msra.mxu0 0
        %1769 = vmatprep.subr.bf16.mxu0 0
        %1770 = vmatpush2.bf16.msra.mxu0 0
        %1771 = vmatprep.subr.bf16.mxu0 0
        %1772 = vmatpush2.bf16.msra.mxu0 0
        %1773 = vmatprep.subr.bf16.mxu0 0
        %1774 = vmatpush2.bf16.msra.mxu0 0
        %1775 = vmatprep.subr.bf16.mxu0 0
        %1776 = vmatpush2.bf16.msra.mxu0 0
        %1777 = vmatprep.mubr.bf16.mxu0 0
        %1778 = vmatmul.mubr.bf16.gmra.mxu0 %v1743
        %v1779 = vpop.f32.mrf.mxu0
        %v1780 = vadd.f32 %v1499, %v1779
        %v1781 = vpop.f32.mrf.mxu0
        %v1782 = vpop.f32.mrf.mxu0
        %v1783 = vadd.f32 %v1500, %v1782
        %v1784 = vpop.f32.mrf.mxu0
        %1785 = vdwg.mxu0
        %v1787 = vsel %vm1521, %v1088, 0
        %1789 = vmatprep.subr.bf16.mxu0 0
        %1790 = vmatpush1.bf16.msra.mxu0 0
        %1791 = vmatprep.subr.bf16.mxu0 0
        %1792 = vmatpush1.bf16.msra.mxu0 0
        %1793 = vmatprep.subr.bf16.mxu0 0
        %1794 = vmatpush1.bf16.msra.mxu0 0
        %1795 = vmatprep.subr.bf16.mxu0 0
        %1796 = vmatpush1.bf16.msra.mxu0 0
        %1797 = vmatprep.subr.bf16.mxu0 0
        %1798 = vmatpush1.bf16.msra.mxu0 0
        %1799 = vmatprep.subr.bf16.mxu0 0
        %1800 = vmatpush1.bf16.msra.mxu0 0
        %1801 = vmatprep.subr.bf16.mxu0 0
        %1802 = vmatpush1.bf16.msra.mxu0 %v1269
        %1803 = vmatprep.subr.bf16.mxu0 0
        %1804 = vmatpush1.bf16.msra.mxu0 %v1268
        %1805 = vmatprep.subr.bf16.mxu0 0
        %1806 = vmatpush2.bf16.msra.mxu0 0
        %1807 = vmatprep.subr.bf16.mxu0 0
        %1808 = vmatpush2.bf16.msra.mxu0 0
        %1809 = vmatprep.subr.bf16.mxu0 0
        %1810 = vmatpush2.bf16.msra.mxu0 0
        %1811 = vmatprep.subr.bf16.mxu0 0
        %1812 = vmatpush2.bf16.msra.mxu0 0
        %1813 = vmatprep.subr.bf16.mxu0 0
        %1814 = vmatpush2.bf16.msra.mxu0 0
        %1815 = vmatprep.subr.bf16.mxu0 0
        %1816 = vmatpush2.bf16.msra.mxu0 0
        %1817 = vmatprep.subr.bf16.mxu0 0
        %1818 = vmatpush2.bf16.msra.mxu0 0
        %1819 = vmatprep.subr.bf16.mxu0 0
        %1820 = vmatpush2.bf16.msra.mxu0 0
        %1821 = vmatprep.mubr.bf16.mxu0 0
        %1822 = vmatmul.mubr.bf16.gmra.mxu0 %v1787
        %v1823 = vpop.f32.mrf.mxu0
        %v1824 = vadd.f32 %v1501, %v1823
        %v1825 = vpop.f32.mrf.mxu0
        %v1826 = vpop.f32.mrf.mxu0
        %v1827 = vadd.f32 %v1502, %v1826
        %v1828 = vpop.f32.mrf.mxu0
        %1829 = vdwg.mxu0
        %v1831 = vsel %vm1521, %v1104, 0
        %1833 = vmatprep.subr.bf16.mxu0 0
        %1834 = vmatpush1.bf16.msra.mxu0 0
        %1835 = vmatprep.subr.bf16.mxu0 0
        %1836 = vmatpush1.bf16.msra.mxu0 0
        %1837 = vmatprep.subr.bf16.mxu0 0
        %1838 = vmatpush1.bf16.msra.mxu0 0
        %1839 = vmatprep.subr.bf16.mxu0 0
        %1840 = vmatpush1.bf16.msra.mxu0 0
        %1841 = vmatprep.subr.bf16.mxu0 0
        %1842 = vmatpush1.bf16.msra.mxu0 0
        %1843 = vmatprep.subr.bf16.mxu0 0
        %1844 = vmatpush1.bf16.msra.mxu0 0
        %1845 = vmatprep.subr.bf16.mxu0 0
        %1846 = vmatpush1.bf16.msra.mxu0 %v1271
        %1847 = vmatprep.subr.bf16.mxu0 0
        %1848 = vmatpush1.bf16.msra.mxu0 %v1270
        %1849 = vmatprep.subr.bf16.mxu0 0
        %1850 = vmatpush2.bf16.msra.mxu0 0
        %1851 = vmatprep.subr.bf16.mxu0 0
        %1852 = vmatpush2.bf16.msra.mxu0 0
        %1853 = vmatprep.subr.bf16.mxu0 0
        %1854 = vmatpush2.bf16.msra.mxu0 0
        %1855 = vmatprep.subr.bf16.mxu0 0
        %1856 = vmatpush2.bf16.msra.mxu0 0
        %1857 = vmatprep.subr.bf16.mxu0 0
        %1858 = vmatpush2.bf16.msra.mxu0 0
        %1859 = vmatprep.subr.bf16.mxu0 0
        %1860 = vmatpush2.bf16.msra.mxu0 0
        %1861 = vmatprep.subr.bf16.mxu0 0
        %1862 = vmatpush2.bf16.msra.mxu0 0
        %1863 = vmatprep.subr.bf16.mxu0 0
        %1864 = vmatpush2.bf16.msra.mxu0 0
        %1865 = vmatprep.mubr.bf16.mxu0 0
        %1866 = vmatmul.mubr.bf16.gmra.mxu0 %v1831
        %v1867 = vpop.f32.mrf.mxu0
        %v1868 = vadd.f32 %v1503, %v1867
        %v1869 = vpop.f32.mrf.mxu0
        %v1870 = vpop.f32.mrf.mxu0
        %v1871 = vadd.f32 %v1504, %v1870
        %v1872 = vpop.f32.mrf.mxu0
        %1873 = vdwg.mxu0
        %v1875 = vsel %vm1521, %v1120, 0
        %1877 = vmatprep.subr.bf16.mxu0 0
        %1878 = vmatpush1.bf16.msra.mxu0 0
        %1879 = vmatprep.subr.bf16.mxu0 0
        %1880 = vmatpush1.bf16.msra.mxu0 0
        %1881 = vmatprep.subr.bf16.mxu0 0
        %1882 = vmatpush1.bf16.msra.mxu0 0
        %1883 = vmatprep.subr.bf16.mxu0 0
        %1884 = vmatpush1.bf16.msra.mxu0 0
        %1885 = vmatprep.subr.bf16.mxu0 0
        %1886 = vmatpush1.bf16.msra.mxu0 0
        %1887 = vmatprep.subr.bf16.mxu0 0
        %1888 = vmatpush1.bf16.msra.mxu0 0
        %1889 = vmatprep.subr.bf16.mxu0 0
        %1890 = vmatpush1.bf16.msra.mxu0 %v1281
        %1891 = vmatprep.subr.bf16.mxu0 0
        %1892 = vmatpush1.bf16.msra.mxu0 %v1280
        %1893 = vmatprep.subr.bf16.mxu0 0
        %1894 = vmatpush2.bf16.msra.mxu0 0
        %1895 = vmatprep.subr.bf16.mxu0 0
        %1896 = vmatpush2.bf16.msra.mxu0 0
        %1897 = vmatprep.subr.bf16.mxu0 0
        %1898 = vmatpush2.bf16.msra.mxu0 0
        %1899 = vmatprep.subr.bf16.mxu0 0
        %1900 = vmatpush2.bf16.msra.mxu0 0
        %1901 = vmatprep.subr.bf16.mxu0 0
        %1902 = vmatpush2.bf16.msra.mxu0 0
        %1903 = vmatprep.subr.bf16.mxu0 0
        %1904 = vmatpush2.bf16.msra.mxu0 0
        %1905 = vmatprep.subr.bf16.mxu0 0
        %1906 = vmatpush2.bf16.msra.mxu0 0
        %1907 = vmatprep.subr.bf16.mxu0 0
        %1908 = vmatpush2.bf16.msra.mxu0 0
        %1909 = vmatprep.mubr.bf16.mxu0 0
        %1910 = vmatmul.mubr.bf16.gmra.mxu0 %v1875
        %v1911 = vpop.f32.mrf.mxu0
        %v1912 = vadd.f32 %v1505, %v1911
        %v1913 = vpop.f32.mrf.mxu0
        %v1914 = vpop.f32.mrf.mxu0
        %v1915 = vadd.f32 %v1506, %v1914
        %v1916 = vpop.f32.mrf.mxu0
        %1917 = vdwg.mxu0
        %v1919 = vsel %vm1521, %v1136, 0
        %1921 = vmatprep.subr.bf16.mxu0 0
        %1922 = vmatpush1.bf16.msra.mxu0 0
        %1923 = vmatprep.subr.bf16.mxu0 0
        %1924 = vmatpush1.bf16.msra.mxu0 0
        %1925 = vmatprep.subr.bf16.mxu0 0
        %1926 = vmatpush1.bf16.msra.mxu0 0
        %1927 = vmatprep.subr.bf16.mxu0 0
        %1928 = vmatpush1.bf16.msra.mxu0 0
        %1929 = vmatprep.subr.bf16.mxu0 0
        %1930 = vmatpush1.bf16.msra.mxu0 0
        %1931 = vmatprep.subr.bf16.mxu0 0
        %1932 = vmatpush1.bf16.msra.mxu0 0
        %1933 = vmatprep.subr.bf16.mxu0 0
        %1934 = vmatpush1.bf16.msra.mxu0 %v1283
        %1935 = vmatprep.subr.bf16.mxu0 0
        %1936 = vmatpush1.bf16.msra.mxu0 %v1282
        %1937 = vmatprep.subr.bf16.mxu0 0
        %1938 = vmatpush2.bf16.msra.mxu0 0
        %1939 = vmatprep.subr.bf16.mxu0 0
        %1940 = vmatpush2.bf16.msra.mxu0 0
        %1941 = vmatprep.subr.bf16.mxu0 0
        %1942 = vmatpush2.bf16.msra.mxu0 0
        %1943 = vmatprep.subr.bf16.mxu0 0
        %1944 = vmatpush2.bf16.msra.mxu0 0
        %1945 = vmatprep.subr.bf16.mxu0 0
        %1946 = vmatpush2.bf16.msra.mxu0 0
        %1947 = vmatprep.subr.bf16.mxu0 0
        %1948 = vmatpush2.bf16.msra.mxu0 0
        %1949 = vmatprep.subr.bf16.mxu0 0
        %1950 = vmatpush2.bf16.msra.mxu0 0
        %1951 = vmatprep.subr.bf16.mxu0 0
        %1952 = vmatpush2.bf16.msra.mxu0 0
        %1953 = vmatprep.mubr.bf16.mxu0 0
        %1954 = vmatmul.mubr.bf16.gmra.mxu0 %v1919
        %v1955 = vpop.f32.mrf.mxu0
        %v1956 = vadd.f32 %v1507, %v1955
        %v1957 = vpop.f32.mrf.mxu0
        %v1958 = vpop.f32.mrf.mxu0
        %v1959 = vadd.f32 %v1508, %v1958
        %v1960 = vpop.f32.mrf.mxu0
        %1961 = vdwg.mxu0
        %v1963 = vsel %vm1521, %v1152, 0
        %1965 = vmatprep.subr.bf16.mxu0 0
        %1966 = vmatpush1.bf16.msra.mxu0 0
        %1967 = vmatprep.subr.bf16.mxu0 0
        %1968 = vmatpush1.bf16.msra.mxu0 0
        %1969 = vmatprep.subr.bf16.mxu0 0
        %1970 = vmatpush1.bf16.msra.mxu0 0
        %1971 = vmatprep.subr.bf16.mxu0 0
        %1972 = vmatpush1.bf16.msra.mxu0 0
        %1973 = vmatprep.subr.bf16.mxu0 0
        %1974 = vmatpush1.bf16.msra.mxu0 0
        %1975 = vmatprep.subr.bf16.mxu0 0
        %1976 = vmatpush1.bf16.msra.mxu0 0
        %1977 = vmatprep.subr.bf16.mxu0 0
        %1978 = vmatpush1.bf16.msra.mxu0 %v1285
        %1979 = vmatprep.subr.bf16.mxu0 0
        %1980 = vmatpush1.bf16.msra.mxu0 %v1284
        %1981 = vmatprep.subr.bf16.mxu0 0
        %1982 = vmatpush2.bf16.msra.mxu0 0
        %1983 = vmatprep.subr.bf16.mxu0 0
        %1984 = vmatpush2.bf16.msra.mxu0 0
        %1985 = vmatprep.subr.bf16.mxu0 0
        %1986 = vmatpush2.bf16.msra.mxu0 0
        %1987 = vmatprep.subr.bf16.mxu0 0
        %1988 = vmatpush2.bf16.msra.mxu0 0
        %1989 = vmatprep.subr.bf16.mxu0 0
        %1990 = vmatpush2.bf16.msra.mxu0 0
        %1991 = vmatprep.subr.bf16.mxu0 0
        %1992 = vmatpush2.bf16.msra.mxu0 0
        %1993 = vmatprep.subr.bf16.mxu0 0
        %1994 = vmatpush2.bf16.msra.mxu0 0
        %1995 = vmatprep.subr.bf16.mxu0 0
        %1996 = vmatpush2.bf16.msra.mxu0 0
        %1997 = vmatprep.mubr.bf16.mxu0 0
        %1998 = vmatmul.mubr.bf16.gmra.mxu0 %v1963
        %v1999 = vpop.f32.mrf.mxu0
        %v2000 = vadd.f32 %v1509, %v1999
        %v2001 = vpop.f32.mrf.mxu0
        %v2002 = vpop.f32.mrf.mxu0
        %v2003 = vadd.f32 %v1510, %v2002
        %v2004 = vpop.f32.mrf.mxu0
        %2005 = vdwg.mxu0
        %v2007 = vsel %vm1521, %v1168, 0
        %2009 = vmatprep.subr.bf16.mxu0 0
        %2010 = vmatpush1.bf16.msra.mxu0 0
        %2011 = vmatprep.subr.bf16.mxu0 0
        %2012 = vmatpush1.bf16.msra.mxu0 0
        %2013 = vmatprep.subr.bf16.mxu0 0
        %2014 = vmatpush1.bf16.msra.mxu0 0
        %2015 = vmatprep.subr.bf16.mxu0 0
        %2016 = vmatpush1.bf16.msra.mxu0 0
        %2017 = vmatprep.subr.bf16.mxu0 0
        %2018 = vmatpush1.bf16.msra.mxu0 0
        %2019 = vmatprep.subr.bf16.mxu0 0
        %2020 = vmatpush1.bf16.msra.mxu0 0
        %2021 = vmatprep.subr.bf16.mxu0 0
        %2022 = vmatpush1.bf16.msra.mxu0 %v1287
        %2023 = vmatprep.subr.bf16.mxu0 0
        %2024 = vmatpush1.bf16.msra.mxu0 %v1286
        %2025 = vmatprep.subr.bf16.mxu0 0
        %2026 = vmatpush2.bf16.msra.mxu0 0
        %2027 = vmatprep.subr.bf16.mxu0 0
        %2028 = vmatpush2.bf16.msra.mxu0 0
        %2029 = vmatprep.subr.bf16.mxu0 0
        %2030 = vmatpush2.bf16.msra.mxu0 0
        %2031 = vmatprep.subr.bf16.mxu0 0
        %2032 = vmatpush2.bf16.msra.mxu0 0
        %2033 = vmatprep.subr.bf16.mxu0 0
        %2034 = vmatpush2.bf16.msra.mxu0 0
        %2035 = vmatprep.subr.bf16.mxu0 0
        %2036 = vmatpush2.bf16.msra.mxu0 0
        %2037 = vmatprep.subr.bf16.mxu0 0
        %2038 = vmatpush2.bf16.msra.mxu0 0
        %2039 = vmatprep.subr.bf16.mxu0 0
        %2040 = vmatpush2.bf16.msra.mxu0 0
        %2041 = vmatprep.mubr.bf16.mxu0 0
        %2042 = vmatmul.mubr.bf16.gmra.mxu0 %v2007
        %v2043 = vpop.f32.mrf.mxu0
        %v2044 = vadd.f32 %v1511, %v2043
        %v2045 = vpop.f32.mrf.mxu0
        %v2046 = vpop.f32.mrf.mxu0
        %v2047 = vadd.f32 %v1512, %v2046
        %v2048 = vpop.f32.mrf.mxu0
        %2049 = vdwg.mxu0
        %v2051 = vsel %vm1521, %v1184, 0
        %2053 = vmatprep.subr.bf16.mxu0 0
        %2054 = vmatpush1.bf16.msra.mxu0 0
        %2055 = vmatprep.subr.bf16.mxu0 0
        %2056 = vmatpush1.bf16.msra.mxu0 0
        %2057 = vmatprep.subr.bf16.mxu0 0
        %2058 = vmatpush1.bf16.msra.mxu0 0
        %2059 = vmatprep.subr.bf16.mxu0 0
        %2060 = vmatpush1.bf16.msra.mxu0 0
        %2061 = vmatprep.subr.bf16.mxu0 0
        %2062 = vmatpush1.bf16.msra.mxu0 0
        %2063 = vmatprep.subr.bf16.mxu0 0
        %2064 = vmatpush1.bf16.msra.mxu0 0
        %2065 = vmatprep.subr.bf16.mxu0 0
        %2066 = vmatpush1.bf16.msra.mxu0 %v1297
        %2067 = vmatprep.subr.bf16.mxu0 0
        %2068 = vmatpush1.bf16.msra.mxu0 %v1296
        %2069 = vmatprep.subr.bf16.mxu0 0
        %2070 = vmatpush2.bf16.msra.mxu0 0
        %2071 = vmatprep.subr.bf16.mxu0 0
        %2072 = vmatpush2.bf16.msra.mxu0 0
        %2073 = vmatprep.subr.bf16.mxu0 0
        %2074 = vmatpush2.bf16.msra.mxu0 0
        %2075 = vmatprep.subr.bf16.mxu0 0
        %2076 = vmatpush2.bf16.msra.mxu0 0
        %2077 = vmatprep.subr.bf16.mxu0 0
        %2078 = vmatpush2.bf16.msra.mxu0 0
        %2079 = vmatprep.subr.bf16.mxu0 0
        %2080 = vmatpush2.bf16.msra.mxu0 0
        %2081 = vmatprep.subr.bf16.mxu0 0
        %2082 = vmatpush2.bf16.msra.mxu0 0
        %2083 = vmatprep.subr.bf16.mxu0 0
        %2084 = vmatpush2.bf16.msra.mxu0 0
        %2085 = vmatprep.mubr.bf16.mxu0 0
        %2086 = vmatmul.mubr.bf16.gmra.mxu0 %v2051
        %v2087 = vpop.f32.mrf.mxu0
        %v2088 = vadd.f32 %v1513, %v2087
        %v2089 = vpop.f32.mrf.mxu0
        %v2090 = vpop.f32.mrf.mxu0
        %v2091 = vadd.f32 %v1514, %v2090
        %v2092 = vpop.f32.mrf.mxu0
        %2093 = vdwg.mxu0
        %v2095 = vsel %vm1521, %v1200, 0
        %2097 = vmatprep.subr.bf16.mxu0 0
        %2098 = vmatpush1.bf16.msra.mxu0 0
        %2099 = vmatprep.subr.bf16.mxu0 0
        %2100 = vmatpush1.bf16.msra.mxu0 0
        %2101 = vmatprep.subr.bf16.mxu0 0
        %2102 = vmatpush1.bf16.msra.mxu0 0
        %2103 = vmatprep.subr.bf16.mxu0 0
        %2104 = vmatpush1.bf16.msra.mxu0 0
        %2105 = vmatprep.subr.bf16.mxu0 0
        %2106 = vmatpush1.bf16.msra.mxu0 0
        %2107 = vmatprep.subr.bf16.mxu0 0
        %2108 = vmatpush1.bf16.msra.mxu0 0
        %2109 = vmatprep.subr.bf16.mxu0 0
        %2110 = vmatpush1.bf16.msra.mxu0 %v1299
        %2111 = vmatprep.subr.bf16.mxu0 0
        %2112 = vmatpush1.bf16.msra.mxu0 %v1298
        %2113 = vmatprep.subr.bf16.mxu0 0
        %2114 = vmatpush2.bf16.msra.mxu0 0
        %2115 = vmatprep.subr.bf16.mxu0 0
        %2116 = vmatpush2.bf16.msra.mxu0 0
        %2117 = vmatprep.subr.bf16.mxu0 0
        %2118 = vmatpush2.bf16.msra.mxu0 0
        %2119 = vmatprep.subr.bf16.mxu0 0
        %2120 = vmatpush2.bf16.msra.mxu0 0
        %2121 = vmatprep.subr.bf16.mxu0 0
        %2122 = vmatpush2.bf16.msra.mxu0 0
        %2123 = vmatprep.subr.bf16.mxu0 0
        %2124 = vmatpush2.bf16.msra.mxu0 0
        %2125 = vmatprep.subr.bf16.mxu0 0
        %2126 = vmatpush2.bf16.msra.mxu0 0
        %2127 = vmatprep.subr.bf16.mxu0 0
        %2128 = vmatpush2.bf16.msra.mxu0 0
        %2129 = vmatprep.mubr.bf16.mxu0 0
        %2130 = vmatmul.mubr.bf16.gmra.mxu0 %v2095
        %v2131 = vpop.f32.mrf.mxu0
        %v2132 = vadd.f32 %v1515, %v2131
        %v2133 = vpop.f32.mrf.mxu0
        %v2134 = vpop.f32.mrf.mxu0
        %v2135 = vadd.f32 %v1516, %v2134
        %v2136 = vpop.f32.mrf.mxu0
        %2137 = vdwg.mxu0
        %v2139 = vsel %vm1521, %v1216, 0
        %2141 = vmatprep.subr.bf16.mxu0 0
        %2142 = vmatpush1.bf16.msra.mxu0 0
        %2143 = vmatprep.subr.bf16.mxu0 0
        %2144 = vmatpush1.bf16.msra.mxu0 0
        %2145 = vmatprep.subr.bf16.mxu0 0
        %2146 = vmatpush1.bf16.msra.mxu0 0
        %2147 = vmatprep.subr.bf16.mxu0 0
        %2148 = vmatpush1.bf16.msra.mxu0 0
        %2149 = vmatprep.subr.bf16.mxu0 0
        %2150 = vmatpush1.bf16.msra.mxu0 0
        %2151 = vmatprep.subr.bf16.mxu0 0
        %2152 = vmatpush1.bf16.msra.mxu0 0
        %2153 = vmatprep.subr.bf16.mxu0 0
        %2154 = vmatpush1.bf16.msra.mxu0 %v1301
        %2155 = vmatprep.subr.bf16.mxu0 0
        %2156 = vmatpush1.bf16.msra.mxu0 %v1300
        %2157 = vmatprep.subr.bf16.mxu0 0
        %2158 = vmatpush2.bf16.msra.mxu0 0
        %2159 = vmatprep.subr.bf16.mxu0 0
        %2160 = vmatpush2.bf16.msra.mxu0 0
        %2161 = vmatprep.subr.bf16.mxu0 0
        %2162 = vmatpush2.bf16.msra.mxu0 0
        %2163 = vmatprep.subr.bf16.mxu0 0
        %2164 = vmatpush2.bf16.msra.mxu0 0
        %2165 = vmatprep.subr.bf16.mxu0 0
        %2166 = vmatpush2.bf16.msra.mxu0 0
        %2167 = vmatprep.subr.bf16.mxu0 0
        %2168 = vmatpush2.bf16.msra.mxu0 0
        %2169 = vmatprep.subr.bf16.mxu0 0
        %2170 = vmatpush2.bf16.msra.mxu0 0
        %2171 = vmatprep.subr.bf16.mxu0 0
        %2172 = vmatpush2.bf16.msra.mxu0 0
        %2173 = vmatprep.mubr.bf16.mxu0 0
        %2174 = vmatmul.mubr.bf16.gmra.mxu0 %v2139
        %v2175 = vpop.f32.mrf.mxu0
        %v2176 = vadd.f32 %v1517, %v2175
        %v2177 = vpop.f32.mrf.mxu0
        %v2178 = vpop.f32.mrf.mxu0
        %v2179 = vadd.f32 %v1518, %v2178
        %v2180 = vpop.f32.mrf.mxu0
        %2181 = vdwg.mxu0
        %v2183 = vsel %vm1521, %v1232, 0
        %2185 = vmatprep.subr.bf16.mxu0 0
        %2186 = vmatpush1.bf16.msra.mxu0 0
        %2187 = vmatprep.subr.bf16.mxu0 0
        %2188 = vmatpush1.bf16.msra.mxu0 0
        %2189 = vmatprep.subr.bf16.mxu0 0
        %2190 = vmatpush1.bf16.msra.mxu0 0
        %2191 = vmatprep.subr.bf16.mxu0 0
        %2192 = vmatpush1.bf16.msra.mxu0 0
        %2193 = vmatprep.subr.bf16.mxu0 0
        %2194 = vmatpush1.bf16.msra.mxu0 0
        %2195 = vmatprep.subr.bf16.mxu0 0
        %2196 = vmatpush1.bf16.msra.mxu0 0
        %2197 = vmatprep.subr.bf16.mxu0 0
        %2198 = vmatpush1.bf16.msra.mxu0 %v1303
        %2199 = vmatprep.subr.bf16.mxu0 0
        %2200 = vmatpush1.bf16.msra.mxu0 %v1302
        %2201 = vmatprep.subr.bf16.mxu0 0
        %2202 = vmatpush2.bf16.msra.mxu0 0
        %2203 = vmatprep.subr.bf16.mxu0 0
        %2204 = vmatpush2.bf16.msra.mxu0 0
        %2205 = vmatprep.subr.bf16.mxu0 0
        %2206 = vmatpush2.bf16.msra.mxu0 0
        %2207 = vmatprep.subr.bf16.mxu0 0
        %2208 = vmatpush2.bf16.msra.mxu0 0
        %2209 = vmatprep.subr.bf16.mxu0 0
        %2210 = vmatpush2.bf16.msra.mxu0 0
        %2211 = vmatprep.subr.bf16.mxu0 0
        %2212 = vmatpush2.bf16.msra.mxu0 0
        %2213 = vmatprep.subr.bf16.mxu0 0
        %2214 = vmatpush2.bf16.msra.mxu0 0
        %2215 = vmatprep.subr.bf16.mxu0 0
        %2216 = vmatpush2.bf16.msra.mxu0 0
        %2217 = vmatprep.mubr.bf16.mxu0 0
        %2218 = vmatmul.mubr.bf16.gmra.mxu0 %v2183
        %v2219 = vpop.f32.mrf.mxu0
        %v2220 = vadd.f32 %v1519, %v2219
        %v2221 = vpop.f32.mrf.mxu0
        %v2222 = vpop.f32.mrf.mxu0
        %v2223 = vadd.f32 %v1520, %v2222
        %v2224 = vpop.f32.mrf.mxu0
        %2225 = vdwg.mxu0
        %vm2226 = vcmask 130048
        %v2227 = vsel %vm2226, %v1560, -inf
        %2228 = vmax.xlane.f32.xlu0 %v2227
        %v2229 = vpop.xlane.xlu0 %2228
        %v2230 = vsel %vm2226, %v1563, -inf
        %2231 = vmax.xlane.f32.xlu0 %v2230
        %v2232 = vpop.xlane.xlu0 %2231
        %v2233 = vsel %vm2226, %v1604, -inf
        %2234 = vmax.xlane.f32.xlu0 %v2233
        %v2235 = vpop.xlane.xlu0 %2234
        %v2236 = vsel %vm2226, %v1607, -inf
        %2237 = vmax.xlane.f32.xlu0 %v2236
        %v2238 = vpop.xlane.xlu0 %2237
        %v2239 = vsel %vm2226, %v1648, -inf
        %2240 = vmax.xlane.f32.xlu0 %v2239
        %v2241 = vpop.xlane.xlu0 %2240
        %v2242 = vsel %vm2226, %v1651, -inf
        %2243 = vmax.xlane.f32.xlu0 %v2242
        %v2244 = vpop.xlane.xlu0 %2243
        %v2245 = vsel %vm2226, %v1692, -inf
        %2246 = vmax.xlane.f32.xlu0 %v2245
        %v2247 = vpop.xlane.xlu0 %2246
        %v2248 = vsel %vm2226, %v1695, -inf
        %2249 = vmax.xlane.f32.xlu0 %v2248
        %v2250 = vpop.xlane.xlu0 %2249
        %v2251 = vsel %vm2226, %v1736, -inf
        %2252 = vmax.xlane.f32.xlu0 %v2251
        %v2253 = vpop.xlane.xlu0 %2252
        %v2254 = vsel %vm2226, %v1739, -inf
        %2255 = vmax.xlane.f32.xlu0 %v2254
        %v2256 = vpop.xlane.xlu0 %2255
        %v2257 = vsel %vm2226, %v1780, -inf
        %2258 = vmax.xlane.f32.xlu0 %v2257
        %v2259 = vpop.xlane.xlu0 %2258
        %v2260 = vsel %vm2226, %v1783, -inf
        %2261 = vmax.xlane.f32.xlu0 %v2260
        %v2262 = vpop.xlane.xlu0 %2261
        %v2263 = vsel %vm2226, %v1824, -inf
        %2264 = vmax.xlane.f32.xlu0 %v2263
        %v2265 = vpop.xlane.xlu0 %2264
        %v2266 = vsel %vm2226, %v1827, -inf
        %2267 = vmax.xlane.f32.xlu0 %v2266
        %v2268 = vpop.xlane.xlu0 %2267
        %v2269 = vsel %vm2226, %v1868, -inf
        %2270 = vmax.xlane.f32.xlu0 %v2269
        %v2271 = vpop.xlane.xlu0 %2270
        %v2272 = vsel %vm2226, %v1871, -inf
        %2273 = vmax.xlane.f32.xlu0 %v2272
        %v2274 = vpop.xlane.xlu0 %2273
        %v2275 = vsel %vm2226, %v1912, -inf
        %2276 = vmax.xlane.f32.xlu0 %v2275
        %v2277 = vpop.xlane.xlu0 %2276
        %v2278 = vsel %vm2226, %v1915, -inf
        %2279 = vmax.xlane.f32.xlu0 %v2278
        %v2280 = vpop.xlane.xlu0 %2279
        %v2281 = vsel %vm2226, %v1956, -inf
        %2282 = vmax.xlane.f32.xlu0 %v2281
        %v2283 = vpop.xlane.xlu0 %2282
        %v2284 = vsel %vm2226, %v1959, -inf
        %2285 = vmax.xlane.f32.xlu0 %v2284
        %v2286 = vpop.xlane.xlu0 %2285
        %v2287 = vsel %vm2226, %v2000, -inf
        %2288 = vmax.xlane.f32.xlu0 %v2287
        %v2289 = vpop.xlane.xlu0 %2288
        %v2290 = vsel %vm2226, %v2003, -inf
        %2291 = vmax.xlane.f32.xlu0 %v2290
        %v2292 = vpop.xlane.xlu0 %2291
        %v2293 = vsel %vm2226, %v2044, -inf
        %2294 = vmax.xlane.f32.xlu0 %v2293
        %v2295 = vpop.xlane.xlu0 %2294
        %v2296 = vsel %vm2226, %v2047, -inf
        %2297 = vmax.xlane.f32.xlu0 %v2296
        %v2298 = vpop.xlane.xlu0 %2297
        %v2299 = vsel %vm2226, %v2088, -inf
        %2300 = vmax.xlane.f32.xlu0 %v2299
        %v2301 = vpop.xlane.xlu0 %2300
        %v2302 = vsel %vm2226, %v2091, -inf
        %2303 = vmax.xlane.f32.xlu0 %v2302
        %v2304 = vpop.xlane.xlu0 %2303
        %v2305 = vsel %vm2226, %v2132, -inf
        %2306 = vmax.xlane.f32.xlu0 %v2305
        %v2307 = vpop.xlane.xlu0 %2306
        %v2308 = vsel %vm2226, %v2135, -inf
        %2309 = vmax.xlane.f32.xlu0 %v2308
        %v2310 = vpop.xlane.xlu0 %2309
        %v2311 = vsel %vm2226, %v2176, -inf
        %2312 = vmax.xlane.f32.xlu0 %v2311
        %v2313 = vpop.xlane.xlu0 %2312
        %v2314 = vsel %vm2226, %v2179, -inf
        %2315 = vmax.xlane.f32.xlu0 %v2314
        %v2316 = vpop.xlane.xlu0 %2315
        %v2317 = vsel %vm2226, %v2220, -inf
        %2318 = vmax.xlane.f32.xlu0 %v2317
        %v2319 = vpop.xlane.xlu0 %2318
        %v2320 = vsel %vm2226, %v2223, -inf
        %2321 = vmax.xlane.f32.xlu0 %v2320
        %v2322 = vpop.xlane.xlu0 %2321
        %v2323 = vsub.f32 %v1560, %v2229
        %v2324 = vsub.f32 %v1563, %v2232
        %v2325 = vsub.f32 %v1604, %v2235
        %v2326 = vsub.f32 %v1607, %v2238
        %v2327 = vsub.f32 %v1648, %v2241
        %v2328 = vsub.f32 %v1651, %v2244
        %v2329 = vsub.f32 %v1692, %v2247
        %v2330 = vsub.f32 %v1695, %v2250
        %v2331 = vsub.f32 %v1736, %v2253
        %v2332 = vsub.f32 %v1739, %v2256
        %v2333 = vsub.f32 %v1780, %v2259
        %v2334 = vsub.f32 %v1783, %v2262
        %v2335 = vsub.f32 %v1824, %v2265
        %v2336 = vsub.f32 %v1827, %v2268
        %v2337 = vsub.f32 %v1868, %v2271
        %v2338 = vsub.f32 %v1871, %v2274
        %v2339 = vsub.f32 %v1912, %v2277
        %v2340 = vsub.f32 %v1915, %v2280
        %v2341 = vsub.f32 %v1956, %v2283
        %v2342 = vsub.f32 %v1959, %v2286
        %v2343 = vsub.f32 %v2000, %v2289
        %v2344 = vsub.f32 %v2003, %v2292
        %v2345 = vsub.f32 %v2044, %v2295
        %v2346 = vsub.f32 %v2047, %v2298
        %v2347 = vsub.f32 %v2088, %v2301
        %v2348 = vsub.f32 %v2091, %v2304
        %v2349 = vsub.f32 %v2132, %v2307
        %v2350 = vsub.f32 %v2135, %v2310
        %v2351 = vsub.f32 %v2176, %v2313
        %v2352 = vsub.f32 %v2179, %v2316
        %v2353 = vsub.f32 %v2220, %v2319
        %v2354 = vsub.f32 %v2223, %v2322
        %v2355 = vmul.f32 %v2323, 1.442695
        %v2356 = vpow.pop %v2355
        %v2357 = vmul.f32 %v2324, 1.442695
        %v2358 = vpow.pop %v2357
        %v2359 = vmul.f32 %v2325, 1.442695
        %v2360 = vpow.pop %v2359
        %v2361 = vmul.f32 %v2326, 1.442695
        %v2362 = vpow.pop %v2361
        %v2363 = vmul.f32 %v2327, 1.442695
        %v2364 = vpow.pop %v2363
        %v2365 = vmul.f32 %v2328, 1.442695
        %v2366 = vpow.pop %v2365
        %v2367 = vmul.f32 %v2329, 1.442695
        %v2368 = vpow.pop %v2367
        %v2369 = vmul.f32 %v2330, 1.442695
        %v2370 = vpow.pop %v2369
        %v2371 = vmul.f32 %v2331, 1.442695
        %v2372 = vpow.pop %v2371
        %v2373 = vmul.f32 %v2332, 1.442695
        %v2374 = vpow.pop %v2373
        %v2375 = vmul.f32 %v2333, 1.442695
        %v2376 = vpow.pop %v2375
        %v2377 = vmul.f32 %v2334, 1.442695
        %v2378 = vpow.pop %v2377
        %v2379 = vmul.f32 %v2335, 1.442695
        %v2380 = vpow.pop %v2379
        %v2381 = vmul.f32 %v2336, 1.442695
        %v2382 = vpow.pop %v2381
        %v2383 = vmul.f32 %v2337, 1.442695
        %v2384 = vpow.pop %v2383
        %v2385 = vmul.f32 %v2338, 1.442695
        %v2386 = vpow.pop %v2385
        %v2387 = vmul.f32 %v2339, 1.442695
        %v2388 = vpow.pop %v2387
        %v2389 = vmul.f32 %v2340, 1.442695
        %v2390 = vpow.pop %v2389
        %v2391 = vmul.f32 %v2341, 1.442695
        %v2392 = vpow.pop %v2391
        %v2393 = vmul.f32 %v2342, 1.442695
        %v2394 = vpow.pop %v2393
        %v2395 = vmul.f32 %v2343, 1.442695
        %v2396 = vpow.pop %v2395
        %v2397 = vmul.f32 %v2344, 1.442695
        %v2398 = vpow.pop %v2397
        %v2399 = vmul.f32 %v2345, 1.442695
        %v2400 = vpow.pop %v2399
        %v2401 = vmul.f32 %v2346, 1.442695
        %v2402 = vpow.pop %v2401
        %v2403 = vmul.f32 %v2347, 1.442695
        %v2404 = vpow.pop %v2403
        %v2405 = vmul.f32 %v2348, 1.442695
        %v2406 = vpow.pop %v2405
        %v2407 = vmul.f32 %v2349, 1.442695
        %v2408 = vpow.pop %v2407
        %v2409 = vmul.f32 %v2350, 1.442695
        %v2410 = vpow.pop %v2409
        %v2411 = vmul.f32 %v2351, 1.442695
        %v2412 = vpow.pop %v2411
        %v2413 = vmul.f32 %v2352, 1.442695
        %v2414 = vpow.pop %v2413
        %v2415 = vmul.f32 %v2353, 1.442695
        %v2416 = vpow.pop %v2415
        %v2417 = vmul.f32 %v2354, 1.442695
        %v2418 = vpow.pop %v2417
        %v2419 = vsel %vm2226, %v2356, 0.0
        %2420 = vadd.xlane.f32.xlu0 %v2419
        %v2421 = vpop.xlane.xlu0 %2420
        %v2422 = vsel %vm2226, %v2358, 0.0
        %2423 = vadd.xlane.f32.xlu0 %v2422
        %v2424 = vpop.xlane.xlu0 %2423
        %v2425 = vsel %vm2226, %v2360, 0.0
        %2426 = vadd.xlane.f32.xlu0 %v2425
        %v2427 = vpop.xlane.xlu0 %2426
        %v2428 = vsel %vm2226, %v2362, 0.0
        %2429 = vadd.xlane.f32.xlu0 %v2428
        %v2430 = vpop.xlane.xlu0 %2429
        %v2431 = vsel %vm2226, %v2364, 0.0
        %2432 = vadd.xlane.f32.xlu0 %v2431
        %v2433 = vpop.xlane.xlu0 %2432
        %v2434 = vsel %vm2226, %v2366, 0.0
        %2435 = vadd.xlane.f32.xlu0 %v2434
        %v2436 = vpop.xlane.xlu0 %2435
        %v2437 = vsel %vm2226, %v2368, 0.0
        %2438 = vadd.xlane.f32.xlu0 %v2437
        %v2439 = vpop.xlane.xlu0 %2438
        %v2440 = vsel %vm2226, %v2370, 0.0
        %2441 = vadd.xlane.f32.xlu0 %v2440
        %v2442 = vpop.xlane.xlu0 %2441
        %v2443 = vsel %vm2226, %v2372, 0.0
        %2444 = vadd.xlane.f32.xlu0 %v2443
        %v2445 = vpop.xlane.xlu0 %2444
        %v2446 = vsel %vm2226, %v2374, 0.0
        %2447 = vadd.xlane.f32.xlu0 %v2446
        %v2448 = vpop.xlane.xlu0 %2447
        %v2449 = vsel %vm2226, %v2376, 0.0
        %2450 = vadd.xlane.f32.xlu0 %v2449
        %v2451 = vpop.xlane.xlu0 %2450
        %v2452 = vsel %vm2226, %v2378, 0.0
        %2453 = vadd.xlane.f32.xlu0 %v2452
        %v2454 = vpop.xlane.xlu0 %2453
        %v2455 = vsel %vm2226, %v2380, 0.0
        %2456 = vadd.xlane.f32.xlu0 %v2455
        %v2457 = vpop.xlane.xlu0 %2456
        %v2458 = vsel %vm2226, %v2382, 0.0
        %2459 = vadd.xlane.f32.xlu0 %v2458
        %v2460 = vpop.xlane.xlu0 %2459
        %v2461 = vsel %vm2226, %v2384, 0.0
        %2462 = vadd.xlane.f32.xlu0 %v2461
        %v2463 = vpop.xlane.xlu0 %2462
        %v2464 = vsel %vm2226, %v2386, 0.0
        %2465 = vadd.xlane.f32.xlu0 %v2464
        %v2466 = vpop.xlane.xlu0 %2465
        %v2467 = vsel %vm2226, %v2388, 0.0
        %2468 = vadd.xlane.f32.xlu0 %v2467
        %v2469 = vpop.xlane.xlu0 %2468
        %v2470 = vsel %vm2226, %v2390, 0.0
        %2471 = vadd.xlane.f32.xlu0 %v2470
        %v2472 = vpop.xlane.xlu0 %2471
        %v2473 = vsel %vm2226, %v2392, 0.0
        %2474 = vadd.xlane.f32.xlu0 %v2473
        %v2475 = vpop.xlane.xlu0 %2474
        %v2476 = vsel %vm2226, %v2394, 0.0
        %2477 = vadd.xlane.f32.xlu0 %v2476
        %v2478 = vpop.xlane.xlu0 %2477
        %v2479 = vsel %vm2226, %v2396, 0.0
        %2480 = vadd.xlane.f32.xlu0 %v2479
        %v2481 = vpop.xlane.xlu0 %2480
        %v2482 = vsel %vm2226, %v2398, 0.0
        %2483 = vadd.xlane.f32.xlu0 %v2482
        %v2484 = vpop.xlane.xlu0 %2483
        %v2485 = vsel %vm2226, %v2400, 0.0
        %2486 = vadd.xlane.f32.xlu0 %v2485
        %v2487 = vpop.xlane.xlu0 %2486
        %v2488 = vsel %vm2226, %v2402, 0.0
        %2489 = vadd.xlane.f32.xlu0 %v2488
        %v2490 = vpop.xlane.xlu0 %2489
        %v2491 = vsel %vm2226, %v2404, 0.0
        %2492 = vadd.xlane.f32.xlu0 %v2491
        %v2493 = vpop.xlane.xlu0 %2492
        %v2494 = vsel %vm2226, %v2406, 0.0
        %2495 = vadd.xlane.f32.xlu0 %v2494
        %v2496 = vpop.xlane.xlu0 %2495
        %v2497 = vsel %vm2226, %v2408, 0.0
        %2498 = vadd.xlane.f32.xlu0 %v2497
        %v2499 = vpop.xlane.xlu0 %2498
        %v2500 = vsel %vm2226, %v2410, 0.0
        %2501 = vadd.xlane.f32.xlu0 %v2500
        %v2502 = vpop.xlane.xlu0 %2501
        %v2503 = vsel %vm2226, %v2412, 0.0
        %2504 = vadd.xlane.f32.xlu0 %v2503
        %v2505 = vpop.xlane.xlu0 %2504
        %v2506 = vsel %vm2226, %v2414, 0.0
        %2507 = vadd.xlane.f32.xlu0 %v2506
        %v2508 = vpop.xlane.xlu0 %2507
        %v2509 = vsel %vm2226, %v2416, 0.0
        %2510 = vadd.xlane.f32.xlu0 %v2509
        %v2511 = vpop.xlane.xlu0 %2510
        %v2512 = vsel %vm2226, %v2418, 0.0
        %2513 = vadd.xlane.f32.xlu0 %v2512
        %v2514 = vpop.xlane.xlu0 %2513
        %v2515 = vrcp.pop %v2421
        %v2516 = vrcp.pop %v2424
        %v2517 = vrcp.pop %v2427
        %v2518 = vrcp.pop %v2430
        %v2519 = vrcp.pop %v2433
        %v2520 = vrcp.pop %v2436
        %v2521 = vrcp.pop %v2439
        %v2522 = vrcp.pop %v2442
        %v2523 = vrcp.pop %v2445
        %v2524 = vrcp.pop %v2448
        %v2525 = vrcp.pop %v2451
        %v2526 = vrcp.pop %v2454
        %v2527 = vrcp.pop %v2457
        %v2528 = vrcp.pop %v2460
        %v2529 = vrcp.pop %v2463
        %v2530 = vrcp.pop %v2466
        %v2531 = vrcp.pop %v2469
        %v2532 = vrcp.pop %v2472
        %v2533 = vrcp.pop %v2475
        %v2534 = vrcp.pop %v2478
        %v2535 = vrcp.pop %v2481
        %v2536 = vrcp.pop %v2484
        %v2537 = vrcp.pop %v2487
        %v2538 = vrcp.pop %v2490
        %v2539 = vrcp.pop %v2493
        %v2540 = vrcp.pop %v2496
        %v2541 = vrcp.pop %v2499
        %v2542 = vrcp.pop %v2502
        %v2543 = vrcp.pop %v2505
        %v2544 = vrcp.pop %v2508
        %v2545 = vrcp.pop %v2511
        %v2546 = vrcp.pop %v2514
        %v2547 = vmul.f32 %v2356, %v2515
        %v2548 = vmul.f32 %v2358, %v2516
        %v2549 = vmul.f32 %v2360, %v2517
        %v2550 = vmul.f32 %v2362, %v2518
        %v2551 = vmul.f32 %v2364, %v2519
        %v2552 = vmul.f32 %v2366, %v2520
        %v2553 = vmul.f32 %v2368, %v2521
        %v2554 = vmul.f32 %v2370, %v2522
        %v2555 = vmul.f32 %v2372, %v2523
        %v2556 = vmul.f32 %v2374, %v2524
        %v2557 = vmul.f32 %v2376, %v2525
        %v2558 = vmul.f32 %v2378, %v2526
        %v2559 = vmul.f32 %v2380, %v2527
        %v2560 = vmul.f32 %v2382, %v2528
        %v2561 = vmul.f32 %v2384, %v2529
        %v2562 = vmul.f32 %v2386, %v2530
        %v2563 = vmul.f32 %v2388, %v2531
        %v2564 = vmul.f32 %v2390, %v2532
        %v2565 = vmul.f32 %v2392, %v2533
        %v2566 = vmul.f32 %v2394, %v2534
        %v2567 = vmul.f32 %v2396, %v2535
        %v2568 = vmul.f32 %v2398, %v2536
        %v2569 = vmul.f32 %v2400, %v2537
        %v2570 = vmul.f32 %v2402, %v2538
        %v2571 = vmul.f32 %v2404, %v2539
        %v2572 = vmul.f32 %v2406, %v2540
        %v2573 = vmul.f32 %v2408, %v2541
        %v2574 = vmul.f32 %v2410, %v2542
        %v2575 = vmul.f32 %v2412, %v2543
        %v2576 = vmul.f32 %v2414, %v2544
        %v2577 = vmul.f32 %v2416, %v2545
        %v2578 = vmul.f32 %v2418, %v2546
        %v2579 = vpack.c.bf16 %v2548, %v2547
        %v2580 = vpack.c.bf16 %v2550, %v2549
        %v2581 = vpack.c.bf16 %v2552, %v2551
        %v2582 = vpack.c.bf16 %v2554, %v2553
        %v2583 = vpack.c.bf16 %v2556, %v2555
        %v2584 = vpack.c.bf16 %v2558, %v2557
        %v2585 = vpack.c.bf16 %v2560, %v2559
        %v2586 = vpack.c.bf16 %v2562, %v2561
        %v2587 = vpack.c.bf16 %v2564, %v2563
        %v2588 = vpack.c.bf16 %v2566, %v2565
        %v2589 = vpack.c.bf16 %v2568, %v2567
        %v2590 = vpack.c.bf16 %v2570, %v2569
        %v2591 = vpack.c.bf16 %v2572, %v2571
        %v2592 = vpack.c.bf16 %v2574, %v2573
        %v2593 = vpack.c.bf16 %v2576, %v2575
        %v2594 = vpack.c.bf16 %v2578, %v2577
        %v2596 = vsel %vm2226, %v2579, 0
        %v2599 = vsel %vm2226, %v1312, 0
        %v2602 = vsel %vm2226, %v1313, 0
        %2604 = vmatprep.subr.bf16.mxu0 0
        %2605 = vmatpush1.bf16.xpose.msra.mxu0 0
        %2606 = vmatprep.subr.bf16.mxu0 0
        %2607 = vmatpush1.bf16.xpose.msra.mxu0 0
        %2608 = vmatprep.subr.bf16.mxu0 0
        %2609 = vmatpush1.bf16.xpose.msra.mxu0 0
        %2610 = vmatprep.subr.bf16.mxu0 0
        %2611 = vmatpush1.bf16.xpose.msra.mxu0 0
        %2612 = vmatprep.subr.bf16.mxu0 0
        %2613 = vmatpush1.bf16.xpose.msra.mxu0 0
        %2614 = vmatprep.subr.bf16.mxu0 0
        %2615 = vmatpush1.bf16.xpose.msra.mxu0 0
        %2616 = vmatprep.subr.bf16.mxu0 0
        %2617 = vmatpush1.bf16.xpose.msra.mxu0 %v2602
        %2618 = vmatprep.subr.bf16.mxu0 0
        %2619 = vmatpush1.bf16.xpose.msra.mxu0 %v2599
        %2620 = vmatprep.subr.bf16.mxu0 0
        %2621 = vmatpush2.bf16.xpose.msra.mxu0 0
        %2622 = vmatprep.subr.bf16.mxu0 0
        %2623 = vmatpush2.bf16.xpose.msra.mxu0 0
        %2624 = vmatprep.subr.bf16.mxu0 0
        %2625 = vmatpush2.bf16.xpose.msra.mxu0 0
        %2626 = vmatprep.subr.bf16.mxu0 0
        %2627 = vmatpush2.bf16.xpose.msra.mxu0 0
        %2628 = vmatprep.subr.bf16.mxu0 0
        %2629 = vmatpush2.bf16.xpose.msra.mxu0 0
        %2630 = vmatprep.subr.bf16.mxu0 0
        %2631 = vmatpush2.bf16.xpose.msra.mxu0 0
        %2632 = vmatprep.subr.bf16.mxu0 0
        %2633 = vmatpush2.bf16.xpose.msra.mxu0 0
        %2634 = vmatprep.subr.bf16.mxu0 0
        %2635 = vmatpush2.bf16.xpose.msra.mxu0 0
        %2636 = vmatprep.mubr.bf16.mxu0 0
        %2637 = vmatmul.mubr.bf16.gmra.mxu0 %v2596
        %v2638 = vpop.f32.mrf.mxu0
        %v2639 = vadd.f32 0.0, %v2638
        %v2640 = vpop.f32.mrf.mxu0
        %v2641 = vpop.f32.mrf.mxu0
        %v2642 = vadd.f32 0.0, %v2641
        %v2643 = vpop.f32.mrf.mxu0
        %2644 = vdwg.mxu0
        %v2646 = vsel %vm2226, %v2580, 0
        %v2649 = vsel %vm2226, %v1314, 0
        %v2652 = vsel %vm2226, %v1315, 0
        %2654 = vmatprep.subr.bf16.mxu0 0
        %2655 = vmatpush1.bf16.xpose.msra.mxu0 0
        %2656 = vmatprep.subr.bf16.mxu0 0
        %2657 = vmatpush1.bf16.xpose.msra.mxu0 0
        %2658 = vmatprep.subr.bf16.mxu0 0
        %2659 = vmatpush1.bf16.xpose.msra.mxu0 0
        %2660 = vmatprep.subr.bf16.mxu0 0
        %2661 = vmatpush1.bf16.xpose.msra.mxu0 0
        %2662 = vmatprep.subr.bf16.mxu0 0
        %2663 = vmatpush1.bf16.xpose.msra.mxu0 0
        %2664 = vmatprep.subr.bf16.mxu0 0
        %2665 = vmatpush1.bf16.xpose.msra.mxu0 0
        %2666 = vmatprep.subr.bf16.mxu0 0
        %2667 = vmatpush1.bf16.xpose.msra.mxu0 %v2652
        %2668 = vmatprep.subr.bf16.mxu0 0
        %2669 = vmatpush1.bf16.xpose.msra.mxu0 %v2649
        %2670 = vmatprep.subr.bf16.mxu0 0
        %2671 = vmatpush2.bf16.xpose.msra.mxu0 0
        %2672 = vmatprep.subr.bf16.mxu0 0
        %2673 = vmatpush2.bf16.xpose.msra.mxu0 0
        %2674 = vmatprep.subr.bf16.mxu0 0
        %2675 = vmatpush2.bf16.xpose.msra.mxu0 0
        %2676 = vmatprep.subr.bf16.mxu0 0
        %2677 = vmatpush2.bf16.xpose.msra.mxu0 0
        %2678 = vmatprep.subr.bf16.mxu0 0
        %2679 = vmatpush2.bf16.xpose.msra.mxu0 0
        %2680 = vmatprep.subr.bf16.mxu0 0
        %2681 = vmatpush2.bf16.xpose.msra.mxu0 0
        %2682 = vmatprep.subr.bf16.mxu0 0
        %2683 = vmatpush2.bf16.xpose.msra.mxu0 0
        %2684 = vmatprep.subr.bf16.mxu0 0
        %2685 = vmatpush2.bf16.xpose.msra.mxu0 0
        %2686 = vmatprep.mubr.bf16.mxu0 0
        %2687 = vmatmul.mubr.bf16.gmra.mxu0 %v2646
        %v2688 = vpop.f32.mrf.mxu0
        %v2689 = vadd.f32 0.0, %v2688
        %v2690 = vpop.f32.mrf.mxu0
        %v2691 = vpop.f32.mrf.mxu0
        %v2692 = vadd.f32 0.0, %v2691
        %v2693 = vpop.f32.mrf.mxu0
        %2694 = vdwg.mxu0
        %v2696 = vsel %vm2226, %v2581, 0
        %v2699 = vsel %vm2226, %v1316, 0
        %v2702 = vsel %vm2226, %v1317, 0
        %2704 = vmatprep.subr.bf16.mxu0 0
        %2705 = vmatpush1.bf16.xpose.msra.mxu0 0
        %2706 = vmatprep.subr.bf16.mxu0 0
        %2707 = vmatpush1.bf16.xpose.msra.mxu0 0
        %2708 = vmatprep.subr.bf16.mxu0 0
        %2709 = vmatpush1.bf16.xpose.msra.mxu0 0
        %2710 = vmatprep.subr.bf16.mxu0 0
        %2711 = vmatpush1.bf16.xpose.msra.mxu0 0
        %2712 = vmatprep.subr.bf16.mxu0 0
        %2713 = vmatpush1.bf16.xpose.msra.mxu0 0
        %2714 = vmatprep.subr.bf16.mxu0 0
        %2715 = vmatpush1.bf16.xpose.msra.mxu0 0
        %2716 = vmatprep.subr.bf16.mxu0 0
        %2717 = vmatpush1.bf16.xpose.msra.mxu0 %v2702
        %2718 = vmatprep.subr.bf16.mxu0 0
        %2719 = vmatpush1.bf16.xpose.msra.mxu0 %v2699
        %2720 = vmatprep.subr.bf16.mxu0 0
        %2721 = vmatpush2.bf16.xpose.msra.mxu0 0
        %2722 = vmatprep.subr.bf16.mxu0 0
        %2723 = vmatpush2.bf16.xpose.msra.mxu0 0
        %2724 = vmatprep.subr.bf16.mxu0 0
        %2725 = vmatpush2.bf16.xpose.msra.mxu0 0
        %2726 = vmatprep.subr.bf16.mxu0 0
        %2727 = vmatpush2.bf16.xpose.msra.mxu0 0
        %2728 = vmatprep.subr.bf16.mxu0 0
        %2729 = vmatpush2.bf16.xpose.msra.mxu0 0
        %2730 = vmatprep.subr.bf16.mxu0 0
        %2731 = vmatpush2.bf16.xpose.msra.mxu0 0
        %2732 = vmatprep.subr.bf16.mxu0 0
        %2733 = vmatpush2.bf16.xpose.msra.mxu0 0
        %2734 = vmatprep.subr.bf16.mxu0 0
        %2735 = vmatpush2.bf16.xpose.msra.mxu0 0
        %2736 = vmatprep.mubr.bf16.mxu0 0
        %2737 = vmatmul.mubr.bf16.gmra.mxu0 %v2696
        %v2738 = vpop.f32.mrf.mxu0
        %v2739 = vadd.f32 0.0, %v2738
        %v2740 = vpop.f32.mrf.mxu0
        %v2741 = vpop.f32.mrf.mxu0
        %v2742 = vadd.f32 0.0, %v2741
        %v2743 = vpop.f32.mrf.mxu0
        %2744 = vdwg.mxu0
        %v2746 = vsel %vm2226, %v2582, 0
        %v2749 = vsel %vm2226, %v1318, 0
        %v2752 = vsel %vm2226, %v1319, 0
        %2754 = vmatprep.subr.bf16.mxu0 0
        %2755 = vmatpush1.bf16.xpose.msra.mxu0 0
        %2756 = vmatprep.subr.bf16.mxu0 0
        %2757 = vmatpush1.bf16.xpose.msra.mxu0 0
        %2758 = vmatprep.subr.bf16.mxu0 0
        %2759 = vmatpush1.bf16.xpose.msra.mxu0 0
        %2760 = vmatprep.subr.bf16.mxu0 0
        %2761 = vmatpush1.bf16.xpose.msra.mxu0 0
        %2762 = vmatprep.subr.bf16.mxu0 0
        %2763 = vmatpush1.bf16.xpose.msra.mxu0 0
        %2764 = vmatprep.subr.bf16.mxu0 0
        %2765 = vmatpush1.bf16.xpose.msra.mxu0 0
        %2766 = vmatprep.subr.bf16.mxu0 0
        %2767 = vmatpush1.bf16.xpose.msra.mxu0 %v2752
        %2768 = vmatprep.subr.bf16.mxu0 0
        %2769 = vmatpush1.bf16.xpose.msra.mxu0 %v2749
        %2770 = vmatprep.subr.bf16.mxu0 0
        %2771 = vmatpush2.bf16.xpose.msra.mxu0 0
        %2772 = vmatprep.subr.bf16.mxu0 0
        %2773 = vmatpush2.bf16.xpose.msra.mxu0 0
        %2774 = vmatprep.subr.bf16.mxu0 0
        %2775 = vmatpush2.bf16.xpose.msra.mxu0 0
        %2776 = vmatprep.subr.bf16.mxu0 0
        %2777 = vmatpush2.bf16.xpose.msra.mxu0 0
        %2778 = vmatprep.subr.bf16.mxu0 0
        %2779 = vmatpush2.bf16.xpose.msra.mxu0 0
        %2780 = vmatprep.subr.bf16.mxu0 0
        %2781 = vmatpush2.bf16.xpose.msra.mxu0 0
        %2782 = vmatprep.subr.bf16.mxu0 0
        %2783 = vmatpush2.bf16.xpose.msra.mxu0 0
        %2784 = vmatprep.subr.bf16.mxu0 0
        %2785 = vmatpush2.bf16.xpose.msra.mxu0 0
        %2786 = vmatprep.mubr.bf16.mxu0 0
        %2787 = vmatmul.mubr.bf16.gmra.mxu0 %v2746
        %v2788 = vpop.f32.mrf.mxu0
        %v2789 = vadd.f32 0.0, %v2788
        %v2790 = vpop.f32.mrf.mxu0
        %v2791 = vpop.f32.mrf.mxu0
        %v2792 = vadd.f32 0.0, %v2791
        %v2793 = vpop.f32.mrf.mxu0
        %2794 = vdwg.mxu0
        %v2796 = vsel %vm2226, %v2583, 0
        %v2799 = vsel %vm2226, %v1328, 0
        %v2802 = vsel %vm2226, %v1329, 0
        %2804 = vmatprep.subr.bf16.mxu0 0
        %2805 = vmatpush1.bf16.xpose.msra.mxu0 0
        %2806 = vmatprep.subr.bf16.mxu0 0
        %2807 = vmatpush1.bf16.xpose.msra.mxu0 0
        %2808 = vmatprep.subr.bf16.mxu0 0
        %2809 = vmatpush1.bf16.xpose.msra.mxu0 0
        %2810 = vmatprep.subr.bf16.mxu0 0
        %2811 = vmatpush1.bf16.xpose.msra.mxu0 0
        %2812 = vmatprep.subr.bf16.mxu0 0
        %2813 = vmatpush1.bf16.xpose.msra.mxu0 0
        %2814 = vmatprep.subr.bf16.mxu0 0
        %2815 = vmatpush1.bf16.xpose.msra.mxu0 0
        %2816 = vmatprep.subr.bf16.mxu0 0
        %2817 = vmatpush1.bf16.xpose.msra.mxu0 %v2802
        %2818 = vmatprep.subr.bf16.mxu0 0
        %2819 = vmatpush1.bf16.xpose.msra.mxu0 %v2799
        %2820 = vmatprep.subr.bf16.mxu0 0
        %2821 = vmatpush2.bf16.xpose.msra.mxu0 0
        %2822 = vmatprep.subr.bf16.mxu0 0
        %2823 = vmatpush2.bf16.xpose.msra.mxu0 0
        %2824 = vmatprep.subr.bf16.mxu0 0
        %2825 = vmatpush2.bf16.xpose.msra.mxu0 0
        %2826 = vmatprep.subr.bf16.mxu0 0
        %2827 = vmatpush2.bf16.xpose.msra.mxu0 0
        %2828 = vmatprep.subr.bf16.mxu0 0
        %2829 = vmatpush2.bf16.xpose.msra.mxu0 0
        %2830 = vmatprep.subr.bf16.mxu0 0
        %2831 = vmatpush2.bf16.xpose.msra.mxu0 0
        %2832 = vmatprep.subr.bf16.mxu0 0
        %2833 = vmatpush2.bf16.xpose.msra.mxu0 0
        %2834 = vmatprep.subr.bf16.mxu0 0
        %2835 = vmatpush2.bf16.xpose.msra.mxu0 0
        %2836 = vmatprep.mubr.bf16.mxu0 0
        %2837 = vmatmul.mubr.bf16.gmra.mxu0 %v2796
        %v2838 = vpop.f32.mrf.mxu0
        %v2839 = vadd.f32 0.0, %v2838
        %v2840 = vpop.f32.mrf.mxu0
        %v2841 = vpop.f32.mrf.mxu0
        %v2842 = vadd.f32 0.0, %v2841
        %v2843 = vpop.f32.mrf.mxu0
        %2844 = vdwg.mxu0
        %v2846 = vsel %vm2226, %v2584, 0
        %v2849 = vsel %vm2226, %v1330, 0
        %v2852 = vsel %vm2226, %v1331, 0
        %2854 = vmatprep.subr.bf16.mxu0 0
        %2855 = vmatpush1.bf16.xpose.msra.mxu0 0
        %2856 = vmatprep.subr.bf16.mxu0 0
        %2857 = vmatpush1.bf16.xpose.msra.mxu0 0
        %2858 = vmatprep.subr.bf16.mxu0 0
        %2859 = vmatpush1.bf16.xpose.msra.mxu0 0
        %2860 = vmatprep.subr.bf16.mxu0 0
        %2861 = vmatpush1.bf16.xpose.msra.mxu0 0
        %2862 = vmatprep.subr.bf16.mxu0 0
        %2863 = vmatpush1.bf16.xpose.msra.mxu0 0
        %2864 = vmatprep.subr.bf16.mxu0 0
        %2865 = vmatpush1.bf16.xpose.msra.mxu0 0
        %2866 = vmatprep.subr.bf16.mxu0 0
        %2867 = vmatpush1.bf16.xpose.msra.mxu0 %v2852
        %2868 = vmatprep.subr.bf16.mxu0 0
        %2869 = vmatpush1.bf16.xpose.msra.mxu0 %v2849
        %2870 = vmatprep.subr.bf16.mxu0 0
        %2871 = vmatpush2.bf16.xpose.msra.mxu0 0
        %2872 = vmatprep.subr.bf16.mxu0 0
        %2873 = vmatpush2.bf16.xpose.msra.mxu0 0
        %2874 = vmatprep.subr.bf16.mxu0 0
        %2875 = vmatpush2.bf16.xpose.msra.mxu0 0
        %2876 = vmatprep.subr.bf16.mxu0 0
        %2877 = vmatpush2.bf16.xpose.msra.mxu0 0
        %2878 = vmatprep.subr.bf16.mxu0 0
        %2879 = vmatpush2.bf16.xpose.msra.mxu0 0
        %2880 = vmatprep.subr.bf16.mxu0 0
        %2881 = vmatpush2.bf16.xpose.msra.mxu0 0
        %2882 = vmatprep.subr.bf16.mxu0 0
        %2883 = vmatpush2.bf16.xpose.msra.mxu0 0
        %2884 = vmatprep.subr.bf16.mxu0 0
        %2885 = vmatpush2.bf16.xpose.msra.mxu0 0
        %2886 = vmatprep.mubr.bf16.mxu0 0
        %2887 = vmatmul.mubr.bf16.gmra.mxu0 %v2846
        %v2888 = vpop.f32.mrf.mxu0
        %v2889 = vadd.f32 0.0, %v2888
        %v2890 = vpop.f32.mrf.mxu0
        %v2891 = vpop.f32.mrf.mxu0
        %v2892 = vadd.f32 0.0, %v2891
        %v2893 = vpop.f32.mrf.mxu0
        %2894 = vdwg.mxu0
        %v2896 = vsel %vm2226, %v2585, 0
        %v2899 = vsel %vm2226, %v1332, 0
        %v2902 = vsel %vm2226, %v1333, 0
        %2904 = vmatprep.subr.bf16.mxu0 0
        %2905 = vmatpush1.bf16.xpose.msra.mxu0 0
        %2906 = vmatprep.subr.bf16.mxu0 0
        %2907 = vmatpush1.bf16.xpose.msra.mxu0 0
        %2908 = vmatprep.subr.bf16.mxu0 0
        %2909 = vmatpush1.bf16.xpose.msra.mxu0 0
        %2910 = vmatprep.subr.bf16.mxu0 0
        %2911 = vmatpush1.bf16.xpose.msra.mxu0 0
        %2912 = vmatprep.subr.bf16.mxu0 0
        %2913 = vmatpush1.bf16.xpose.msra.mxu0 0
        %2914 = vmatprep.subr.bf16.mxu0 0
        %2915 = vmatpush1.bf16.xpose.msra.mxu0 0
        %2916 = vmatprep.subr.bf16.mxu0 0
        %2917 = vmatpush1.bf16.xpose.msra.mxu0 %v2902
        %2918 = vmatprep.subr.bf16.mxu0 0
        %2919 = vmatpush1.bf16.xpose.msra.mxu0 %v2899
        %2920 = vmatprep.subr.bf16.mxu0 0
        %2921 = vmatpush2.bf16.xpose.msra.mxu0 0
        %2922 = vmatprep.subr.bf16.mxu0 0
        %2923 = vmatpush2.bf16.xpose.msra.mxu0 0
        %2924 = vmatprep.subr.bf16.mxu0 0
        %2925 = vmatpush2.bf16.xpose.msra.mxu0 0
        %2926 = vmatprep.subr.bf16.mxu0 0
        %2927 = vmatpush2.bf16.xpose.msra.mxu0 0
        %2928 = vmatprep.subr.bf16.mxu0 0
        %2929 = vmatpush2.bf16.xpose.msra.mxu0 0
        %2930 = vmatprep.subr.bf16.mxu0 0
        %2931 = vmatpush2.bf16.xpose.msra.mxu0 0
        %2932 = vmatprep.subr.bf16.mxu0 0
        %2933 = vmatpush2.bf16.xpose.msra.mxu0 0
        %2934 = vmatprep.subr.bf16.mxu0 0
        %2935 = vmatpush2.bf16.xpose.msra.mxu0 0
        %2936 = vmatprep.mubr.bf16.mxu0 0
        %2937 = vmatmul.mubr.bf16.gmra.mxu0 %v2896
        %v2938 = vpop.f32.mrf.mxu0
        %v2939 = vadd.f32 0.0, %v2938
        %v2940 = vpop.f32.mrf.mxu0
        %v2941 = vpop.f32.mrf.mxu0
        %v2942 = vadd.f32 0.0, %v2941
        %v2943 = vpop.f32.mrf.mxu0
        %2944 = vdwg.mxu0
        %v2946 = vsel %vm2226, %v2586, 0
        %v2949 = vsel %vm2226, %v1334, 0
        %v2952 = vsel %vm2226, %v1335, 0
        %2954 = vmatprep.subr.bf16.mxu0 0
        %2955 = vmatpush1.bf16.xpose.msra.mxu0 0
        %2956 = vmatprep.subr.bf16.mxu0 0
        %2957 = vmatpush1.bf16.xpose.msra.mxu0 0
        %2958 = vmatprep.subr.bf16.mxu0 0
        %2959 = vmatpush1.bf16.xpose.msra.mxu0 0
        %2960 = vmatprep.subr.bf16.mxu0 0
        %2961 = vmatpush1.bf16.xpose.msra.mxu0 0
        %2962 = vmatprep.subr.bf16.mxu0 0
        %2963 = vmatpush1.bf16.xpose.msra.mxu0 0
        %2964 = vmatprep.subr.bf16.mxu0 0
        %2965 = vmatpush1.bf16.xpose.msra.mxu0 0
        %2966 = vmatprep.subr.bf16.mxu0 0
        %2967 = vmatpush1.bf16.xpose.msra.mxu0 %v2952
        %2968 = vmatprep.subr.bf16.mxu0 0
        %2969 = vmatpush1.bf16.xpose.msra.mxu0 %v2949
        %2970 = vmatprep.subr.bf16.mxu0 0
        %2971 = vmatpush2.bf16.xpose.msra.mxu0 0
        %2972 = vmatprep.subr.bf16.mxu0 0
        %2973 = vmatpush2.bf16.xpose.msra.mxu0 0
        %2974 = vmatprep.subr.bf16.mxu0 0
        %2975 = vmatpush2.bf16.xpose.msra.mxu0 0
        %2976 = vmatprep.subr.bf16.mxu0 0
        %2977 = vmatpush2.bf16.xpose.msra.mxu0 0
        %2978 = vmatprep.subr.bf16.mxu0 0
        %2979 = vmatpush2.bf16.xpose.msra.mxu0 0
        %2980 = vmatprep.subr.bf16.mxu0 0
        %2981 = vmatpush2.bf16.xpose.msra.mxu0 0
        %2982 = vmatprep.subr.bf16.mxu0 0
        %2983 = vmatpush2.bf16.xpose.msra.mxu0 0
        %2984 = vmatprep.subr.bf16.mxu0 0
        %2985 = vmatpush2.bf16.xpose.msra.mxu0 0
        %2986 = vmatprep.mubr.bf16.mxu0 0
        %2987 = vmatmul.mubr.bf16.gmra.mxu0 %v2946
        %v2988 = vpop.f32.mrf.mxu0
        %v2989 = vadd.f32 0.0, %v2988
        %v2990 = vpop.f32.mrf.mxu0
        %v2991 = vpop.f32.mrf.mxu0
        %v2992 = vadd.f32 0.0, %v2991
        %v2993 = vpop.f32.mrf.mxu0
        %2994 = vdwg.mxu0
        %v2996 = vsel %vm2226, %v2587, 0
        %v2999 = vsel %vm2226, %v1344, 0
        %v3002 = vsel %vm2226, %v1345, 0
        %3004 = vmatprep.subr.bf16.mxu0 0
        %3005 = vmatpush1.bf16.xpose.msra.mxu0 0
        %3006 = vmatprep.subr.bf16.mxu0 0
        %3007 = vmatpush1.bf16.xpose.msra.mxu0 0
        %3008 = vmatprep.subr.bf16.mxu0 0
        %3009 = vmatpush1.bf16.xpose.msra.mxu0 0
        %3010 = vmatprep.subr.bf16.mxu0 0
        %3011 = vmatpush1.bf16.xpose.msra.mxu0 0
        %3012 = vmatprep.subr.bf16.mxu0 0
        %3013 = vmatpush1.bf16.xpose.msra.mxu0 0
        %3014 = vmatprep.subr.bf16.mxu0 0
        %3015 = vmatpush1.bf16.xpose.msra.mxu0 0
        %3016 = vmatprep.subr.bf16.mxu0 0
        %3017 = vmatpush1.bf16.xpose.msra.mxu0 %v3002
        %3018 = vmatprep.subr.bf16.mxu0 0
        %3019 = vmatpush1.bf16.xpose.msra.mxu0 %v2999
        %3020 = vmatprep.subr.bf16.mxu0 0
        %3021 = vmatpush2.bf16.xpose.msra.mxu0 0
        %3022 = vmatprep.subr.bf16.mxu0 0
        %3023 = vmatpush2.bf16.xpose.msra.mxu0 0
        %3024 = vmatprep.subr.bf16.mxu0 0
        %3025 = vmatpush2.bf16.xpose.msra.mxu0 0
        %3026 = vmatprep.subr.bf16.mxu0 0
        %3027 = vmatpush2.bf16.xpose.msra.mxu0 0
        %3028 = vmatprep.subr.bf16.mxu0 0
        %3029 = vmatpush2.bf16.xpose.msra.mxu0 0
        %3030 = vmatprep.subr.bf16.mxu0 0
        %3031 = vmatpush2.bf16.xpose.msra.mxu0 0
        %3032 = vmatprep.subr.bf16.mxu0 0
        %3033 = vmatpush2.bf16.xpose.msra.mxu0 0
        %3034 = vmatprep.subr.bf16.mxu0 0
        %3035 = vmatpush2.bf16.xpose.msra.mxu0 0
        %3036 = vmatprep.mubr.bf16.mxu0 0
        %3037 = vmatmul.mubr.bf16.gmra.mxu0 %v2996
        %v3038 = vpop.f32.mrf.mxu0
        %v3039 = vadd.f32 0.0, %v3038
        %v3040 = vpop.f32.mrf.mxu0
        %v3041 = vpop.f32.mrf.mxu0
        %v3042 = vadd.f32 0.0, %v3041
        %v3043 = vpop.f32.mrf.mxu0
        %3044 = vdwg.mxu0
        %v3046 = vsel %vm2226, %v2588, 0
        %v3049 = vsel %vm2226, %v1346, 0
        %v3052 = vsel %vm2226, %v1347, 0
        %3054 = vmatprep.subr.bf16.mxu0 0
        %3055 = vmatpush1.bf16.xpose.msra.mxu0 0
        %3056 = vmatprep.subr.bf16.mxu0 0
        %3057 = vmatpush1.bf16.xpose.msra.mxu0 0
        %3058 = vmatprep.subr.bf16.mxu0 0
        %3059 = vmatpush1.bf16.xpose.msra.mxu0 0
        %3060 = vmatprep.subr.bf16.mxu0 0
        %3061 = vmatpush1.bf16.xpose.msra.mxu0 0
        %3062 = vmatprep.subr.bf16.mxu0 0
        %3063 = vmatpush1.bf16.xpose.msra.mxu0 0
        %3064 = vmatprep.subr.bf16.mxu0 0
        %3065 = vmatpush1.bf16.xpose.msra.mxu0 0
        %3066 = vmatprep.subr.bf16.mxu0 0
        %3067 = vmatpush1.bf16.xpose.msra.mxu0 %v3052
        %3068 = vmatprep.subr.bf16.mxu0 0
        %3069 = vmatpush1.bf16.xpose.msra.mxu0 %v3049
        %3070 = vmatprep.subr.bf16.mxu0 0
        %3071 = vmatpush2.bf16.xpose.msra.mxu0 0
        %3072 = vmatprep.subr.bf16.mxu0 0
        %3073 = vmatpush2.bf16.xpose.msra.mxu0 0
        %3074 = vmatprep.subr.bf16.mxu0 0
        %3075 = vmatpush2.bf16.xpose.msra.mxu0 0
        %3076 = vmatprep.subr.bf16.mxu0 0
        %3077 = vmatpush2.bf16.xpose.msra.mxu0 0
        %3078 = vmatprep.subr.bf16.mxu0 0
        %3079 = vmatpush2.bf16.xpose.msra.mxu0 0
        %3080 = vmatprep.subr.bf16.mxu0 0
        %3081 = vmatpush2.bf16.xpose.msra.mxu0 0
        %3082 = vmatprep.subr.bf16.mxu0 0
        %3083 = vmatpush2.bf16.xpose.msra.mxu0 0
        %3084 = vmatprep.subr.bf16.mxu0 0
        %3085 = vmatpush2.bf16.xpose.msra.mxu0 0
        %3086 = vmatprep.mubr.bf16.mxu0 0
        %3087 = vmatmul.mubr.bf16.gmra.mxu0 %v3046
        %v3088 = vpop.f32.mrf.mxu0
        %v3089 = vadd.f32 0.0, %v3088
        %v3090 = vpop.f32.mrf.mxu0
        %v3091 = vpop.f32.mrf.mxu0
        %v3092 = vadd.f32 0.0, %v3091
        %v3093 = vpop.f32.mrf.mxu0
        %3094 = vdwg.mxu0
        %v3096 = vsel %vm2226, %v2589, 0
        %v3099 = vsel %vm2226, %v1348, 0
        %v3102 = vsel %vm2226, %v1349, 0
        %3104 = vmatprep.subr.bf16.mxu0 0
        %3105 = vmatpush1.bf16.xpose.msra.mxu0 0
        %3106 = vmatprep.subr.bf16.mxu0 0
        %3107 = vmatpush1.bf16.xpose.msra.mxu0 0
        %3108 = vmatprep.subr.bf16.mxu0 0
        %3109 = vmatpush1.bf16.xpose.msra.mxu0 0
        %3110 = vmatprep.subr.bf16.mxu0 0
        %3111 = vmatpush1.bf16.xpose.msra.mxu0 0
        %3112 = vmatprep.subr.bf16.mxu0 0
        %3113 = vmatpush1.bf16.xpose.msra.mxu0 0
        %3114 = vmatprep.subr.bf16.mxu0 0
        %3115 = vmatpush1.bf16.xpose.msra.mxu0 0
        %3116 = vmatprep.subr.bf16.mxu0 0
        %3117 = vmatpush1.bf16.xpose.msra.mxu0 %v3102
        %3118 = vmatprep.subr.bf16.mxu0 0
        %3119 = vmatpush1.bf16.xpose.msra.mxu0 %v3099
        %3120 = vmatprep.subr.bf16.mxu0 0
        %3121 = vmatpush2.bf16.xpose.msra.mxu0 0
        %3122 = vmatprep.subr.bf16.mxu0 0
        %3123 = vmatpush2.bf16.xpose.msra.mxu0 0
        %3124 = vmatprep.subr.bf16.mxu0 0
        %3125 = vmatpush2.bf16.xpose.msra.mxu0 0
        %3126 = vmatprep.subr.bf16.mxu0 0
        %3127 = vmatpush2.bf16.xpose.msra.mxu0 0
        %3128 = vmatprep.subr.bf16.mxu0 0
        %3129 = vmatpush2.bf16.xpose.msra.mxu0 0
        %3130 = vmatprep.subr.bf16.mxu0 0
        %3131 = vmatpush2.bf16.xpose.msra.mxu0 0
        %3132 = vmatprep.subr.bf16.mxu0 0
        %3133 = vmatpush2.bf16.xpose.msra.mxu0 0
        %3134 = vmatprep.subr.bf16.mxu0 0
        %3135 = vmatpush2.bf16.xpose.msra.mxu0 0
        %3136 = vmatprep.mubr.bf16.mxu0 0
        %3137 = vmatmul.mubr.bf16.gmra.mxu0 %v3096
        %v3138 = vpop.f32.mrf.mxu0
        %v3139 = vadd.f32 0.0, %v3138
        %v3140 = vpop.f32.mrf.mxu0
        %v3141 = vpop.f32.mrf.mxu0
        %v3142 = vadd.f32 0.0, %v3141
        %v3143 = vpop.f32.mrf.mxu0
        %3144 = vdwg.mxu0
        %v3146 = vsel %vm2226, %v2590, 0
        %v3149 = vsel %vm2226, %v1350, 0
        %v3152 = vsel %vm2226, %v1351, 0
        %3154 = vmatprep.subr.bf16.mxu0 0
        %3155 = vmatpush1.bf16.xpose.msra.mxu0 0
        %3156 = vmatprep.subr.bf16.mxu0 0
        %3157 = vmatpush1.bf16.xpose.msra.mxu0 0
        %3158 = vmatprep.subr.bf16.mxu0 0
        %3159 = vmatpush1.bf16.xpose.msra.mxu0 0
        %3160 = vmatprep.subr.bf16.mxu0 0
        %3161 = vmatpush1.bf16.xpose.msra.mxu0 0
        %3162 = vmatprep.subr.bf16.mxu0 0
        %3163 = vmatpush1.bf16.xpose.msra.mxu0 0
        %3164 = vmatprep.subr.bf16.mxu0 0
        %3165 = vmatpush1.bf16.xpose.msra.mxu0 0
        %3166 = vmatprep.subr.bf16.mxu0 0
        %3167 = vmatpush1.bf16.xpose.msra.mxu0 %v3152
        %3168 = vmatprep.subr.bf16.mxu0 0
        %3169 = vmatpush1.bf16.xpose.msra.mxu0 %v3149
        %3170 = vmatprep.subr.bf16.mxu0 0
        %3171 = vmatpush2.bf16.xpose.msra.mxu0 0
        %3172 = vmatprep.subr.bf16.mxu0 0
        %3173 = vmatpush2.bf16.xpose.msra.mxu0 0
        %3174 = vmatprep.subr.bf16.mxu0 0
        %3175 = vmatpush2.bf16.xpose.msra.mxu0 0
        %3176 = vmatprep.subr.bf16.mxu0 0
        %3177 = vmatpush2.bf16.xpose.msra.mxu0 0
        %3178 = vmatprep.subr.bf16.mxu0 0
        %3179 = vmatpush2.bf16.xpose.msra.mxu0 0
        %3180 = vmatprep.subr.bf16.mxu0 0
        %3181 = vmatpush2.bf16.xpose.msra.mxu0 0
        %3182 = vmatprep.subr.bf16.mxu0 0
        %3183 = vmatpush2.bf16.xpose.msra.mxu0 0
        %3184 = vmatprep.subr.bf16.mxu0 0
        %3185 = vmatpush2.bf16.xpose.msra.mxu0 0
        %3186 = vmatprep.mubr.bf16.mxu0 0
        %3187 = vmatmul.mubr.bf16.gmra.mxu0 %v3146
        %v3188 = vpop.f32.mrf.mxu0
        %v3189 = vadd.f32 0.0, %v3188
        %v3190 = vpop.f32.mrf.mxu0
        %v3191 = vpop.f32.mrf.mxu0
        %v3192 = vadd.f32 0.0, %v3191
        %v3193 = vpop.f32.mrf.mxu0
        %3194 = vdwg.mxu0
        %v3196 = vsel %vm2226, %v2591, 0
        %v3199 = vsel %vm2226, %v1360, 0
        %v3202 = vsel %vm2226, %v1361, 0
        %3204 = vmatprep.subr.bf16.mxu0 0
        %3205 = vmatpush1.bf16.xpose.msra.mxu0 0
        %3206 = vmatprep.subr.bf16.mxu0 0
        %3207 = vmatpush1.bf16.xpose.msra.mxu0 0
        %3208 = vmatprep.subr.bf16.mxu0 0
        %3209 = vmatpush1.bf16.xpose.msra.mxu0 0
        %3210 = vmatprep.subr.bf16.mxu0 0
        %3211 = vmatpush1.bf16.xpose.msra.mxu0 0
        %3212 = vmatprep.subr.bf16.mxu0 0
        %3213 = vmatpush1.bf16.xpose.msra.mxu0 0
        %3214 = vmatprep.subr.bf16.mxu0 0
        %3215 = vmatpush1.bf16.xpose.msra.mxu0 0
        %3216 = vmatprep.subr.bf16.mxu0 0
        %3217 = vmatpush1.bf16.xpose.msra.mxu0 %v3202
        %3218 = vmatprep.subr.bf16.mxu0 0
        %3219 = vmatpush1.bf16.xpose.msra.mxu0 %v3199
        %3220 = vmatprep.subr.bf16.mxu0 0
        %3221 = vmatpush2.bf16.xpose.msra.mxu0 0
        %3222 = vmatprep.subr.bf16.mxu0 0
        %3223 = vmatpush2.bf16.xpose.msra.mxu0 0
        %3224 = vmatprep.subr.bf16.mxu0 0
        %3225 = vmatpush2.bf16.xpose.msra.mxu0 0
        %3226 = vmatprep.subr.bf16.mxu0 0
        %3227 = vmatpush2.bf16.xpose.msra.mxu0 0
        %3228 = vmatprep.subr.bf16.mxu0 0
        %3229 = vmatpush2.bf16.xpose.msra.mxu0 0
        %3230 = vmatprep.subr.bf16.mxu0 0
        %3231 = vmatpush2.bf16.xpose.msra.mxu0 0
        %3232 = vmatprep.subr.bf16.mxu0 0
        %3233 = vmatpush2.bf16.xpose.msra.mxu0 0
        %3234 = vmatprep.subr.bf16.mxu0 0
        %3235 = vmatpush2.bf16.xpose.msra.mxu0 0
        %3236 = vmatprep.mubr.bf16.mxu0 0
        %3237 = vmatmul.mubr.bf16.gmra.mxu0 %v3196
        %v3238 = vpop.f32.mrf.mxu0
        %v3239 = vadd.f32 0.0, %v3238
        %v3240 = vpop.f32.mrf.mxu0
        %v3241 = vpop.f32.mrf.mxu0
        %v3242 = vadd.f32 0.0, %v3241
        %v3243 = vpop.f32.mrf.mxu0
        %3244 = vdwg.mxu0
        %v3246 = vsel %vm2226, %v2592, 0
        %v3249 = vsel %vm2226, %v1362, 0
        %v3252 = vsel %vm2226, %v1363, 0
        %3254 = vmatprep.subr.bf16.mxu0 0
        %3255 = vmatpush1.bf16.xpose.msra.mxu0 0
        %3256 = vmatprep.subr.bf16.mxu0 0
        %3257 = vmatpush1.bf16.xpose.msra.mxu0 0
        %3258 = vmatprep.subr.bf16.mxu0 0
        %3259 = vmatpush1.bf16.xpose.msra.mxu0 0
        %3260 = vmatprep.subr.bf16.mxu0 0
        %3261 = vmatpush1.bf16.xpose.msra.mxu0 0
        %3262 = vmatprep.subr.bf16.mxu0 0
        %3263 = vmatpush1.bf16.xpose.msra.mxu0 0
        %3264 = vmatprep.subr.bf16.mxu0 0
        %3265 = vmatpush1.bf16.xpose.msra.mxu0 0
        %3266 = vmatprep.subr.bf16.mxu0 0
        %3267 = vmatpush1.bf16.xpose.msra.mxu0 %v3252
        %3268 = vmatprep.subr.bf16.mxu0 0
        %3269 = vmatpush1.bf16.xpose.msra.mxu0 %v3249
        %3270 = vmatprep.subr.bf16.mxu0 0
        %3271 = vmatpush2.bf16.xpose.msra.mxu0 0
        %3272 = vmatprep.subr.bf16.mxu0 0
        %3273 = vmatpush2.bf16.xpose.msra.mxu0 0
        %3274 = vmatprep.subr.bf16.mxu0 0
        %3275 = vmatpush2.bf16.xpose.msra.mxu0 0
        %3276 = vmatprep.subr.bf16.mxu0 0
        %3277 = vmatpush2.bf16.xpose.msra.mxu0 0
        %3278 = vmatprep.subr.bf16.mxu0 0
        %3279 = vmatpush2.bf16.xpose.msra.mxu0 0
        %3280 = vmatprep.subr.bf16.mxu0 0
        %3281 = vmatpush2.bf16.xpose.msra.mxu0 0
        %3282 = vmatprep.subr.bf16.mxu0 0
        %3283 = vmatpush2.bf16.xpose.msra.mxu0 0
        %3284 = vmatprep.subr.bf16.mxu0 0
        %3285 = vmatpush2.bf16.xpose.msra.mxu0 0
        %3286 = vmatprep.mubr.bf16.mxu0 0
        %3287 = vmatmul.mubr.bf16.gmra.mxu0 %v3246
        %v3288 = vpop.f32.mrf.mxu0
        %v3289 = vadd.f32 0.0, %v3288
        %v3290 = vpop.f32.mrf.mxu0
        %v3291 = vpop.f32.mrf.mxu0
        %v3292 = vadd.f32 0.0, %v3291
        %v3293 = vpop.f32.mrf.mxu0
        %3294 = vdwg.mxu0
        %v3296 = vsel %vm2226, %v2593, 0
        %v3299 = vsel %vm2226, %v1364, 0
        %v3302 = vsel %vm2226, %v1365, 0
        %3304 = vmatprep.subr.bf16.mxu0 0
        %3305 = vmatpush1.bf16.xpose.msra.mxu0 0
        %3306 = vmatprep.subr.bf16.mxu0 0
        %3307 = vmatpush1.bf16.xpose.msra.mxu0 0
        %3308 = vmatprep.subr.bf16.mxu0 0
        %3309 = vmatpush1.bf16.xpose.msra.mxu0 0
        %3310 = vmatprep.subr.bf16.mxu0 0
        %3311 = vmatpush1.bf16.xpose.msra.mxu0 0
        %3312 = vmatprep.subr.bf16.mxu0 0
        %3313 = vmatpush1.bf16.xpose.msra.mxu0 0
        %3314 = vmatprep.subr.bf16.mxu0 0
        %3315 = vmatpush1.bf16.xpose.msra.mxu0 0
        %3316 = vmatprep.subr.bf16.mxu0 0
        %3317 = vmatpush1.bf16.xpose.msra.mxu0 %v3302
        %3318 = vmatprep.subr.bf16.mxu0 0
        %3319 = vmatpush1.bf16.xpose.msra.mxu0 %v3299
        %3320 = vmatprep.subr.bf16.mxu0 0
        %3321 = vmatpush2.bf16.xpose.msra.mxu0 0
        %3322 = vmatprep.subr.bf16.mxu0 0
        %3323 = vmatpush2.bf16.xpose.msra.mxu0 0
        %3324 = vmatprep.subr.bf16.mxu0 0
        %3325 = vmatpush2.bf16.xpose.msra.mxu0 0
        %3326 = vmatprep.subr.bf16.mxu0 0
        %3327 = vmatpush2.bf16.xpose.msra.mxu0 0
        %3328 = vmatprep.subr.bf16.mxu0 0
        %3329 = vmatpush2.bf16.xpose.msra.mxu0 0
        %3330 = vmatprep.subr.bf16.mxu0 0
        %3331 = vmatpush2.bf16.xpose.msra.mxu0 0
        %3332 = vmatprep.subr.bf16.mxu0 0
        %3333 = vmatpush2.bf16.xpose.msra.mxu0 0
        %3334 = vmatprep.subr.bf16.mxu0 0
        %3335 = vmatpush2.bf16.xpose.msra.mxu0 0
        %3336 = vmatprep.mubr.bf16.mxu0 0
        %3337 = vmatmul.mubr.bf16.gmra.mxu0 %v3296
        %v3338 = vpop.f32.mrf.mxu0
        %v3339 = vadd.f32 0.0, %v3338
        %v3340 = vpop.f32.mrf.mxu0
        %v3341 = vpop.f32.mrf.mxu0
        %v3342 = vadd.f32 0.0, %v3341
        %v3343 = vpop.f32.mrf.mxu0
        %3344 = vdwg.mxu0
        %v3346 = vsel %vm2226, %v2594, 0
        %v3349 = vsel %vm2226, %v1366, 0
        %v3352 = vsel %vm2226, %v1367, 0
        %3354 = vmatprep.subr.bf16.mxu0 0
        %3355 = vmatpush1.bf16.xpose.msra.mxu0 0
        %3356 = vmatprep.subr.bf16.mxu0 0
        %3357 = vmatpush1.bf16.xpose.msra.mxu0 0
        %3358 = vmatprep.subr.bf16.mxu0 0
        %3359 = vmatpush1.bf16.xpose.msra.mxu0 0
        %3360 = vmatprep.subr.bf16.mxu0 0
        %3361 = vmatpush1.bf16.xpose.msra.mxu0 0
        %3362 = vmatprep.subr.bf16.mxu0 0
        %3363 = vmatpush1.bf16.xpose.msra.mxu0 0
        %3364 = vmatprep.subr.bf16.mxu0 0
        %3365 = vmatpush1.bf16.xpose.msra.mxu0 0
        %3366 = vmatprep.subr.bf16.mxu0 0
        %3367 = vmatpush1.bf16.xpose.msra.mxu0 %v3352
        %3368 = vmatprep.subr.bf16.mxu0 0
        %3369 = vmatpush1.bf16.xpose.msra.mxu0 %v3349
        %3370 = vmatprep.subr.bf16.mxu0 0
        %3371 = vmatpush2.bf16.xpose.msra.mxu0 0
        %3372 = vmatprep.subr.bf16.mxu0 0
        %3373 = vmatpush2.bf16.xpose.msra.mxu0 0
        %3374 = vmatprep.subr.bf16.mxu0 0
        %3375 = vmatpush2.bf16.xpose.msra.mxu0 0
        %3376 = vmatprep.subr.bf16.mxu0 0
        %3377 = vmatpush2.bf16.xpose.msra.mxu0 0
        %3378 = vmatprep.subr.bf16.mxu0 0
        %3379 = vmatpush2.bf16.xpose.msra.mxu0 0
        %3380 = vmatprep.subr.bf16.mxu0 0
        %3381 = vmatpush2.bf16.xpose.msra.mxu0 0
        %3382 = vmatprep.subr.bf16.mxu0 0
        %3383 = vmatpush2.bf16.xpose.msra.mxu0 0
        %3384 = vmatprep.subr.bf16.mxu0 0
        %3385 = vmatpush2.bf16.xpose.msra.mxu0 0
        %3386 = vmatprep.mubr.bf16.mxu0 0
        %3387 = vmatmul.mubr.bf16.gmra.mxu0 %v3346
        %v3388 = vpop.f32.mrf.mxu0
        %v3389 = vadd.f32 0.0, %v3388
        %v3390 = vpop.f32.mrf.mxu0
        %v3391 = vpop.f32.mrf.mxu0
        %v3392 = vadd.f32 0.0, %v3391
        %v3393 = vpop.f32.mrf.mxu0
        %3394 = vdwg.mxu0
        %v3395 = vpack.c.bf16 %v2642, %v2639
        %v3396 = vpack.c.bf16 %v2692, %v2689
        %v3397 = vpack.c.bf16 %v2742, %v2739
        %v3398 = vpack.c.bf16 %v2792, %v2789
        %v3399 = vpack.c.bf16 %v2842, %v2839
        %v3400 = vpack.c.bf16 %v2892, %v2889
        %v3401 = vpack.c.bf16 %v2942, %v2939
        %v3402 = vpack.c.bf16 %v2992, %v2989
        %v3403 = vpack.c.bf16 %v3042, %v3039
        %v3404 = vpack.c.bf16 %v3092, %v3089
        %v3405 = vpack.c.bf16 %v3142, %v3139
        %v3406 = vpack.c.bf16 %v3192, %v3189
        %v3407 = vpack.c.bf16 %v3242, %v3239
        %v3408 = vpack.c.bf16 %v3292, %v3289
        %v3409 = vpack.c.bf16 %v3342, %v3339
        %v3410 = vpack.c.bf16 %v3392, %v3389
        %3411 = vxpose.xlu0.c.b16.start [1/8] %v3395, 128
        %3412 = vxpose.xlu0.c.b16.cont [2/8] 0, 128
        %3413 = vxpose.xlu0.c.b16.cont [3/8] 0, 128
        %3414 = vxpose.xlu0.c.b16.cont [4/8] 0, 128
        %3415 = vxpose.xlu0.c.b16.cont [5/8] 0, 128
        %3416 = vxpose.xlu0.c.b16.cont [6/8] 0, 128
        %3417 = vxpose.xlu0.c.b16.cont [7/8] 0, 128
        %3418 = vxpose.xlu0.c.b16.end [8/8] 0, 128
        %v3419 = vpop.trf.xlu0
        %v3420 = vpop.trf.xlu0
        %v3421 = vpop.trf.xlu0
        %v3422 = vpop.trf.xlu0
        %v3423 = vpop.trf.xlu0
        %v3424 = vpop.trf.xlu0
        %v3425 = vpop.trf.xlu0
        %v3426 = vpop.trf.xlu0
        %3427 = vxpose.xlu0.c.b16.start [1/8] %v3396, 128
        %3428 = vxpose.xlu0.c.b16.cont [2/8] 0, 128
        %3429 = vxpose.xlu0.c.b16.cont [3/8] 0, 128
        %3430 = vxpose.xlu0.c.b16.cont [4/8] 0, 128
        %3431 = vxpose.xlu0.c.b16.cont [5/8] 0, 128
        %3432 = vxpose.xlu0.c.b16.cont [6/8] 0, 128
        %3433 = vxpose.xlu0.c.b16.cont [7/8] 0, 128
        %3434 = vxpose.xlu0.c.b16.end [8/8] 0, 128
        %v3435 = vpop.trf.xlu0
        %v3436 = vpop.trf.xlu0
        %v3437 = vpop.trf.xlu0
        %v3438 = vpop.trf.xlu0
        %v3439 = vpop.trf.xlu0
        %v3440 = vpop.trf.xlu0
        %v3441 = vpop.trf.xlu0
        %v3442 = vpop.trf.xlu0
        %3443 = vxpose.xlu0.c.b16.start [1/8] %v3397, 128
        %3444 = vxpose.xlu0.c.b16.cont [2/8] 0, 128
        %3445 = vxpose.xlu0.c.b16.cont [3/8] 0, 128
        %3446 = vxpose.xlu0.c.b16.cont [4/8] 0, 128
        %3447 = vxpose.xlu0.c.b16.cont [5/8] 0, 128
        %3448 = vxpose.xlu0.c.b16.cont [6/8] 0, 128
        %3449 = vxpose.xlu0.c.b16.cont [7/8] 0, 128
        %3450 = vxpose.xlu0.c.b16.end [8/8] 0, 128
        %v3451 = vpop.trf.xlu0
        %v3452 = vpop.trf.xlu0
        %v3453 = vpop.trf.xlu0
        %v3454 = vpop.trf.xlu0
        %v3455 = vpop.trf.xlu0
        %v3456 = vpop.trf.xlu0
        %v3457 = vpop.trf.xlu0
        %v3458 = vpop.trf.xlu0
        %3459 = vxpose.xlu0.c.b16.start [1/8] %v3398, 128
        %3460 = vxpose.xlu0.c.b16.cont [2/8] 0, 128
        %3461 = vxpose.xlu0.c.b16.cont [3/8] 0, 128
        %3462 = vxpose.xlu0.c.b16.cont [4/8] 0, 128
        %3463 = vxpose.xlu0.c.b16.cont [5/8] 0, 128
        %3464 = vxpose.xlu0.c.b16.cont [6/8] 0, 128
        %3465 = vxpose.xlu0.c.b16.cont [7/8] 0, 128
        %3466 = vxpose.xlu0.c.b16.end [8/8] 0, 128
        %v3467 = vpop.trf.xlu0
        %v3468 = vpop.trf.xlu0
        %v3469 = vpop.trf.xlu0
        %v3470 = vpop.trf.xlu0
        %v3471 = vpop.trf.xlu0
        %v3472 = vpop.trf.xlu0
        %v3473 = vpop.trf.xlu0
        %v3474 = vpop.trf.xlu0
        %3475 = vxpose.xlu0.c.b16.start [1/8] %v3399, 128
        %3476 = vxpose.xlu0.c.b16.cont [2/8] 0, 128
        %3477 = vxpose.xlu0.c.b16.cont [3/8] 0, 128
        %3478 = vxpose.xlu0.c.b16.cont [4/8] 0, 128
        %3479 = vxpose.xlu0.c.b16.cont [5/8] 0, 128
        %3480 = vxpose.xlu0.c.b16.cont [6/8] 0, 128
        %3481 = vxpose.xlu0.c.b16.cont [7/8] 0, 128
        %3482 = vxpose.xlu0.c.b16.end [8/8] 0, 128
        %v3483 = vpop.trf.xlu0
        %v3484 = vpop.trf.xlu0
        %v3485 = vpop.trf.xlu0
        %v3486 = vpop.trf.xlu0
        %v3487 = vpop.trf.xlu0
        %v3488 = vpop.trf.xlu0
        %v3489 = vpop.trf.xlu0
        %v3490 = vpop.trf.xlu0
        %3491 = vxpose.xlu0.c.b16.start [1/8] %v3400, 128
        %3492 = vxpose.xlu0.c.b16.cont [2/8] 0, 128
        %3493 = vxpose.xlu0.c.b16.cont [3/8] 0, 128
        %3494 = vxpose.xlu0.c.b16.cont [4/8] 0, 128
        %3495 = vxpose.xlu0.c.b16.cont [5/8] 0, 128
        %3496 = vxpose.xlu0.c.b16.cont [6/8] 0, 128
        %3497 = vxpose.xlu0.c.b16.cont [7/8] 0, 128
        %3498 = vxpose.xlu0.c.b16.end [8/8] 0, 128
        %v3499 = vpop.trf.xlu0
        %v3500 = vpop.trf.xlu0
        %v3501 = vpop.trf.xlu0
        %v3502 = vpop.trf.xlu0
        %v3503 = vpop.trf.xlu0
        %v3504 = vpop.trf.xlu0
        %v3505 = vpop.trf.xlu0
        %v3506 = vpop.trf.xlu0
        %3507 = vxpose.xlu0.c.b16.start [1/8] %v3401, 128
        %3508 = vxpose.xlu0.c.b16.cont [2/8] 0, 128
        %3509 = vxpose.xlu0.c.b16.cont [3/8] 0, 128
        %3510 = vxpose.xlu0.c.b16.cont [4/8] 0, 128
        %3511 = vxpose.xlu0.c.b16.cont [5/8] 0, 128
        %3512 = vxpose.xlu0.c.b16.cont [6/8] 0, 128
        %3513 = vxpose.xlu0.c.b16.cont [7/8] 0, 128
        %3514 = vxpose.xlu0.c.b16.end [8/8] 0, 128
        %v3515 = vpop.trf.xlu0
        %v3516 = vpop.trf.xlu0
        %v3517 = vpop.trf.xlu0
        %v3518 = vpop.trf.xlu0
        %v3519 = vpop.trf.xlu0
        %v3520 = vpop.trf.xlu0
        %v3521 = vpop.trf.xlu0
        %v3522 = vpop.trf.xlu0
        %3523 = vxpose.xlu0.c.b16.start [1/8] %v3402, 128
        %3524 = vxpose.xlu0.c.b16.cont [2/8] 0, 128
        %3525 = vxpose.xlu0.c.b16.cont [3/8] 0, 128
        %3526 = vxpose.xlu0.c.b16.cont [4/8] 0, 128
        %3527 = vxpose.xlu0.c.b16.cont [5/8] 0, 128
        %3528 = vxpose.xlu0.c.b16.cont [6/8] 0, 128
        %3529 = vxpose.xlu0.c.b16.cont [7/8] 0, 128
        %3530 = vxpose.xlu0.c.b16.end [8/8] 0, 128
        %v3531 = vpop.trf.xlu0
        %v3532 = vpop.trf.xlu0
        %v3533 = vpop.trf.xlu0
        %v3534 = vpop.trf.xlu0
        %v3535 = vpop.trf.xlu0
        %v3536 = vpop.trf.xlu0
        %v3537 = vpop.trf.xlu0
        %v3538 = vpop.trf.xlu0
        %3539 = vxpose.xlu0.c.b16.start [1/8] %v3403, 128
        %3540 = vxpose.xlu0.c.b16.cont [2/8] 0, 128
        %3541 = vxpose.xlu0.c.b16.cont [3/8] 0, 128
        %3542 = vxpose.xlu0.c.b16.cont [4/8] 0, 128
        %3543 = vxpose.xlu0.c.b16.cont [5/8] 0, 128
        %3544 = vxpose.xlu0.c.b16.cont [6/8] 0, 128
        %3545 = vxpose.xlu0.c.b16.cont [7/8] 0, 128
        %3546 = vxpose.xlu0.c.b16.end [8/8] 0, 128
        %v3547 = vpop.trf.xlu0
        %v3548 = vpop.trf.xlu0
        %v3549 = vpop.trf.xlu0
        %v3550 = vpop.trf.xlu0
        %v3551 = vpop.trf.xlu0
        %v3552 = vpop.trf.xlu0
        %v3553 = vpop.trf.xlu0
        %v3554 = vpop.trf.xlu0
        %3555 = vxpose.xlu0.c.b16.start [1/8] %v3404, 128
        %3556 = vxpose.xlu0.c.b16.cont [2/8] 0, 128
        %3557 = vxpose.xlu0.c.b16.cont [3/8] 0, 128
        %3558 = vxpose.xlu0.c.b16.cont [4/8] 0, 128
        %3559 = vxpose.xlu0.c.b16.cont [5/8] 0, 128
        %3560 = vxpose.xlu0.c.b16.cont [6/8] 0, 128
        %3561 = vxpose.xlu0.c.b16.cont [7/8] 0, 128
        %3562 = vxpose.xlu0.c.b16.end [8/8] 0, 128
        %v3563 = vpop.trf.xlu0
        %v3564 = vpop.trf.xlu0
        %v3565 = vpop.trf.xlu0
        %v3566 = vpop.trf.xlu0
        %v3567 = vpop.trf.xlu0
        %v3568 = vpop.trf.xlu0
        %v3569 = vpop.trf.xlu0
        %v3570 = vpop.trf.xlu0
        %3571 = vxpose.xlu0.c.b16.start [1/8] %v3405, 128
        %3572 = vxpose.xlu0.c.b16.cont [2/8] 0, 128
        %3573 = vxpose.xlu0.c.b16.cont [3/8] 0, 128
        %3574 = vxpose.xlu0.c.b16.cont [4/8] 0, 128
        %3575 = vxpose.xlu0.c.b16.cont [5/8] 0, 128
        %3576 = vxpose.xlu0.c.b16.cont [6/8] 0, 128
        %3577 = vxpose.xlu0.c.b16.cont [7/8] 0, 128
        %3578 = vxpose.xlu0.c.b16.end [8/8] 0, 128
        %v3579 = vpop.trf.xlu0
        %v3580 = vpop.trf.xlu0
        %v3581 = vpop.trf.xlu0
        %v3582 = vpop.trf.xlu0
        %v3583 = vpop.trf.xlu0
        %v3584 = vpop.trf.xlu0
        %v3585 = vpop.trf.xlu0
        %v3586 = vpop.trf.xlu0
        %3587 = vxpose.xlu0.c.b16.start [1/8] %v3406, 128
        %3588 = vxpose.xlu0.c.b16.cont [2/8] 0, 128
        %3589 = vxpose.xlu0.c.b16.cont [3/8] 0, 128
        %3590 = vxpose.xlu0.c.b16.cont [4/8] 0, 128
        %3591 = vxpose.xlu0.c.b16.cont [5/8] 0, 128
        %3592 = vxpose.xlu0.c.b16.cont [6/8] 0, 128
        %3593 = vxpose.xlu0.c.b16.cont [7/8] 0, 128
        %3594 = vxpose.xlu0.c.b16.end [8/8] 0, 128
        %v3595 = vpop.trf.xlu0
        %v3596 = vpop.trf.xlu0
        %v3597 = vpop.trf.xlu0
        %v3598 = vpop.trf.xlu0
        %v3599 = vpop.trf.xlu0
        %v3600 = vpop.trf.xlu0
        %v3601 = vpop.trf.xlu0
        %v3602 = vpop.trf.xlu0
        %3603 = vxpose.xlu0.c.b16.start [1/8] %v3407, 128
        %3604 = vxpose.xlu0.c.b16.cont [2/8] 0, 128
        %3605 = vxpose.xlu0.c.b16.cont [3/8] 0, 128
        %3606 = vxpose.xlu0.c.b16.cont [4/8] 0, 128
        %3607 = vxpose.xlu0.c.b16.cont [5/8] 0, 128
        %3608 = vxpose.xlu0.c.b16.cont [6/8] 0, 128
        %3609 = vxpose.xlu0.c.b16.cont [7/8] 0, 128
        %3610 = vxpose.xlu0.c.b16.end [8/8] 0, 128
        %v3611 = vpop.trf.xlu0
        %v3612 = vpop.trf.xlu0
        %v3613 = vpop.trf.xlu0
        %v3614 = vpop.trf.xlu0
        %v3615 = vpop.trf.xlu0
        %v3616 = vpop.trf.xlu0
        %v3617 = vpop.trf.xlu0
        %v3618 = vpop.trf.xlu0
        %3619 = vxpose.xlu0.c.b16.start [1/8] %v3408, 128
        %3620 = vxpose.xlu0.c.b16.cont [2/8] 0, 128
        %3621 = vxpose.xlu0.c.b16.cont [3/8] 0, 128
        %3622 = vxpose.xlu0.c.b16.cont [4/8] 0, 128
        %3623 = vxpose.xlu0.c.b16.cont [5/8] 0, 128
        %3624 = vxpose.xlu0.c.b16.cont [6/8] 0, 128
        %3625 = vxpose.xlu0.c.b16.cont [7/8] 0, 128
        %3626 = vxpose.xlu0.c.b16.end [8/8] 0, 128
        %v3627 = vpop.trf.xlu0
        %v3628 = vpop.trf.xlu0
        %v3629 = vpop.trf.xlu0
        %v3630 = vpop.trf.xlu0
        %v3631 = vpop.trf.xlu0
        %v3632 = vpop.trf.xlu0
        %v3633 = vpop.trf.xlu0
        %v3634 = vpop.trf.xlu0
        %3635 = vxpose.xlu0.c.b16.start [1/8] %v3409, 128
        %3636 = vxpose.xlu0.c.b16.cont [2/8] 0, 128
        %3637 = vxpose.xlu0.c.b16.cont [3/8] 0, 128
        %3638 = vxpose.xlu0.c.b16.cont [4/8] 0, 128
        %3639 = vxpose.xlu0.c.b16.cont [5/8] 0, 128
        %3640 = vxpose.xlu0.c.b16.cont [6/8] 0, 128
        %3641 = vxpose.xlu0.c.b16.cont [7/8] 0, 128
        %3642 = vxpose.xlu0.c.b16.end [8/8] 0, 128
        %v3643 = vpop.trf.xlu0
        %v3644 = vpop.trf.xlu0
        %v3645 = vpop.trf.xlu0
        %v3646 = vpop.trf.xlu0
        %v3647 = vpop.trf.xlu0
        %v3648 = vpop.trf.xlu0
        %v3649 = vpop.trf.xlu0
        %v3650 = vpop.trf.xlu0
        %3651 = vxpose.xlu0.c.b16.start [1/8] %v3410, 128
        %3652 = vxpose.xlu0.c.b16.cont [2/8] 0, 128
        %3653 = vxpose.xlu0.c.b16.cont [3/8] 0, 128
        %3654 = vxpose.xlu0.c.b16.cont [4/8] 0, 128
        %3655 = vxpose.xlu0.c.b16.cont [5/8] 0, 128
        %3656 = vxpose.xlu0.c.b16.cont [6/8] 0, 128
        %3657 = vxpose.xlu0.c.b16.cont [7/8] 0, 128
        %3658 = vxpose.xlu0.c.b16.end [8/8] 0, 128
        %v3659 = vpop.trf.xlu0
        %v3660 = vpop.trf.xlu0
        %v3661 = vpop.trf.xlu0
        %v3662 = vpop.trf.xlu0
        %v3663 = vpop.trf.xlu0
        %v3664 = vpop.trf.xlu0
        %v3665 = vpop.trf.xlu0
        %v3666 = vpop.trf.xlu0
        %3667 = vxpose.xlu0.c.b16.start [1/8] %v3419, 128
        %3668 = vxpose.xlu0.c.b16.cont [2/8] %v3420, 128
        %3669 = vxpose.xlu0.c.b16.cont [3/8] %v3435, 128
        %3670 = vxpose.xlu0.c.b16.cont [4/8] %v3436, 128
        %3671 = vxpose.xlu0.c.b16.cont [5/8] %v3451, 128
        %3672 = vxpose.xlu0.c.b16.cont [6/8] %v3452, 128
        %3673 = vxpose.xlu0.c.b16.cont [7/8] %v3467, 128
        %3674 = vxpose.xlu0.c.b16.end [8/8] %v3468, 128
        %v3675 = vpop.trf.xlu0
        %v3676 = vpop.trf.xlu0
        %v3677 = vpop.trf.xlu0
        %v3678 = vpop.trf.xlu0
        %v3679 = vpop.trf.xlu0
        %v3680 = vpop.trf.xlu0
        %v3681 = vpop.trf.xlu0
        %v3682 = vpop.trf.xlu0
        %3683 = vxpose.xlu0.c.b16.start [1/8] %v3483, 128
        %3684 = vxpose.xlu0.c.b16.cont [2/8] %v3484, 128
        %3685 = vxpose.xlu0.c.b16.cont [3/8] %v3499, 128
        %3686 = vxpose.xlu0.c.b16.cont [4/8] %v3500, 128
        %3687 = vxpose.xlu0.c.b16.cont [5/8] %v3515, 128
        %3688 = vxpose.xlu0.c.b16.cont [6/8] %v3516, 128
        %3689 = vxpose.xlu0.c.b16.cont [7/8] %v3531, 128
        %3690 = vxpose.xlu0.c.b16.end [8/8] %v3532, 128
        %v3691 = vpop.trf.xlu0
        %v3692 = vpop.trf.xlu0
        %v3693 = vpop.trf.xlu0
        %v3694 = vpop.trf.xlu0
        %v3695 = vpop.trf.xlu0
        %v3696 = vpop.trf.xlu0
        %v3697 = vpop.trf.xlu0
        %v3698 = vpop.trf.xlu0
        %3699 = vxpose.xlu0.c.b16.start [1/8] %v3547, 128
        %3700 = vxpose.xlu0.c.b16.cont [2/8] %v3548, 128
        %3701 = vxpose.xlu0.c.b16.cont [3/8] %v3563, 128
        %3702 = vxpose.xlu0.c.b16.cont [4/8] %v3564, 128
        %3703 = vxpose.xlu0.c.b16.cont [5/8] %v3579, 128
        %3704 = vxpose.xlu0.c.b16.cont [6/8] %v3580, 128
        %3705 = vxpose.xlu0.c.b16.cont [7/8] %v3595, 128
        %3706 = vxpose.xlu0.c.b16.end [8/8] %v3596, 128
        %v3707 = vpop.trf.xlu0
        %v3708 = vpop.trf.xlu0
        %v3709 = vpop.trf.xlu0
        %v3710 = vpop.trf.xlu0
        %v3711 = vpop.trf.xlu0
        %v3712 = vpop.trf.xlu0
        %v3713 = vpop.trf.xlu0
        %v3714 = vpop.trf.xlu0
        %3715 = vxpose.xlu0.c.b16.start [1/8] %v3611, 128
        %3716 = vxpose.xlu0.c.b16.cont [2/8] %v3612, 128
        %3717 = vxpose.xlu0.c.b16.cont [3/8] %v3627, 128
        %3718 = vxpose.xlu0.c.b16.cont [4/8] %v3628, 128
        %3719 = vxpose.xlu0.c.b16.cont [5/8] %v3643, 128
        %3720 = vxpose.xlu0.c.b16.cont [6/8] %v3644, 128
        %3721 = vxpose.xlu0.c.b16.cont [7/8] %v3659, 128
        %3722 = vxpose.xlu0.c.b16.end [8/8] %v3660, 128
        %v3723 = vpop.trf.xlu0
        %v3724 = vpop.trf.xlu0
        %v3725 = vpop.trf.xlu0
        %v3726 = vpop.trf.xlu0
        %v3727 = vpop.trf.xlu0
        %v3728 = vpop.trf.xlu0
        %v3729 = vpop.trf.xlu0
        %v3730 = vpop.trf.xlu0
        %v3731 = vld [vmem:[#allocation7] sm:$0xf]
        %v3732 = vld [vmem:[#allocation7 + $0x4] sm:$0xf]
        %v3733 = vld [vmem:[#allocation7 + $0x8] sm:$0xf]
        %v3734 = vld [vmem:[#allocation7 + $0xc] sm:$0xf]
        %v3735 = vld [vmem:[#allocation7 + $0x10] sm:$0xf]
        %v3736 = vld [vmem:[#allocation7 + $0x14] sm:$0xf]
        %v3737 = vld [vmem:[#allocation7 + $0x18] sm:$0xf]
        %v3738 = vld [vmem:[#allocation7 + $0x1c] sm:$0xf]
        %v3739 = vld [vmem:[#allocation7 + $0x20] sm:$0xf]
        %v3740 = vld [vmem:[#allocation7 + $0x24] sm:$0xf]
        %v3741 = vld [vmem:[#allocation7 + $0x28] sm:$0xf]
        %v3742 = vld [vmem:[#allocation7 + $0x2c] sm:$0xf]
        %v3743 = vld [vmem:[#allocation7 + $0x30] sm:$0xf]
        %v3744 = vld [vmem:[#allocation7 + $0x34] sm:$0xf]
        %v3745 = vld [vmem:[#allocation7 + $0x38] sm:$0xf]
        %v3746 = vld [vmem:[#allocation7 + $0x3c] sm:$0xf]
        %v3747 = vld [vmem:[%s5] sm:$0x1]
        %v3749 = vlaneseq
        %v3750 = vshrl.u32 %v3749, 7
        %v3751 = vsub.s32 0, %v3750
        %v3752 = vrot.slane %v3747, %v3751
        %v3770 = vunpack.c.l.b16 %v3731
        %v3771 = vunpack.c.l.b16 %v3732
        %v3772 = vunpack.c.l.b16 %v3733
        %v3773 = vunpack.c.l.b16 %v3734
        %v3774 = vunpack.c.l.b16 %v3735
        %v3775 = vunpack.c.l.b16 %v3736
        %v3776 = vunpack.c.l.b16 %v3737
        %v3777 = vunpack.c.l.b16 %v3738
        %v3778 = vunpack.c.l.b16 %v3739
        %v3779 = vunpack.c.l.b16 %v3740
        %v3780 = vunpack.c.l.b16 %v3741
        %v3781 = vunpack.c.l.b16 %v3742
        %v3782 = vunpack.c.l.b16 %v3743
        %v3783 = vunpack.c.l.b16 %v3744
        %v3784 = vunpack.c.l.b16 %v3745
        %v3785 = vunpack.c.l.b16 %v3746
        %v3786 = vpack.c.b16 %v3771, %v3770
        %v3787 = vpack.c.b16 %v3773, %v3772
        %v3788 = vpack.c.b16 %v3775, %v3774
        %v3789 = vpack.c.b16 %v3777, %v3776
        %v3790 = vpack.c.b16 %v3779, %v3778
        %v3791 = vpack.c.b16 %v3781, %v3780
        %v3792 = vpack.c.b16 %v3783, %v3782
        %v3793 = vpack.c.b16 %v3785, %v3784
        %3802 = vmatprep.subr.bf16.mxu0 0
        %3803 = vmatpush1.bf16.msra.mxu0 %v3793
        %3804 = vmatprep.subr.bf16.mxu0 0
        %3805 = vmatpush1.bf16.msra.mxu0 %v3792
        %3806 = vmatprep.subr.bf16.mxu0 0
        %3807 = vmatpush1.bf16.msra.mxu0 %v3791
        %3808 = vmatprep.subr.bf16.mxu0 0
        %3809 = vmatpush1.bf16.msra.mxu0 %v3790
        %3810 = vmatprep.subr.bf16.mxu0 0
        %3811 = vmatpush1.bf16.msra.mxu0 %v3789
        %3812 = vmatprep.subr.bf16.mxu0 0
        %3813 = vmatpush1.bf16.msra.mxu0 %v3788
        %3814 = vmatprep.subr.bf16.mxu0 0
        %3815 = vmatpush1.bf16.msra.mxu0 %v3787
        %3816 = vmatprep.subr.bf16.mxu0 0
        %3817 = vmatpush1.bf16.msra.mxu0 %v3786
        %3818 = vmatprep.subr.bf16.mxu0 0
        %3819 = vmatpush2.bf16.msra.mxu0 0
        %3820 = vmatprep.subr.bf16.mxu0 0
        %3821 = vmatpush2.bf16.msra.mxu0 0
        %3822 = vmatprep.subr.bf16.mxu0 0
        %3823 = vmatpush2.bf16.msra.mxu0 0
        %3824 = vmatprep.subr.bf16.mxu0 0
        %3825 = vmatpush2.bf16.msra.mxu0 0
        %3826 = vmatprep.subr.bf16.mxu0 0
        %3827 = vmatpush2.bf16.msra.mxu0 0
        %3828 = vmatprep.subr.bf16.mxu0 0
        %3829 = vmatpush2.bf16.msra.mxu0 0
        %3830 = vmatprep.subr.bf16.mxu0 0
        %3831 = vmatpush2.bf16.msra.mxu0 0
        %3832 = vmatprep.subr.bf16.mxu0 0
        %3833 = vmatpush2.bf16.msra.mxu0 0
        %3834 = vmatprep.mubr.bf16.mxu0 0
        %3835 = vmatmul.mubr.bf16.gmra.mxu0 %v3675
        %v3836 = vpop.f32.mrf.mxu0
        %v3837 = vadd.f32 %v3752, %v3836
        %v3838 = vpop.f32.mrf.mxu0
        %v3839 = vpop.f32.mrf.mxu0
        %v3840 = vadd.f32 %v3752, %v3839
        %v3841 = vpop.f32.mrf.mxu0
        %3842 = vmatprep.mubr.bf16.mxu0 0
        %3843 = vmatmul.mubr.bf16.gmra.mxu0 %v3691
        %v3844 = vpop.f32.mrf.mxu0
        %v3845 = vadd.f32 %v3752, %v3844
        %v3846 = vpop.f32.mrf.mxu0
        %v3847 = vpop.f32.mrf.mxu0
        %v3848 = vadd.f32 %v3752, %v3847
        %v3849 = vpop.f32.mrf.mxu0
        %3850 = vmatprep.mubr.bf16.mxu0 0
        %3851 = vmatmul.mubr.bf16.gmra.mxu0 %v3707
        %v3852 = vpop.f32.mrf.mxu0
        %v3853 = vadd.f32 %v3752, %v3852
        %v3854 = vpop.f32.mrf.mxu0
        %v3855 = vpop.f32.mrf.mxu0
        %v3856 = vadd.f32 %v3752, %v3855
        %v3857 = vpop.f32.mrf.mxu0
        %3858 = vmatprep.mubr.bf16.mxu0 0
        %3859 = vmatmul.mubr.bf16.gmra.mxu0 %v3723
        %v3860 = vpop.f32.mrf.mxu0
        %v3861 = vadd.f32 %v3752, %v3860
        %v3862 = vpop.f32.mrf.mxu0
        %v3863 = vpop.f32.mrf.mxu0
        %v3864 = vadd.f32 %v3752, %v3863
        %v3865 = vpop.f32.mrf.mxu0
        %3866 = vdwg.mxu0
        %v3867 = vadd.f32 %v581, %v3837
        %v3868 = vadd.f32 %v582, %v3840
        %v3869 = vadd.f32 %v583, %v3845
        %v3870 = vadd.f32 %v584, %v3848
        %v3871 = vadd.f32 %v585, %v3853
        %v3872 = vadd.f32 %v586, %v3856
        %v3873 = vadd.f32 %v587, %v3861
        %v3874 = vadd.f32 %v588, %v3864
        %3875 = vadd.xlane.f32.xlu0 %v3867
        %v3876 = vpop.xlane.xlu0 %3875
        %3877 = vadd.xlane.f32.xlu0 %v3868
        %v3878 = vpop.xlane.xlu0 %3877
        %3879 = vadd.xlane.f32.xlu0 %v3869
        %v3880 = vpop.xlane.xlu0 %3879
        %3881 = vadd.xlane.f32.xlu0 %v3870
        %v3882 = vpop.xlane.xlu0 %3881
        %3883 = vadd.xlane.f32.xlu0 %v3871
        %v3884 = vpop.xlane.xlu0 %3883
        %3885 = vadd.xlane.f32.xlu0 %v3872
        %v3886 = vpop.xlane.xlu0 %3885
        %3887 = vadd.xlane.f32.xlu0 %v3873
        %v3888 = vpop.xlane.xlu0 %3887
        %3889 = vadd.xlane.f32.xlu0 %v3874
        %v3890 = vpop.xlane.xlu0 %3889
        %v3891 = vrcp.pop 128.0
        %v3892 = vmul.f32 %v3876, %v3891
        %v3893 = vmul.f32 %v3878, %v3891
        %v3894 = vmul.f32 %v3880, %v3891
        %v3895 = vmul.f32 %v3882, %v3891
        %v3896 = vmul.f32 %v3884, %v3891
        %v3897 = vmul.f32 %v3886, %v3891
        %v3898 = vmul.f32 %v3888, %v3891
        %v3899 = vmul.f32 %v3890, %v3891
        %v3900 = vsub.f32 %v3867, %v3892
        %v3901 = vsub.f32 %v3868, %v3893
        %v3902 = vsub.f32 %v3869, %v3894
        %v3903 = vsub.f32 %v3870, %v3895
        %v3904 = vsub.f32 %v3871, %v3896
        %v3905 = vsub.f32 %v3872, %v3897
        %v3906 = vsub.f32 %v3873, %v3898
        %v3907 = vsub.f32 %v3874, %v3899
        %v3908 = vmul.f32 %v3900, %v3900
        %v3909 = vmul.f32 %v3901, %v3901
        %v3910 = vmul.f32 %v3902, %v3902
        %v3911 = vmul.f32 %v3903, %v3903
        %v3912 = vmul.f32 %v3904, %v3904
        %v3913 = vmul.f32 %v3905, %v3905
        %v3914 = vmul.f32 %v3906, %v3906
        %v3915 = vmul.f32 %v3907, %v3907
        %3916 = vadd.xlane.f32.xlu0 %v3908
        %v3917 = vpop.xlane.xlu0 %3916
        %3918 = vadd.xlane.f32.xlu0 %v3909
        %v3919 = vpop.xlane.xlu0 %3918
        %3920 = vadd.xlane.f32.xlu0 %v3910
        %v3921 = vpop.xlane.xlu0 %3920
        %3922 = vadd.xlane.f32.xlu0 %v3911
        %v3923 = vpop.xlane.xlu0 %3922
        %3924 = vadd.xlane.f32.xlu0 %v3912
        %v3925 = vpop.xlane.xlu0 %3924
        %3926 = vadd.xlane.f32.xlu0 %v3913
        %v3927 = vpop.xlane.xlu0 %3926
        %3928 = vadd.xlane.f32.xlu0 %v3914
        %v3929 = vpop.xlane.xlu0 %3928
        %3930 = vadd.xlane.f32.xlu0 %v3915
        %v3931 = vpop.xlane.xlu0 %3930
        %v3932 = vmul.f32 %v3917, %v3891
        %v3933 = vmul.f32 %v3919, %v3891
        %v3934 = vmul.f32 %v3921, %v3891
        %v3935 = vmul.f32 %v3923, %v3891
        %v3936 = vmul.f32 %v3925, %v3891
        %v3937 = vmul.f32 %v3927, %v3891
        %v3938 = vmul.f32 %v3929, %v3891
        %v3939 = vmul.f32 %v3931, %v3891
        %v3940 = vadd.f32 %v3932, 1e-05
        %v3941 = vadd.f32 %v3933, 1e-05
        %v3942 = vadd.f32 %v3934, 1e-05
        %v3943 = vadd.f32 %v3935, 1e-05
        %v3944 = vadd.f32 %v3936, 1e-05
        %v3945 = vadd.f32 %v3937, 1e-05
        %v3946 = vadd.f32 %v3938, 1e-05
        %v3947 = vadd.f32 %v3939, 1e-05
        %v3948 = vrsqrt.pop %v3940
        %v3949 = vrsqrt.pop %v3941
        %v3950 = vrsqrt.pop %v3942
        %v3951 = vrsqrt.pop %v3943
        %v3952 = vrsqrt.pop %v3944
        %v3953 = vrsqrt.pop %v3945
        %v3954 = vrsqrt.pop %v3946
        %v3955 = vrsqrt.pop %v3947
        %v3956 = vmul.f32 %v3900, %v3948
        %v3957 = vmul.f32 %v3901, %v3949
        %v3958 = vmul.f32 %v3902, %v3950
        %v3959 = vmul.f32 %v3903, %v3951
        %v3960 = vmul.f32 %v3904, %v3952
        %v3961 = vmul.f32 %v3905, %v3953
        %v3962 = vmul.f32 %v3906, %v3954
        %v3963 = vmul.f32 %v3907, %v3955
        %v3964 = vld [vmem:[%s6] sm:$0x1]
        %v3966 = vlaneseq
        %v3967 = vshrl.u32 %v3966, 7
        %v3968 = vsub.s32 0, %v3967
        %v3969 = vrot.slane %v3964, %v3968
        %v3971 = vmul.f32 %v3956, %v3969
        %v3972 = vmul.f32 %v3957, %v3969
        %v3973 = vmul.f32 %v3958, %v3969
        %v3974 = vmul.f32 %v3959, %v3969
        %v3975 = vmul.f32 %v3960, %v3969
        %v3976 = vmul.f32 %v3961, %v3969
        %v3977 = vmul.f32 %v3962, %v3969
        %v3978 = vmul.f32 %v3963, %v3969
        %v3979 = vld [vmem:[%s7] sm:$0x1]
        %v3981 = vlaneseq
        %v3982 = vshrl.u32 %v3981, 7
        %v3983 = vsub.s32 0, %v3982
        %v3984 = vrot.slane %v3979, %v3983
        %v3986 = vadd.f32 %v3971, %v3984
        %v3987 = vadd.f32 %v3972, %v3984
        %v3988 = vadd.f32 %v3973, %v3984
        %v3989 = vadd.f32 %v3974, %v3984
        %v3990 = vadd.f32 %v3975, %v3984
        %v3991 = vadd.f32 %v3976, %v3984
        %v3992 = vadd.f32 %v3977, %v3984
        %v3993 = vadd.f32 %v3978, %v3984
        %v3994 = vpack.c.bf16 %v3987, %v3986
        %v3995 = vpack.c.bf16 %v3989, %v3988
        %v3996 = vpack.c.bf16 %v3991, %v3990
        %v3997 = vpack.c.bf16 %v3993, %v3992
        %v3998 = vld [vmem:[#allocation8] sm:$0xff]
        %v3999 = vld [vmem:[#allocation8 + $0x8] sm:$0xff]
        %v4000 = vld [vmem:[#allocation8 + $0x10] sm:$0xff]
        %v4001 = vld [vmem:[#allocation8 + $0x18] sm:$0xff]
        %v4002 = vld [vmem:[#allocation8 + $0x20] sm:$0xff]
        %v4003 = vld [vmem:[#allocation8 + $0x28] sm:$0xff]
        %v4004 = vld [vmem:[#allocation8 + $0x30] sm:$0xff]
        %v4005 = vld [vmem:[#allocation8 + $0x38] sm:$0xff]
        %v4006 = vld [vmem:[#allocation8 + $0x40] sm:$0xff]
        %v4007 = vld [vmem:[#allocation8 + $0x48] sm:$0xff]
        %v4008 = vld [vmem:[#allocation8 + $0x50] sm:$0xff]
        %v4009 = vld [vmem:[#allocation8 + $0x58] sm:$0xff]
        %v4010 = vld [vmem:[#allocation8 + $0x60] sm:$0xff]
        %v4011 = vld [vmem:[#allocation8 + $0x68] sm:$0xff]
        %v4012 = vld [vmem:[#allocation8 + $0x70] sm:$0xff]
        %v4013 = vld [vmem:[#allocation8 + $0x78] sm:$0xff]
        %v4014 = vld [vmem:[%s9] sm:$0x3]
        %v4016 = vlaneseq
        %v4017 = vshrl.u32 %v4016, 7
        %v4018 = vsub.s32 0, %v4017
        %v4019 = vrot.slane %v4014, %v4018
        %v4020 = vlaneseq
        %v4021 = vshrl.u32 %v4020, 7
        %v4022 = vsub.s32 1, %v4021
        %v4023 = vrot.slane %v4014, %v4022
        %v4042 = vunpack.c.l.b16 %v3998
        %v4043 = vunpack.c.h.b16 %v3998
        %v4044 = vunpack.c.l.b16 %v3999
        %v4045 = vunpack.c.h.b16 %v3999
        %v4046 = vunpack.c.l.b16 %v4000
        %v4047 = vunpack.c.h.b16 %v4000
        %v4048 = vunpack.c.l.b16 %v4001
        %v4049 = vunpack.c.h.b16 %v4001
        %v4050 = vunpack.c.l.b16 %v4002
        %v4051 = vunpack.c.h.b16 %v4002
        %v4052 = vunpack.c.l.b16 %v4003
        %v4053 = vunpack.c.h.b16 %v4003
        %v4054 = vunpack.c.l.b16 %v4004
        %v4055 = vunpack.c.h.b16 %v4004
        %v4056 = vunpack.c.l.b16 %v4005
        %v4057 = vunpack.c.h.b16 %v4005
        %v4058 = vunpack.c.l.b16 %v4006
        %v4059 = vunpack.c.h.b16 %v4006
        %v4060 = vunpack.c.l.b16 %v4007
        %v4061 = vunpack.c.h.b16 %v4007
        %v4062 = vunpack.c.l.b16 %v4008
        %v4063 = vunpack.c.h.b16 %v4008
        %v4064 = vunpack.c.l.b16 %v4009
        %v4065 = vunpack.c.h.b16 %v4009
        %v4066 = vunpack.c.l.b16 %v4010
        %v4067 = vunpack.c.h.b16 %v4010
        %v4068 = vunpack.c.l.b16 %v4011
        %v4069 = vunpack.c.h.b16 %v4011
        %v4070 = vunpack.c.l.b16 %v4012
        %v4071 = vunpack.c.h.b16 %v4012
        %v4072 = vunpack.c.l.b16 %v4013
        %v4073 = vunpack.c.h.b16 %v4013
        %v4074 = vpack.c.b16 %v4044, %v4042
        %v4075 = vpack.c.b16 %v4045, %v4043
        %v4076 = vpack.c.b16 %v4048, %v4046
        %v4077 = vpack.c.b16 %v4049, %v4047
        %v4078 = vpack.c.b16 %v4052, %v4050
        %v4079 = vpack.c.b16 %v4053, %v4051
        %v4080 = vpack.c.b16 %v4056, %v4054
        %v4081 = vpack.c.b16 %v4057, %v4055
        %v4082 = vpack.c.b16 %v4060, %v4058
        %v4083 = vpack.c.b16 %v4061, %v4059
        %v4084 = vpack.c.b16 %v4064, %v4062
        %v4085 = vpack.c.b16 %v4065, %v4063
        %v4086 = vpack.c.b16 %v4068, %v4066
        %v4087 = vpack.c.b16 %v4069, %v4067
        %v4088 = vpack.c.b16 %v4072, %v4070
        %v4089 = vpack.c.b16 %v4073, %v4071
        %4106 = vmatprep.subr.bf16.mxu0 %v4089
        %4107 = vmatpush1.bf16.msra.mxu0 %v4088
        %4108 = vmatprep.subr.bf16.mxu0 %v4087
        %4109 = vmatpush1.bf16.msra.mxu0 %v4086
        %4110 = vmatprep.subr.bf16.mxu0 %v4085
        %4111 = vmatpush1.bf16.msra.mxu0 %v4084
        %4112 = vmatprep.subr.bf16.mxu0 %v4083
        %4113 = vmatpush1.bf16.msra.mxu0 %v4082
        %4114 = vmatprep.subr.bf16.mxu0 %v4081
        %4115 = vmatpush1.bf16.msra.mxu0 %v4080
        %4116 = vmatprep.subr.bf16.mxu0 %v4079
        %4117 = vmatpush1.bf16.msra.mxu0 %v4078
        %4118 = vmatprep.subr.bf16.mxu0 %v4077
        %4119 = vmatpush1.bf16.msra.mxu0 %v4076
        %4120 = vmatprep.subr.bf16.mxu0 %v4075
        %4121 = vmatpush1.bf16.msra.mxu0 %v4074
        %4122 = vmatprep.subr.bf16.mxu0 0
        %4123 = vmatpush2.bf16.msra.mxu0 0
        %4124 = vmatprep.subr.bf16.mxu0 0
        %4125 = vmatpush2.bf16.msra.mxu0 0
        %4126 = vmatprep.subr.bf16.mxu0 0
        %4127 = vmatpush2.bf16.msra.mxu0 0
        %4128 = vmatprep.subr.bf16.mxu0 0
        %4129 = vmatpush2.bf16.msra.mxu0 0
        %4130 = vmatprep.subr.bf16.mxu0 0
        %4131 = vmatpush2.bf16.msra.mxu0 0
        %4132 = vmatprep.subr.bf16.mxu0 0
        %4133 = vmatpush2.bf16.msra.mxu0 0
        %4134 = vmatprep.subr.bf16.mxu0 0
        %4135 = vmatpush2.bf16.msra.mxu0 0
        %4136 = vmatprep.subr.bf16.mxu0 0
        %4137 = vmatpush2.bf16.msra.mxu0 0
        %4138 = vmatprep.mubr.bf16.mxu0 0
        %4139 = vmatmul.mubr.bf16.gmra.mxu0 %v3994
        %v4140 = vpop.f32.mrf.mxu0
        %v4141 = vadd.f32 %v4019, %v4140
        %v4142 = vpop.f32.mrf.mxu0
        %v4143 = vadd.f32 %v4023, %v4142
        %v4144 = vpop.f32.mrf.mxu0
        %v4145 = vadd.f32 %v4019, %v4144
        %v4146 = vpop.f32.mrf.mxu0
        %v4147 = vadd.f32 %v4023, %v4146
        %4148 = vmatprep.mubr.bf16.mxu0 0
        %4149 = vmatmul.mubr.bf16.gmra.mxu0 %v3995
        %v4150 = vpop.f32.mrf.mxu0
        %v4151 = vadd.f32 %v4019, %v4150
        %v4152 = vpop.f32.mrf.mxu0
        %v4153 = vadd.f32 %v4023, %v4152
        %v4154 = vpop.f32.mrf.mxu0
        %v4155 = vadd.f32 %v4019, %v4154
        %v4156 = vpop.f32.mrf.mxu0
        %v4157 = vadd.f32 %v4023, %v4156
        %4158 = vmatprep.mubr.bf16.mxu0 0
        %4159 = vmatmul.mubr.bf16.gmra.mxu0 %v3996
        %v4160 = vpop.f32.mrf.mxu0
        %v4161 = vadd.f32 %v4019, %v4160
        %v4162 = vpop.f32.mrf.mxu0
        %v4163 = vadd.f32 %v4023, %v4162
        %v4164 = vpop.f32.mrf.mxu0
        %v4165 = vadd.f32 %v4019, %v4164
        %v4166 = vpop.f32.mrf.mxu0
        %v4167 = vadd.f32 %v4023, %v4166
        %4168 = vmatprep.mubr.bf16.mxu0 0
        %4169 = vmatmul.mubr.bf16.gmra.mxu0 %v3997
        %v4170 = vpop.f32.mrf.mxu0
        %v4171 = vadd.f32 %v4019, %v4170
        %v4172 = vpop.f32.mrf.mxu0
        %v4173 = vadd.f32 %v4023, %v4172
        %v4174 = vpop.f32.mrf.mxu0
        %v4175 = vadd.f32 %v4019, %v4174
        %v4176 = vpop.f32.mrf.mxu0
        %v4177 = vadd.f32 %v4023, %v4176
        %4178 = vdwg.mxu0
        %v4179 = vmax.f32 %v4141, 0.0
        %v4180 = vmax.f32 %v4143, 0.0
        %v4181 = vmax.f32 %v4145, 0.0
        %v4182 = vmax.f32 %v4147, 0.0
        %v4183 = vmax.f32 %v4151, 0.0
        %v4184 = vmax.f32 %v4153, 0.0
        %v4185 = vmax.f32 %v4155, 0.0
        %v4186 = vmax.f32 %v4157, 0.0
        %v4187 = vmax.f32 %v4161, 0.0
        %v4188 = vmax.f32 %v4163, 0.0
        %v4189 = vmax.f32 %v4165, 0.0
        %v4190 = vmax.f32 %v4167, 0.0
        %v4191 = vmax.f32 %v4171, 0.0
        %v4192 = vmax.f32 %v4173, 0.0
        %v4193 = vmax.f32 %v4175, 0.0
        %v4194 = vmax.f32 %v4177, 0.0
        %v4195 = vpack.c.bf16 %v4181, %v4179
        %v4196 = vpack.c.bf16 %v4182, %v4180
        %v4197 = vpack.c.bf16 %v4185, %v4183
        %v4198 = vpack.c.bf16 %v4186, %v4184
        %v4199 = vpack.c.bf16 %v4189, %v4187
        %v4200 = vpack.c.bf16 %v4190, %v4188
        %v4201 = vpack.c.bf16 %v4193, %v4191
        %v4202 = vpack.c.bf16 %v4194, %v4192
        %v4203 = vld [vmem:[#allocation10] sm:$0xff]
        %v4204 = vld [vmem:[#allocation10 + $0x8] sm:$0xff]
        %v4205 = vld [vmem:[#allocation10 + $0x10] sm:$0xff]
        %v4206 = vld [vmem:[#allocation10 + $0x18] sm:$0xff]
        %v4207 = vld [vmem:[#allocation10 + $0x20] sm:$0xff]
        %v4208 = vld [vmem:[#allocation10 + $0x28] sm:$0xff]
        %v4209 = vld [vmem:[#allocation10 + $0x30] sm:$0xff]
        %v4210 = vld [vmem:[#allocation10 + $0x38] sm:$0xff]
        %v4211 = vld [vmem:[#allocation10 + $0x40] sm:$0xff]
        %v4212 = vld [vmem:[#allocation10 + $0x48] sm:$0xff]
        %v4213 = vld [vmem:[#allocation10 + $0x50] sm:$0xff]
        %v4214 = vld [vmem:[#allocation10 + $0x58] sm:$0xff]
        %v4215 = vld [vmem:[#allocation10 + $0x60] sm:$0xff]
        %v4216 = vld [vmem:[#allocation10 + $0x68] sm:$0xff]
        %v4217 = vld [vmem:[#allocation10 + $0x70] sm:$0xff]
        %v4218 = vld [vmem:[#allocation10 + $0x78] sm:$0xff]
        %v4219 = vld [vmem:[#allocation10 + $0x80] sm:$0xff]
        %v4220 = vld [vmem:[#allocation10 + $0x88] sm:$0xff]
        %v4221 = vld [vmem:[#allocation10 + $0x90] sm:$0xff]
        %v4222 = vld [vmem:[#allocation10 + $0x98] sm:$0xff]
        %v4223 = vld [vmem:[#allocation10 + $0xa0] sm:$0xff]
        %v4224 = vld [vmem:[#allocation10 + $0xa8] sm:$0xff]
        %v4225 = vld [vmem:[#allocation10 + $0xb0] sm:$0xff]
        %v4226 = vld [vmem:[#allocation10 + $0xb8] sm:$0xff]
        %v4227 = vld [vmem:[#allocation10 + $0xc0] sm:$0xff]
        %v4228 = vld [vmem:[#allocation10 + $0xc8] sm:$0xff]
        %v4229 = vld [vmem:[#allocation10 + $0xd0] sm:$0xff]
        %v4230 = vld [vmem:[#allocation10 + $0xd8] sm:$0xff]
        %v4231 = vld [vmem:[#allocation10 + $0xe0] sm:$0xff]
        %v4232 = vld [vmem:[#allocation10 + $0xe8] sm:$0xff]
        %v4233 = vld [vmem:[#allocation10 + $0xf0] sm:$0xff]
        %v4234 = vld [vmem:[#allocation10 + $0xf8] sm:$0xff]
        %v4235 = vld [vmem:[%s11] sm:$0x3]
        %v4237 = vlaneseq
        %v4238 = vshrl.u32 %v4237, 7
        %v4239 = vsub.s32 0, %v4238
        %v4240 = vrot.slane %v4235, %v4239
        %v4241 = vlaneseq
        %v4242 = vshrl.u32 %v4241, 7
        %v4243 = vsub.s32 1, %v4242
        %v4244 = vrot.slane %v4235, %v4243
        %v4279 = vunpack.c.l.b16 %v4203
        %v4280 = vunpack.c.h.b16 %v4203
        %v4281 = vunpack.c.l.b16 %v4204
        %v4282 = vunpack.c.h.b16 %v4204
        %v4283 = vunpack.c.l.b16 %v4205
        %v4284 = vunpack.c.h.b16 %v4205
        %v4285 = vunpack.c.l.b16 %v4206
        %v4286 = vunpack.c.h.b16 %v4206
        %v4287 = vunpack.c.l.b16 %v4207
        %v4288 = vunpack.c.h.b16 %v4207
        %v4289 = vunpack.c.l.b16 %v4208
        %v4290 = vunpack.c.h.b16 %v4208
        %v4291 = vunpack.c.l.b16 %v4209
        %v4292 = vunpack.c.h.b16 %v4209
        %v4293 = vunpack.c.l.b16 %v4210
        %v4294 = vunpack.c.h.b16 %v4210
        %v4295 = vunpack.c.l.b16 %v4211
        %v4296 = vunpack.c.h.b16 %v4211
        %v4297 = vunpack.c.l.b16 %v4212
        %v4298 = vunpack.c.h.b16 %v4212
        %v4299 = vunpack.c.l.b16 %v4213
        %v4300 = vunpack.c.h.b16 %v4213
        %v4301 = vunpack.c.l.b16 %v4214
        %v4302 = vunpack.c.h.b16 %v4214
        %v4303 = vunpack.c.l.b16 %v4215
        %v4304 = vunpack.c.h.b16 %v4215
        %v4305 = vunpack.c.l.b16 %v4216
        %v4306 = vunpack.c.h.b16 %v4216
        %v4307 = vunpack.c.l.b16 %v4217
        %v4308 = vunpack.c.h.b16 %v4217
        %v4309 = vunpack.c.l.b16 %v4218
        %v4310 = vunpack.c.h.b16 %v4218
        %v4311 = vunpack.c.l.b16 %v4219
        %v4312 = vunpack.c.h.b16 %v4219
        %v4313 = vunpack.c.l.b16 %v4220
        %v4314 = vunpack.c.h.b16 %v4220
        %v4315 = vunpack.c.l.b16 %v4221
        %v4316 = vunpack.c.h.b16 %v4221
        %v4317 = vunpack.c.l.b16 %v4222
        %v4318 = vunpack.c.h.b16 %v4222
        %v4319 = vunpack.c.l.b16 %v4223
        %v4320 = vunpack.c.h.b16 %v4223
        %v4321 = vunpack.c.l.b16 %v4224
        %v4322 = vunpack.c.h.b16 %v4224
        %v4323 = vunpack.c.l.b16 %v4225
        %v4324 = vunpack.c.h.b16 %v4225
        %v4325 = vunpack.c.l.b16 %v4226
        %v4326 = vunpack.c.h.b16 %v4226
        %v4327 = vunpack.c.l.b16 %v4227
        %v4328 = vunpack.c.h.b16 %v4227
        %v4329 = vunpack.c.l.b16 %v4228
        %v4330 = vunpack.c.h.b16 %v4228
        %v4331 = vunpack.c.l.b16 %v4229
        %v4332 = vunpack.c.h.b16 %v4229
        %v4333 = vunpack.c.l.b16 %v4230
        %v4334 = vunpack.c.h.b16 %v4230
        %v4335 = vunpack.c.l.b16 %v4231
        %v4336 = vunpack.c.h.b16 %v4231
        %v4337 = vunpack.c.l.b16 %v4232
        %v4338 = vunpack.c.h.b16 %v4232
        %v4339 = vunpack.c.l.b16 %v4233
        %v4340 = vunpack.c.h.b16 %v4233
        %v4341 = vunpack.c.l.b16 %v4234
        %v4342 = vunpack.c.h.b16 %v4234
        %v4343 = vpack.c.b16 %v4281, %v4279
        %v4344 = vpack.c.b16 %v4282, %v4280
        %v4345 = vpack.c.b16 %v4285, %v4283
        %v4346 = vpack.c.b16 %v4286, %v4284
        %v4347 = vpack.c.b16 %v4289, %v4287
        %v4348 = vpack.c.b16 %v4290, %v4288
        %v4349 = vpack.c.b16 %v4293, %v4291
        %v4350 = vpack.c.b16 %v4294, %v4292
        %v4351 = vpack.c.b16 %v4297, %v4295
        %v4352 = vpack.c.b16 %v4298, %v4296
        %v4353 = vpack.c.b16 %v4301, %v4299
        %v4354 = vpack.c.b16 %v4302, %v4300
        %v4355 = vpack.c.b16 %v4305, %v4303
        %v4356 = vpack.c.b16 %v4306, %v4304
        %v4357 = vpack.c.b16 %v4309, %v4307
        %v4358 = vpack.c.b16 %v4310, %v4308
        %v4359 = vpack.c.b16 %v4313, %v4311
        %v4360 = vpack.c.b16 %v4314, %v4312
        %v4361 = vpack.c.b16 %v4317, %v4315
        %v4362 = vpack.c.b16 %v4318, %v4316
        %v4363 = vpack.c.b16 %v4321, %v4319
        %v4364 = vpack.c.b16 %v4322, %v4320
        %v4365 = vpack.c.b16 %v4325, %v4323
        %v4366 = vpack.c.b16 %v4326, %v4324
        %v4367 = vpack.c.b16 %v4329, %v4327
        %v4368 = vpack.c.b16 %v4330, %v4328
        %v4369 = vpack.c.b16 %v4333, %v4331
        %v4370 = vpack.c.b16 %v4334, %v4332
        %v4371 = vpack.c.b16 %v4337, %v4335
        %v4372 = vpack.c.b16 %v4338, %v4336
        %v4373 = vpack.c.b16 %v4341, %v4339
        %v4374 = vpack.c.b16 %v4342, %v4340
        %4407 = vmatprep.subr.bf16.mxu0 %v4358
        %4408 = vmatpush1.bf16.msra.mxu0 %v4357
        %4409 = vmatprep.subr.bf16.mxu0 %v4356
        %4410 = vmatpush1.bf16.msra.mxu0 %v4355
        %4411 = vmatprep.subr.bf16.mxu0 %v4354
        %4412 = vmatpush1.bf16.msra.mxu0 %v4353
        %4413 = vmatprep.subr.bf16.mxu0 %v4352
        %4414 = vmatpush1.bf16.msra.mxu0 %v4351
        %4415 = vmatprep.subr.bf16.mxu0 %v4350
        %4416 = vmatpush1.bf16.msra.mxu0 %v4349
        %4417 = vmatprep.subr.bf16.mxu0 %v4348
        %4418 = vmatpush1.bf16.msra.mxu0 %v4347
        %4419 = vmatprep.subr.bf16.mxu0 %v4346
        %4420 = vmatpush1.bf16.msra.mxu0 %v4345
        %4421 = vmatprep.subr.bf16.mxu0 %v4344
        %4422 = vmatpush1.bf16.msra.mxu0 %v4343
        %4423 = vmatprep.subr.bf16.mxu0 %v4374
        %4424 = vmatpush2.bf16.msra.mxu0 %v4373
        %4425 = vmatprep.subr.bf16.mxu0 %v4372
        %4426 = vmatpush2.bf16.msra.mxu0 %v4371
        %4427 = vmatprep.subr.bf16.mxu0 %v4370
        %4428 = vmatpush2.bf16.msra.mxu0 %v4369
        %4429 = vmatprep.subr.bf16.mxu0 %v4368
        %4430 = vmatpush2.bf16.msra.mxu0 %v4367
        %4431 = vmatprep.subr.bf16.mxu0 %v4366
        %4432 = vmatpush2.bf16.msra.mxu0 %v4365
        %4433 = vmatprep.subr.bf16.mxu0 %v4364
        %4434 = vmatpush2.bf16.msra.mxu0 %v4363
        %4435 = vmatprep.subr.bf16.mxu0 %v4362
        %4436 = vmatpush2.bf16.msra.mxu0 %v4361
        %4437 = vmatprep.subr.bf16.mxu0 %v4360
        %4438 = vmatpush2.bf16.msra.mxu0 %v4359
        %4439 = vmatprep.mubr.bf16.mxu0 %v4196
        %4440 = vmatmul.mubr.bf16.gmra.mxu0 %v4195
        %v4441 = vpop.f32.mrf.mxu0
        %v4442 = vadd.f32 %v4240, %v4441
        %v4443 = vpop.f32.mrf.mxu0
        %v4444 = vadd.f32 %v4244, %v4443
        %v4445 = vpop.f32.mrf.mxu0
        %v4446 = vadd.f32 %v4240, %v4445
        %v4447 = vpop.f32.mrf.mxu0
        %v4448 = vadd.f32 %v4244, %v4447
        %4449 = vmatprep.mubr.bf16.mxu0 %v4198
        %4450 = vmatmul.mubr.bf16.gmra.mxu0 %v4197
        %v4451 = vpop.f32.mrf.mxu0
        %v4452 = vadd.f32 %v4240, %v4451
        %v4453 = vpop.f32.mrf.mxu0
        %v4454 = vadd.f32 %v4244, %v4453
        %v4455 = vpop.f32.mrf.mxu0
        %v4456 = vadd.f32 %v4240, %v4455
        %v4457 = vpop.f32.mrf.mxu0
        %v4458 = vadd.f32 %v4244, %v4457
        %4459 = vmatprep.mubr.bf16.mxu0 %v4200
        %4460 = vmatmul.mubr.bf16.gmra.mxu0 %v4199
        %v4461 = vpop.f32.mrf.mxu0
        %v4462 = vadd.f32 %v4240, %v4461
        %v4463 = vpop.f32.mrf.mxu0
        %v4464 = vadd.f32 %v4244, %v4463
        %v4465 = vpop.f32.mrf.mxu0
        %v4466 = vadd.f32 %v4240, %v4465
        %v4467 = vpop.f32.mrf.mxu0
        %v4468 = vadd.f32 %v4244, %v4467
        %4469 = vmatprep.mubr.bf16.mxu0 %v4202
        %4470 = vmatmul.mubr.bf16.gmra.mxu0 %v4201
        %v4471 = vpop.f32.mrf.mxu0
        %v4472 = vadd.f32 %v4240, %v4471
        %v4473 = vpop.f32.mrf.mxu0
        %v4474 = vadd.f32 %v4244, %v4473
        %v4475 = vpop.f32.mrf.mxu0
        %v4476 = vadd.f32 %v4240, %v4475
        %v4477 = vpop.f32.mrf.mxu0
        %v4478 = vadd.f32 %v4244, %v4477
        %4479 = vdwg.mxu0
        %v4480 = vmax.f32 %v4442, 0.0
        %v4481 = vmax.f32 %v4444, 0.0
        %v4482 = vmax.f32 %v4446, 0.0
        %v4483 = vmax.f32 %v4448, 0.0
        %v4484 = vmax.f32 %v4452, 0.0
        %v4485 = vmax.f32 %v4454, 0.0
        %v4486 = vmax.f32 %v4456, 0.0
        %v4487 = vmax.f32 %v4458, 0.0
        %v4488 = vmax.f32 %v4462, 0.0
        %v4489 = vmax.f32 %v4464, 0.0
        %v4490 = vmax.f32 %v4466, 0.0
        %v4491 = vmax.f32 %v4468, 0.0
        %v4492 = vmax.f32 %v4472, 0.0
        %v4493 = vmax.f32 %v4474, 0.0
        %v4494 = vmax.f32 %v4476, 0.0
        %v4495 = vmax.f32 %v4478, 0.0
        %v4496 = vpack.c.bf16 %v4482, %v4480
        %v4497 = vpack.c.bf16 %v4483, %v4481
        %v4498 = vpack.c.bf16 %v4486, %v4484
        %v4499 = vpack.c.bf16 %v4487, %v4485
        %v4500 = vpack.c.bf16 %v4490, %v4488
        %v4501 = vpack.c.bf16 %v4491, %v4489
        %v4502 = vpack.c.bf16 %v4494, %v4492
        %v4503 = vpack.c.bf16 %v4495, %v4493
        %v4504 = vld [vmem:[#allocation11] sm:$0xf]
        %v4505 = vld [vmem:[#allocation11 + $0x4] sm:$0xf]
        %v4506 = vld [vmem:[#allocation11 + $0x8] sm:$0xf]
        %v4507 = vld [vmem:[#allocation11 + $0xc] sm:$0xf]
        %v4508 = vld [vmem:[#allocation11 + $0x10] sm:$0xf]
        %v4509 = vld [vmem:[#allocation11 + $0x14] sm:$0xf]
        %v4510 = vld [vmem:[#allocation11 + $0x18] sm:$0xf]
        %v4511 = vld [vmem:[#allocation11 + $0x1c] sm:$0xf]
        %v4512 = vld [vmem:[#allocation11 + $0x20] sm:$0xf]
        %v4513 = vld [vmem:[#allocation11 + $0x24] sm:$0xf]
        %v4514 = vld [vmem:[#allocation11 + $0x28] sm:$0xf]
        %v4515 = vld [vmem:[#allocation11 + $0x2c] sm:$0xf]
        %v4516 = vld [vmem:[#allocation11 + $0x30] sm:$0xf]
        %v4517 = vld [vmem:[#allocation11 + $0x34] sm:$0xf]
        %v4518 = vld [vmem:[#allocation11 + $0x38] sm:$0xf]
        %v4519 = vld [vmem:[#allocation11 + $0x3c] sm:$0xf]
        %v4520 = vld [vmem:[#allocation11 + $0x40] sm:$0xf]
        %v4521 = vld [vmem:[#allocation11 + $0x44] sm:$0xf]
        %v4522 = vld [vmem:[#allocation11 + $0x48] sm:$0xf]
        %v4523 = vld [vmem:[#allocation11 + $0x4c] sm:$0xf]
        %v4524 = vld [vmem:[#allocation11 + $0x50] sm:$0xf]
        %v4525 = vld [vmem:[#allocation11 + $0x54] sm:$0xf]
        %v4526 = vld [vmem:[#allocation11 + $0x58] sm:$0xf]
        %v4527 = vld [vmem:[#allocation11 + $0x5c] sm:$0xf]
        %v4528 = vld [vmem:[#allocation11 + $0x60] sm:$0xf]
        %v4529 = vld [vmem:[#allocation11 + $0x64] sm:$0xf]
        %v4530 = vld [vmem:[#allocation11 + $0x68] sm:$0xf]
        %v4531 = vld [vmem:[#allocation11 + $0x6c] sm:$0xf]
        %v4532 = vld [vmem:[#allocation11 + $0x70] sm:$0xf]
        %v4533 = vld [vmem:[#allocation11 + $0x74] sm:$0xf]
        %v4534 = vld [vmem:[#allocation11 + $0x78] sm:$0xf]
        %v4535 = vld [vmem:[#allocation11 + $0x7c] sm:$0xf]
        %v4536 = vld [vmem:[%s13] sm:$0x1]
        %v4538 = vlaneseq
        %v4539 = vshrl.u32 %v4538, 7
        %v4540 = vsub.s32 0, %v4539
        %v4541 = vrot.slane %v4536, %v4540
        %v4575 = vunpack.c.l.b16 %v4504
        %v4576 = vunpack.c.l.b16 %v4505
        %v4577 = vunpack.c.l.b16 %v4506
        %v4578 = vunpack.c.l.b16 %v4507
        %v4579 = vunpack.c.l.b16 %v4508
        %v4580 = vunpack.c.l.b16 %v4509
        %v4581 = vunpack.c.l.b16 %v4510
        %v4582 = vunpack.c.l.b16 %v4511
        %v4583 = vunpack.c.l.b16 %v4512
        %v4584 = vunpack.c.l.b16 %v4513
        %v4585 = vunpack.c.l.b16 %v4514
        %v4586 = vunpack.c.l.b16 %v4515
        %v4587 = vunpack.c.l.b16 %v4516
        %v4588 = vunpack.c.l.b16 %v4517
        %v4589 = vunpack.c.l.b16 %v4518
        %v4590 = vunpack.c.l.b16 %v4519
        %v4591 = vunpack.c.l.b16 %v4520
        %v4592 = vunpack.c.l.b16 %v4521
        %v4593 = vunpack.c.l.b16 %v4522
        %v4594 = vunpack.c.l.b16 %v4523
        %v4595 = vunpack.c.l.b16 %v4524
        %v4596 = vunpack.c.l.b16 %v4525
        %v4597 = vunpack.c.l.b16 %v4526
        %v4598 = vunpack.c.l.b16 %v4527
        %v4599 = vunpack.c.l.b16 %v4528
        %v4600 = vunpack.c.l.b16 %v4529
        %v4601 = vunpack.c.l.b16 %v4530
        %v4602 = vunpack.c.l.b16 %v4531
        %v4603 = vunpack.c.l.b16 %v4532
        %v4604 = vunpack.c.l.b16 %v4533
        %v4605 = vunpack.c.l.b16 %v4534
        %v4606 = vunpack.c.l.b16 %v4535
        %v4607 = vpack.c.b16 %v4576, %v4575
        %v4608 = vpack.c.b16 %v4578, %v4577
        %v4609 = vpack.c.b16 %v4580, %v4579
        %v4610 = vpack.c.b16 %v4582, %v4581
        %v4611 = vpack.c.b16 %v4584, %v4583
        %v4612 = vpack.c.b16 %v4586, %v4585
        %v4613 = vpack.c.b16 %v4588, %v4587
        %v4614 = vpack.c.b16 %v4590, %v4589
        %v4615 = vpack.c.b16 %v4592, %v4591
        %v4616 = vpack.c.b16 %v4594, %v4593
        %v4617 = vpack.c.b16 %v4596, %v4595
        %v4618 = vpack.c.b16 %v4598, %v4597
        %v4619 = vpack.c.b16 %v4600, %v4599
        %v4620 = vpack.c.b16 %v4602, %v4601
        %v4621 = vpack.c.b16 %v4604, %v4603
        %v4622 = vpack.c.b16 %v4606, %v4605
        %4639 = vmatprep.subr.bf16.mxu0 0
        %4640 = vmatpush1.bf16.msra.mxu0 %v4614
        %4641 = vmatprep.subr.bf16.mxu0 0
        %4642 = vmatpush1.bf16.msra.mxu0 %v4613
        %4643 = vmatprep.subr.bf16.mxu0 0
        %4644 = vmatpush1.bf16.msra.mxu0 %v4612
        %4645 = vmatprep.subr.bf16.mxu0 0
        %4646 = vmatpush1.bf16.msra.mxu0 %v4611
        %4647 = vmatprep.subr.bf16.mxu0 0
        %4648 = vmatpush1.bf16.msra.mxu0 %v4610
        %4649 = vmatprep.subr.bf16.mxu0 0
        %4650 = vmatpush1.bf16.msra.mxu0 %v4609
        %4651 = vmatprep.subr.bf16.mxu0 0
        %4652 = vmatpush1.bf16.msra.mxu0 %v4608
        %4653 = vmatprep.subr.bf16.mxu0 0
        %4654 = vmatpush1.bf16.msra.mxu0 %v4607
        %4655 = vmatprep.subr.bf16.mxu0 0
        %4656 = vmatpush2.bf16.msra.mxu0 %v4622
        %4657 = vmatprep.subr.bf16.mxu0 0
        %4658 = vmatpush2.bf16.msra.mxu0 %v4621
        %4659 = vmatprep.subr.bf16.mxu0 0
        %4660 = vmatpush2.bf16.msra.mxu0 %v4620
        %4661 = vmatprep.subr.bf16.mxu0 0
        %4662 = vmatpush2.bf16.msra.mxu0 %v4619
        %4663 = vmatprep.subr.bf16.mxu0 0
        %4664 = vmatpush2.bf16.msra.mxu0 %v4618
        %4665 = vmatprep.subr.bf16.mxu0 0
        %4666 = vmatpush2.bf16.msra.mxu0 %v4617
        %4667 = vmatprep.subr.bf16.mxu0 0
        %4668 = vmatpush2.bf16.msra.mxu0 %v4616
        %4669 = vmatprep.subr.bf16.mxu0 0
        %4670 = vmatpush2.bf16.msra.mxu0 %v4615
        %4671 = vmatprep.mubr.bf16.mxu0 %v4497
        %4672 = vmatmul.mubr.bf16.gmra.mxu0 %v4496
        %v4673 = vpop.f32.mrf.mxu0
        %v4674 = vadd.f32 %v4541, %v4673
        %v4675 = vpop.f32.mrf.mxu0
        %v4676 = vpop.f32.mrf.mxu0
        %v4677 = vadd.f32 %v4541, %v4676
        %v4678 = vpop.f32.mrf.mxu0
        %4679 = vmatprep.mubr.bf16.mxu0 %v4499
        %4680 = vmatmul.mubr.bf16.gmra.mxu0 %v4498
        %v4681 = vpop.f32.mrf.mxu0
        %v4682 = vadd.f32 %v4541, %v4681
        %v4683 = vpop.f32.mrf.mxu0
        %v4684 = vpop.f32.mrf.mxu0
        %v4685 = vadd.f32 %v4541, %v4684
        %v4686 = vpop.f32.mrf.mxu0
        %4687 = vmatprep.mubr.bf16.mxu0 %v4501
        %4688 = vmatmul.mubr.bf16.gmra.mxu0 %v4500
        %v4689 = vpop.f32.mrf.mxu0
        %v4690 = vadd.f32 %v4541, %v4689
        %v4691 = vpop.f32.mrf.mxu0
        %v4692 = vpop.f32.mrf.mxu0
        %v4693 = vadd.f32 %v4541, %v4692
        %v4694 = vpop.f32.mrf.mxu0
        %4695 = vmatprep.mubr.bf16.mxu0 %v4503
        %4696 = vmatmul.mubr.bf16.gmra.mxu0 %v4502
        %v4697 = vpop.f32.mrf.mxu0
        %v4698 = vadd.f32 %v4541, %v4697
        %v4699 = vpop.f32.mrf.mxu0
        %v4700 = vpop.f32.mrf.mxu0
        %v4701 = vadd.f32 %v4541, %v4700
        %v4702 = vpop.f32.mrf.mxu0
        %4703 = vdwg.mxu0
        %v4704 = vadd.f32 %v3867, %v4674
        %v4705 = vadd.f32 %v3868, %v4677
        %v4706 = vadd.f32 %v3869, %v4682
        %v4707 = vadd.f32 %v3870, %v4685
        %v4708 = vadd.f32 %v3871, %v4690
        %v4709 = vadd.f32 %v3872, %v4693
        %v4710 = vadd.f32 %v3873, %v4698
        %v4711 = vadd.f32 %v3874, %v4701
        %4712 = vst [vmem:[%s572] sm:$0xff] %v4704
        %4713 = vst [vmem:[%s572 + $0x8] sm:$0xff] %v4705
        %4714 = vst [vmem:[%s572 + $0x10] sm:$0xff] %v4706
        %4715 = vst [vmem:[%s572 + $0x18] sm:$0xff] %v4707
        %4716 = vst [vmem:[%s572 + $0x20] sm:$0xff] %v4708
        %4717 = vst [vmem:[%s572 + $0x28] sm:$0xff] %v4709
        %4718 = vst [vmem:[%s572 + $0x30] sm:$0xff] %v4710
        %4719 = vst [vmem:[%s572 + $0x38] sm:$0xff] %v4711
        %s4720 = sand.u32 %s346, 1
        %s4721 = scalar_lea.sflag [#allocation4], %s4720
        %s4722 = sand.u32 %s346, 1
        %s4723 = smul.addr %s4722, 64
        %s4724 = scalar_lea.vmem [#allocation13], %s4723
        // Predicated region
        $region101: #{tpu_custom_call.1} parent=75 // pred_check
          %p4725 = pneg %p356
        $region102: #{tpu_custom_call.1} parent=75 // pred_check_branch
          %4727 = sbr.rel (%p4725) target = $region104
        $region103: #{tpu_custom_call.1} parent=75 // pred_region
          %s4728 = smul.u32 8, %s34
          %s4730 = ssub.s32 1024, 1024
          %4731 = vsyncadd %s4721, %s4730
          %s4732 = smul.addr %s4728, 128
          %s4733 = scalar_lea.hbm %s14, %s4732
          %s4734 = sshll.u32 %s4724, 4
          %s4735 = int_to_ptr.vmem [resolvable:$true] %s4734
          %4740 = dma.vmem_to_hbm [thread:$0]  %s4735, 1024, %s4733, %s4721, 128, 128, 8
        $region104: #{tpu_custom_call.1} parent=75 // pred_fallthru
          _
      $region76: #{tpu_custom_call.1} parent=5 // pred_fallthru
        _
      %p4741 = scmp.le.s32.totalorder 2, %s29
      // Predicated region
      $region105: #{tpu_custom_call.1} parent=5 // pred_check
        %p4742 = pneg %p4741
      $region106: #{tpu_custom_call.1} parent=5 // pred_check_branch
        %4744 = sbr.rel (%p4742) target = $region108
      $region107: #{tpu_custom_call.1} parent=5 // pred_region
        %s4745 = ssub.s32 %s29, 2
        // Predicated region
        $region109: #{tpu_custom_call.1} parent=107 // pred_check
          %p4746 = pneg %p362
        $region110: #{tpu_custom_call.1} parent=107 // pred_check_branch
          %4748 = sbr.rel (%p4746) target = $region112
        $region111: #{tpu_custom_call.1} parent=107 // pred_region
          %s4749 = sand.u32 %s347, 1
          %s4750 = scalar_lea.sflag [#allocation4], %s4749
          %s4751 = sand.u32 %s347, 1
          %s4752 = smul.addr %s4751, 64
          %s4753 = scalar_lea.vmem [#allocation13], %s4752
          %4754 = dma.done %s4750, 1024
        $region112: #{tpu_custom_call.1} parent=107 // pred_fallthru
          _
      $region108: #{tpu_custom_call.1} parent=5 // pred_fallthru
        _
    $region6: #{tpu_custom_call.1} parent=1 // loop_footer
      %s33 = sadd.s32 1, %s29
    $region7: #{tpu_custom_call.1} parent=1 // loop_footer_branch
      %28 = sbr.rel target = $region3
    $region8: #{tpu_custom_call.1} parent=1 // loop_exit
      _
    %4755 = vsyncpa [#allocation3], 1
    %s4756 = scalar_lea.sflag [#allocation3], 1
    %4757 = vsyncpa %s4756, 1
    %4758 = vsyncpa [#allocation6], 1
    %4759 = vsyncpa [#allocation9], 1
    %4760 = vsyncpa [#allocation12], 1
    %4761 = vsyncpa [#allocation4], 1
    %s4762 = scalar_lea.sflag [#allocation4], 1
    %4763 = vsyncpa %s4762, 1

</llo_original>
